<compile_context>
chip_gen: v6e
topology: v6e:2x2x1
jax: 0.10.0
libtpu: 0.0.40
codegen_flags: <defaults>
</compile_context>

<pallas_src>
import functools

import jax
import jax.numpy as jnp
from jax.experimental import pallas as pl
from jax.experimental.pallas import tpu as pltpu


_HEAD_CHUNK = 256        # lanes of the fused [val|adv] hidden dim per grid step
_MAX_BATCH_BLOCK = 128   # rows per batch block (keeps per-step VMEM modest)


# ---------------------------------------------------------------------------
# Fused forward kernel: conv1 + conv2 + flatten + dueling head.
# Grid: (batch_block, head_chunk); head_chunk is the inner ("arbitrary") axis.
# ---------------------------------------------------------------------------
def _fused_dqn_kernel(patches_ref, w1_ref, b1_ref, w2_ref, b2_ref,
                      wh1_ref, bh1_ref, wh2_ref, bh2_ref, o_ref,
                      h2_scr, oacc_scr, *, actions_n, conv_k, l2):
    # patches_ref: (NB, L1P, KCP)   zero-padded im2col patches (bf16)
    # w1_ref:      (KCP, C1)        conv1 weight, im2col rows zero-padded (bf16)
    # b1_ref:      (1, C1)          f32
    # w2_ref:      (NP, 2*C1, C2)   conv2 taps paired (tap 2p | tap 2p+1), bf16
    # b2_ref:      (1, C2)          f32
    # wh1_ref:     (L2, C2, HCH)    chunk of fused [val|adv] first-layer weight
    # bh1_ref:     (1, HCH)         f32 chunk of the fused first-layer bias
    # wh2_ref:     (HCH, OUT_PAD)   rows of block-diag [val | adv | 0] weight
    # bh2_ref:     (1, OUT_PAD)     f32
    # o_ref:       (NB, OUT_PAD)    f32 output [junk | q_0..q_{A-1} | junk]
    # h2_scr:      (NB, L2, C2)     bf16 VMEM cache of the conv tower output
    # oacc_scr:    (NB, OUT_PAD)    f32 head-2 accumulator
    h = pl.program_id(1)
    n_h = pl.num_programs(1)

    NB, L1P, KCP = patches_ref.shape
    C1 = w1_ref.shape[1]
    NP, C1x2, C2 = w2_ref.shape
    K, L2 = conv_k, l2
    HCH = wh1_ref.shape[2]
    OUT_PAD = o_ref.shape[1]

    # ---- conv tower: only at the first head chunk; cached in VMEM scratch ----
    @pl.when(h == 0)
    def _():
        # conv1: single im2col matmul, lane-dense over C1 (bf16 x bf16 -> f32).
        pat = patches_ref[...].reshape(NB * L1P, KCP)
        h1 = jnp.dot(pat, w1_ref[...], preferred_element_type=jnp.float32)
        h1 = jnp.maximum(h1 + b1_ref[...], 0.0)
        h1b = h1.reshape(NB, L1P, C1).astype(jnp.bfloat16)

        # conv2: taps paired -> 11 contractions of depth 256 (fills the
        # 256-deep v6e/v7x MXU; the lane concat of two 128-wide slices is free).
        acc2 = jnp.zeros((NB * L2, C2), jnp.float32)
        for p2 in range(NP):                      # static unroll (11 matmuls)
            k1 = 2 * p2
            k2 = min(k1 + 1, K - 1)               # phantom tap has zero weights
            xk = jnp.concatenate(
                [h1b[:, k1:k1 + L2, :], h1b[:, k2:k2 + L2, :]],
                axis=-1).reshape(NB * L2, C1x2)
            acc2 = acc2 + jnp.dot(xk, w2_ref[p2],
                                  preferred_element_type=jnp.float32)
        h2 = jnp.maximum(acc2 + b2_ref[...], 0.0)
        h2_scr[...] = h2.reshape(NB, L2, C2).astype(h2_scr.dtype)
        oacc_scr[...] = jnp.zeros_like(oacc_scr)

    # ---- head layer 1, current 256-wide chunk of the fused [val|adv] hidden
    #      dim: contract over (L2, C2) as a tap sum (weights pre-permuted to
    #      the (l, c) flatten order; no lane-changing reshape). ----
    h2b = h2_scr[...]                             # bf16 (NB, L2, C2)
    acc_h = jnp.zeros((NB, HCH), jnp.float32)
    for l in range(L2):                           # static unroll (8 matmuls)
        acc_h = acc_h + jnp.dot(h2b[:, l, :], wh1_ref[l],
                                preferred_element_type=jnp.float32)
    z1 = jnp.maximum(acc_h + bh1_ref[...], 0.0).astype(jnp.bfloat16)

    # ---- head layer 2 partial: rows of the block-diag [val | adv | 0] weight
    #      belonging to this chunk, accumulated in f32. ----
    oacc_scr[...] = oacc_scr[...] + jnp.dot(z1, wh2_ref[...],
                                            preferred_element_type=jnp.float32)

    # ---- finalize on the last chunk: bias + dueling combine, lane-dense ----
    @pl.when(h == n_h - 1)
    def _():
        z2 = oacc_scr[...] + bh2_ref[...]
        col = jax.lax.broadcasted_iota(jnp.int32, (1, OUT_PAD), 1)
        val = jnp.sum(jnp.where(col == 0, z2, 0.0), axis=1, keepdims=True)
        adv_sum = jnp.sum(jnp.where((col >= 1) & (col < 1 + actions_n), z2, 0.0),
                          axis=1, keepdims=True)
        o_ref[...] = (z2 + val - adv_sum * (1.0 / actions_n)).astype(o_ref.dtype)


# ---------------------------------------------------------------------------
# pallas_call wrapper.
# ---------------------------------------------------------------------------
def _vmem_limit_bytes():
    # Generation-aware scoped-VMEM limit: ~65% of physical capacity
    # (v5e/v6e 128 MiB -> ~83 MiB; v7x 64 MiB -> ~41 MiB), conservative fallback
    # if the query is unavailable.
    phys = 0
    try:
        phys = int(pltpu.get_tpu_info().vmem_capacity_bytes)
    except Exception:
        phys = 0
    if phys < 32 * 1024 * 1024:
        phys = 64 * 1024 * 1024
    return min(int(phys * 0.65), 96 * 1024 * 1024)


def _choose_batch_block(n):
    if n <= 8:
        # Tiny batch: one block equal to N (keeps the (8,128) block rule via the
        # "equals full dim" clause and avoids re-fetching the head-weight chunks
        # for padded batch blocks on single-TC chips).  On v7x this leaves one
        # TC idle, but the tiny-batch path is weight-DMA-bound anyway.
        return n
    # >=2 batch blocks (v7x dual-TC sharding), multiple of 8, capped so the
    # per-step activations stay a small fraction of VMEM.
    nb = ((-(-n // 2)) + 7) // 8 * 8
    return min(_MAX_BATCH_BLOCK, nb)


def _fused_forward(patches, w1, b1, w2, b2, wh1, bh1, wh2, bh2,
                   *, actions_n, conv_k, l2):
    N, L1P, KCP = patches.shape
    C2 = w2.shape[2]
    H2 = wh1.shape[2]
    OUT_PAD = wh2.shape[1]

    NB = _choose_batch_block(N)
    n_pad = -(-N // NB) * NB
    if n_pad != N:
        patches = jnp.pad(patches, ((0, n_pad - N), (0, 0), (0, 0)))

    HCH = _HEAD_CHUNK if H2 % _HEAD_CHUNK == 0 else H2
    HB = H2 // HCH
    grid = (n_pad // NB, HB)

    def _resident(arr):
        nd = arr.ndim
        return pl.BlockSpec(arr.shape, lambda b, h, _nd=nd: (0,) * _nd)

    kernel = functools.partial(_fused_dqn_kernel, actions_n=actions_n,
                               conv_k=conv_k, l2=l2)
    out = pl.pallas_call(
        kernel,
        out_shape=jax.ShapeDtypeStruct((n_pad, OUT_PAD), jnp.float32),
        grid=grid,
        in_specs=[
            pl.BlockSpec((NB, L1P, KCP), lambda b, h: (b, 0, 0)),   # patches
            _resident(w1), _resident(b1),                           # conv1
            _resident(w2), _resident(b2),                           # conv2
            pl.BlockSpec((l2, C2, HCH), lambda b, h: (0, 0, h)),    # wh1 chunk
            pl.BlockSpec((1, HCH), lambda b, h: (0, h)),            # bh1 chunk
            pl.BlockSpec((HCH, OUT_PAD), lambda b, h: (h, 0)),      # wh2 rows
            _resident(bh2),
        ],
        out_specs=pl.BlockSpec((NB, OUT_PAD), lambda b, h: (b, 0)),
        scratch_shapes=[
            pltpu.VMEM((NB, l2, C2), jnp.bfloat16),   # conv tower output cache
            pltpu.VMEM((NB, OUT_PAD), jnp.float32),   # head-2 accumulator
        ],
        compiler_params=pltpu.CompilerParams(
            dimension_semantics=("parallel", "arbitrary"),
            vmem_limit_bytes=_vmem_limit_bytes()),
    )(patches, w1, b1, w2, b2, wh1, bh1, wh2, bh2)
    return out[:N]


# ---------------------------------------------------------------------------
# Parameter preparation: PyTorch-layout params -> kernel-ready (bf16) layouts.
# Done once, outside the forward pass.
# ---------------------------------------------------------------------------
def prepare_params(p, *, actions_n, out_pad=128):
    C1, C_in, K = p["w1"].shape                  # (C_out, C_in, K) torch conv
    C2 = p["w2"].shape[0]
    H = p["wv1"].shape[0]                        # (out, in) torch linear
    out_size = p["wv1"].shape[1]
    L2 = out_size // C2
    A = actions_n
    assert 1 + A <= out_pad

    # conv1 as im2col weight: row index = k*C_in + ci, lane dim = C1; rows
    # zero-padded 84 -> 128 so the contraction is lane-aligned.
    KC = K * C_in
    KC_pad = -(-KC // 128) * 128
    w1 = jnp.transpose(p["w1"], (2, 1, 0)).reshape(KC, C1)
    w1 = jnp.pad(w1, ((0, KC_pad - KC), (0, 0))).astype(jnp.bfloat16)
    b1 = p["b1"].reshape(1, C1).astype(jnp.float32)

    # conv2: taps paired (tap 2p stacked on tap 2p+1) -> (NP, 2*C1, C2), with a
    # zero phantom 22nd tap, giving 256-deep contractions in the kernel.
    NP = (K + 1) // 2
    w2t = jnp.transpose(p["w2"], (2, 1, 0))                       # (K, C1, C2)
    w2t = jnp.pad(w2t, ((0, 2 * NP - K), (0, 0), (0, 0)))
    w2 = w2t.reshape(NP, 2 * C1, C2).astype(jnp.bfloat16)
    b2 = p["b2"].reshape(1, C2).astype(jnp.float32)

    # Head layer 1: torch flattens conv output as (C2, L2) -> index c*L2 + l;
    # the kernel's natural order is (l, c).  Permute rows accordingly, keep the
    # (L2, C2, H) structure so the kernel contracts without a lane reshape, and
    # fuse val/adv into one lane-dense weight.
    def permute_rows(w):                         # w: (H, out_size) torch layout
        return w.T.reshape(C2, L2, H).transpose(1, 0, 2)          # (L2, C2, H)

    wh1 = jnp.concatenate([permute_rows(p["wv1"]), permute_rows(p["wa1"])],
                          axis=2).astype(jnp.bfloat16)            # (L2, C2, 2H)
    bh1 = jnp.concatenate([p["bv1"], p["ba1"]]).reshape(1, 2 * H)
    bh1 = bh1.astype(jnp.float32)

    # Head layer 2: block-diagonal [val | adv] padded to a lane-dense width.
    wh2 = jnp.zeros((2 * H, out_pad), jnp.float32)
    wh2 = wh2.at[:H, 0].set(p["wv2"][0])
    wh2 = wh2.at[H:, 1:1 + A].set(p["wa2"].T)
    wh2 = wh2.astype(jnp.bfloat16)
    bh2 = jnp.zeros((1, out_pad), jnp.float32)
    bh2 = bh2.at[0, 0].set(p["bv2"][0])
    bh2 = bh2.at[0, 1:1 + A].set(p["ba2"])

    return dict(w1=w1, b1=b1, w2=w2, b2=b2,
                wh1=wh1, bh1=bh1, wh2=wh2, bh2=bh2, K=K, L2=L2)


# ---------------------------------------------------------------------------
# Forward pass.  Only the tiny input im2col + final slice live outside the
# fused kernel.
# ---------------------------------------------------------------------------
def dqn_conv1d_forward(x, kp, *, actions_n):
    N, C_in, L = x.shape
    K = kp["K"]
    L1 = L - K + 1
    KC_pad = kp["w1"].shape[0]
    L1_pad = -(-L1 // 8) * 8

    x_nlc = jnp.transpose(x, (0, 2, 1)).astype(jnp.bfloat16)     # (N, L, C_in)
    # im2col patches: patch[n, l, k*C_in + c] = x[n, c, l + k]
    patches = jnp.concatenate([x_nlc[:, k:k + L1, :] for k in range(K)],
                              axis=-1)                           # (N, L1, K*C_in)
    # Zero-pad the contraction dim to 128 lanes and L1 to a sublane multiple.
    patches = jnp.pad(patches, ((0, 0), (0, L1_pad - L1),
                                (0, KC_pad - K * C_in)))

    q_pad = _fused_forward(patches, kp["w1"], kp["b1"], kp["w2"], kp["b2"],
                           kp["wh1"], kp["bh1"], kp["wh2"], kp["bh2"],
                           actions_n=actions_n, conv_k=K, l2=kp["L2"])
    return q_pad[:, 1:1 + actions_n]


# ---------------------------------------------------------------------------
# Deterministic synthetic parameters in exact PyTorch layouts.
# ---------------------------------------------------------------------------
def init_params(key, obs_channels, obs_len, actions_n):
    K, C1, C2, H = 21, 128, 256, 512
    L2 = obs_len - 2 * (K - 1)
    out_size = C2 * L2
    s = 0.05
    ks = jax.random.split(key, 12)
    return {
        "w1": jax.random.normal(ks[0], (C1, obs_channels, K), jnp.float32) * s,
        "b1": jax.random.normal(ks[1], (C1,), jnp.float32) * s,
        "w2": jax.random.normal(ks[2], (C2, C1, K), jnp.float32) * s,
        "b2": jax.random.normal(ks[3], (C2,), jnp.float32) * s,
        "wv1": jax.random.normal(ks[4], (H, out_size), jnp.float32) * s,
        "bv1": jax.random.normal(ks[5], (H,), jnp.float32) * s,
        "wv2": jax.random.normal(ks[6], (1, H), jnp.float32) * s,
        "bv2": jax.random.normal(ks[7], (1,), jnp.float32) * s,
        "wa1": jax.random.normal(ks[8], (H, out_size), jnp.float32) * s,
        "ba1": jax.random.normal(ks[9], (H,), jnp.float32) * s,
        "wa2": jax.random.normal(ks[10], (actions_n, H), jnp.float32) * s,
        "ba2": jax.random.normal(ks[11], (actions_n,), jnp.float32) * s,
    }


# ---------------------------------------------------------------------------
# Pure-JAX f32 reference (PyTorch semantics) for correctness checking.
# ---------------------------------------------------------------------------
def reference_forward(x, p):
    def conv(x, w, b):
        y = jax.lax.conv_general_dilated(
            x, w, window_strides=(1,), padding="VALID",
            dimension_numbers=("NCH", "OIH", "NCH"))
        return jax.nn.relu(y + b[None, :, None])

    h = conv(x, p["w1"], p["b1"])
    h = conv(h, p["w2"], p["b2"])
    f = h.reshape(h.shape[0], -1)                 # torch .view(N, -1)
    val = jax.nn.relu(f @ p["wv1"].T + p["bv1"]) @ p["wv2"].T + p["bv2"]
    adv = jax.nn.relu(f @ p["wa1"].T + p["ba1"]) @ p["wa2"].T + p["ba2"]
    return val + adv - jnp.mean(adv, axis=1, keepdims=True)


if __name__ == "__main__":
    N, C_IN, L, ACTIONS = 2, 4, 48, 8            # obs_shape=(4, 48), actions_n=8
    key = jax.random.PRNGKey(0)
    kx, kparam = jax.random.split(key)
    x = jax.random.normal(kx, (N, C_IN, L), jnp.float32)
    params = init_params(kparam, C_IN, L, ACTIONS)
    kernel_params = prepare_params(params, actions_n=ACTIONS)

    out = jax.block_until_ready(
        dqn_conv1d_forward(x, kernel_params, actions_n=ACTIONS))
    ref = reference_forward(x, params)

    assert out.shape == (N, ACTIONS), out.shape
    # bf16 matmuls vs. f32 reference: tolerance loosened accordingly.
    assert jnp.allclose(out, ref, rtol=3e-2, atol=3e-2), "mismatch vs reference"
    print("KERNEL_OK")
</pallas_src>

<mosaic_0001>
module attributes {stable_mosaic.version = 11 : i64} {
  func.func @_fused_dqn_kernel(%arg0: i32, %arg1: i32, %arg2: memref<2x32x128xbf16, #tpu.memory_space<vmem>>, %arg3: memref<128x128xbf16, #tpu.memory_space<vmem>>, %arg4: memref<1x128xf32, #tpu.memory_space<vmem>>, %arg5: memref<11x256x256xbf16, #tpu.memory_space<vmem>>, %arg6: memref<1x256xf32, #tpu.memory_space<vmem>>, %arg7: memref<8x256x256xbf16, #tpu.memory_space<vmem>>, %arg8: memref<1x256xf32, #tpu.memory_space<vmem>>, %arg9: memref<256x128xbf16, #tpu.memory_space<vmem>>, %arg10: memref<1x128xf32, #tpu.memory_space<vmem>>, %arg11: memref<2x128xf32, #tpu.memory_space<vmem>>, %arg12: memref<2x8x256xbf16, #tpu.memory_space<vmem>>, %arg13: memref<2x128xf32, #tpu.memory_space<vmem>>) attributes {dimension_semantics = [#tpu.dimension_semantics<parallel>, #tpu.dimension_semantics<arbitrary>], iteration_bounds = array<i64: 1, 4>, scalar_prefetch = 0 : i64, scratch_operands = 2 : i64, tpu.core_type = #tpu.core_type<tc>, window_params = [{transform_indices = @transform_0, window_bounds = array<i64: 2, 32, 128>}, {pipeline_mode = #tpu.pipeline_mode<synchronous>, transform_indices = @transform_1, window_bounds = array<i64: 128, 128>}, {pipeline_mode = #tpu.pipeline_mode<synchronous>, transform_indices = @transform_2, window_bounds = array<i64: 1, 128>}, {pipeline_mode = #tpu.pipeline_mode<synchronous>, transform_indices = @transform_3, window_bounds = array<i64: 11, 256, 256>}, {pipeline_mode = #tpu.pipeline_mode<synchronous>, transform_indices = @transform_4, window_bounds = array<i64: 1, 256>}, {transform_indices = @transform_5, window_bounds = array<i64: 8, 256, 256>}, {transform_indices = @transform_6, window_bounds = array<i64: 1, 256>}, {transform_indices = @transform_7, window_bounds = array<i64: 256, 128>}, {pipeline_mode = #tpu.pipeline_mode<synchronous>, transform_indices = @transform_8, window_bounds = array<i64: 1, 128>}, {transform_indices = @transform_9, window_bounds = array<i64: 2, 128>}]} {
    %c0_i32 = arith.constant 0 : i32
    %0 = arith.cmpi eq, %arg1, %c0_i32 : i32
    %1 = arith.extui %0 : i1 to i32
    %c0_i32_0 = arith.constant 0 : i32
    %2 = arith.cmpi ne, %1, %c0_i32_0 : i32
    scf.if %2 {
      %c0_39 = arith.constant 0 : index
      %c0_40 = arith.constant 0 : index
      %c0_41 = arith.constant 0 : index
      %67 = vector.load %arg2[%c0_39, %c0_40, %c0_41] : memref<2x32x128xbf16, #tpu.memory_space<vmem>>, vector<2x32x128xbf16>
      %68 = vector.shape_cast %67 : vector<2x32x128xbf16> to vector<64x128xbf16>
      %c0_42 = arith.constant 0 : index
      %c0_43 = arith.constant 0 : index
      %69 = vector.load %arg3[%c0_42, %c0_43] : memref<128x128xbf16, #tpu.memory_space<vmem>>, vector<128x128xbf16>
      %cst_44 = arith.constant dense<0.000000e+00> : vector<64x128xf32>
      %70 = tpu.matmul %68, %69, %cst_44 {dimension_numbers = #tpu.dot_dimension_numbers<[1], [0], [0], [1], [0, 0, 1, 1], [], []>} : vector<64x128xbf16>, vector<128x128xbf16>, vector<64x128xf32> -> vector<64x128xf32>
      %c0_45 = arith.constant 0 : index
      %c0_46 = arith.constant 0 : index
      %71 = vector.load %arg4[%c0_45, %c0_46] : memref<1x128xf32, #tpu.memory_space<vmem>>, vector<1x128xf32>
      %72 = vector.broadcast %71 : vector<1x128xf32> to vector<64x128xf32>
      %73 = arith.addf %70, %72 : vector<64x128xf32>
      %cst_47 = arith.constant 0.000000e+00 : f32
      %74 = vector.broadcast %cst_47 : f32 to vector<64x128xf32>
      %75 = arith.maximumf %73, %74 : vector<64x128xf32>
      %76 = vector.shape_cast %75 : vector<64x128xf32> to vector<2x32x128xf32>
      %77 = arith.truncf %76 : vector<2x32x128xf32> to vector<2x32x128xbf16>
      %cst_48 = arith.constant 0.000000e+00 : f32
      %78 = vector.broadcast %cst_48 : f32 to vector<16x256xf32>
      %79 = vector.extract_strided_slice %77 {offsets = [0, 0, 0], sizes = [2, 8, 128], strides = [1, 1, 1]} : vector<2x32x128xbf16> to vector<2x8x128xbf16>
      %80 = vector.extract_strided_slice %77 {offsets = [0, 1, 0], sizes = [2, 8, 128], strides = [1, 1, 1]} : vector<2x32x128xbf16> to vector<2x8x128xbf16>
      %81 = tpu.concatenate %79, %80 in 2 : vector<2x8x128xbf16>, vector<2x8x128xbf16> -> vector<2x8x256xbf16>
      %82 = vector.shape_cast %81 : vector<2x8x256xbf16> to vector<16x256xbf16>
      %c0_49 = arith.constant 0 : index
      %c0_50 = arith.constant 0 : index
      %c0_51 = arith.constant 0 : index
      %83 = vector.load %arg5[%c0_49, %c0_50, %c0_51] : memref<11x256x256xbf16, #tpu.memory_space<vmem>>, vector<1x256x256xbf16>
      %84 = vector.shape_cast %83 : vector<1x256x256xbf16> to vector<256x256xbf16>
      %cst_52 = arith.constant dense<0.000000e+00> : vector<16x256xf32>
      %85 = tpu.matmul %82, %84, %cst_52 {dimension_numbers = #tpu.dot_dimension_numbers<[1], [0], [0], [1], [0, 0, 1, 1], [], []>} : vector<16x256xbf16>, vector<256x256xbf16>, vector<16x256xf32> -> vector<16x256xf32>
      %86 = arith.addf %78, %85 : vector<16x256xf32>
      %87 = vector.extract_strided_slice %77 {offsets = [0, 2, 0], sizes = [2, 8, 128], strides = [1, 1, 1]} : vector<2x32x128xbf16> to vector<2x8x128xbf16>
      %88 = vector.extract_strided_slice %77 {offsets = [0, 3, 0], sizes = [2, 8, 128], strides = [1, 1, 1]} : vector<2x32x128xbf16> to vector<2x8x128xbf16>
      %89 = tpu.concatenate %87, %88 in 2 : vector<2x8x128xbf16>, vector<2x8x128xbf16> -> vector<2x8x256xbf16>
      %90 = vector.shape_cast %89 : vector<2x8x256xbf16> to vector<16x256xbf16>
      %c1_53 = arith.constant 1 : index
      %c0_54 = arith.constant 0 : index
      %c0_55 = arith.constant 0 : index
      %91 = vector.load %arg5[%c1_53, %c0_54, %c0_55] : memref<11x256x256xbf16, #tpu.memory_space<vmem>>, vector<1x256x256xbf16>
      %92 = vector.shape_cast %91 : vector<1x256x256xbf16> to vector<256x256xbf16>
      %cst_56 = arith.constant dense<0.000000e+00> : vector<16x256xf32>
      %93 = tpu.matmul %90, %92, %cst_56 {dimension_numbers = #tpu.dot_dimension_numbers<[1], [0], [0], [1], [0, 0, 1, 1], [], []>} : vector<16x256xbf16>, vector<256x256xbf16>, vector<16x256xf32> -> vector<16x256xf32>
      %94 = arith.addf %86, %93 : vector<16x256xf32>
      %95 = vector.extract_strided_slice %77 {offsets = [0, 4, 0], sizes = [2, 8, 128], strides = [1, 1, 1]} : vector<2x32x128xbf16> to vector<2x8x128xbf16>
      %96 = vector.extract_strided_slice %77 {offsets = [0, 5, 0], sizes = [2, 8, 128], strides = [1, 1, 1]} : vector<2x32x128xbf16> to vector<2x8x128xbf16>
      %97 = tpu.concatenate %95, %96 in 2 : vector<2x8x128xbf16>, vector<2x8x128xbf16> -> vector<2x8x256xbf16>
      %98 = vector.shape_cast %97 : vector<2x8x256xbf16> to vector<16x256xbf16>
      %c2_57 = arith.constant 2 : index
      %c0_58 = arith.constant 0 : index
      %c0_59 = arith.constant 0 : index
      %99 = vector.load %arg5[%c2_57, %c0_58, %c0_59] : memref<11x256x256xbf16, #tpu.memory_space<vmem>>, vector<1x256x256xbf16>
      %100 = vector.shape_cast %99 : vector<1x256x256xbf16> to vector<256x256xbf16>
      %cst_60 = arith.constant dense<0.000000e+00> : vector<16x256xf32>
      %101 = tpu.matmul %98, %100, %cst_60 {dimension_numbers = #tpu.dot_dimension_numbers<[1], [0], [0], [1], [0, 0, 1, 1], [], []>} : vector<16x256xbf16>, vector<256x256xbf16>, vector<16x256xf32> -> vector<16x256xf32>
      %102 = arith.addf %94, %101 : vector<16x256xf32>
      %103 = vector.extract_strided_slice %77 {offsets = [0, 6, 0], sizes = [2, 8, 128], strides = [1, 1, 1]} : vector<2x32x128xbf16> to vector<2x8x128xbf16>
      %104 = vector.extract_strided_slice %77 {offsets = [0, 7, 0], sizes = [2, 8, 128], strides = [1, 1, 1]} : vector<2x32x128xbf16> to vector<2x8x128xbf16>
      %105 = tpu.concatenate %103, %104 in 2 : vector<2x8x128xbf16>, vector<2x8x128xbf16> -> vector<2x8x256xbf16>
      %106 = vector.shape_cast %105 : vector<2x8x256xbf16> to vector<16x256xbf16>
      %c3_61 = arith.constant 3 : index
      %c0_62 = arith.constant 0 : index
      %c0_63 = arith.constant 0 : index
      %107 = vector.load %arg5[%c3_61, %c0_62, %c0_63] : memref<11x256x256xbf16, #tpu.memory_space<vmem>>, vector<1x256x256xbf16>
      %108 = vector.shape_cast %107 : vector<1x256x256xbf16> to vector<256x256xbf16>
      %cst_64 = arith.constant dense<0.000000e+00> : vector<16x256xf32>
      %109 = tpu.matmul %106, %108, %cst_64 {dimension_numbers = #tpu.dot_dimension_numbers<[1], [0], [0], [1], [0, 0, 1, 1], [], []>} : vector<16x256xbf16>, vector<256x256xbf16>, vector<16x256xf32> -> vector<16x256xf32>
      %110 = arith.addf %102, %109 : vector<16x256xf32>
      %111 = vector.extract_strided_slice %77 {offsets = [0, 8, 0], sizes = [2, 8, 128], strides = [1, 1, 1]} : vector<2x32x128xbf16> to vector<2x8x128xbf16>
      %112 = vector.extract_strided_slice %77 {offsets = [0, 9, 0], sizes = [2, 8, 128], strides = [1, 1, 1]} : vector<2x32x128xbf16> to vector<2x8x128xbf16>
      %113 = tpu.concatenate %111, %112 in 2 : vector<2x8x128xbf16>, vector<2x8x128xbf16> -> vector<2x8x256xbf16>
      %114 = vector.shape_cast %113 : vector<2x8x256xbf16> to vector<16x256xbf16>
      %c4_65 = arith.constant 4 : index
      %c0_66 = arith.constant 0 : index
      %c0_67 = arith.constant 0 : index
      %115 = vector.load %arg5[%c4_65, %c0_66, %c0_67] : memref<11x256x256xbf16, #tpu.memory_space<vmem>>, vector<1x256x256xbf16>
      %116 = vector.shape_cast %115 : vector<1x256x256xbf16> to vector<256x256xbf16>
      %cst_68 = arith.constant dense<0.000000e+00> : vector<16x256xf32>
      %117 = tpu.matmul %114, %116, %cst_68 {dimension_numbers = #tpu.dot_dimension_numbers<[1], [0], [0], [1], [0, 0, 1, 1], [], []>} : vector<16x256xbf16>, vector<256x256xbf16>, vector<16x256xf32> -> vector<16x256xf32>
      %118 = arith.addf %110, %117 : vector<16x256xf32>
      %119 = vector.extract_strided_slice %77 {offsets = [0, 10, 0], sizes = [2, 8, 128], strides = [1, 1, 1]} : vector<2x32x128xbf16> to vector<2x8x128xbf16>
      %120 = vector.extract_strided_slice %77 {offsets = [0, 11, 0], sizes = [2, 8, 128], strides = [1, 1, 1]} : vector<2x32x128xbf16> to vector<2x8x128xbf16>
      %121 = tpu.concatenate %119, %120 in 2 : vector<2x8x128xbf16>, vector<2x8x128xbf16> -> vector<2x8x256xbf16>
      %122 = vector.shape_cast %121 : vector<2x8x256xbf16> to vector<16x256xbf16>
      %c5_69 = arith.constant 5 : index
      %c0_70 = arith.constant 0 : index
      %c0_71 = arith.constant 0 : index
      %123 = vector.load %arg5[%c5_69, %c0_70, %c0_71] : memref<11x256x256xbf16, #tpu.memory_space<vmem>>, vector<1x256x256xbf16>
      %124 = vector.shape_cast %123 : vector<1x256x256xbf16> to vector<256x256xbf16>
      %cst_72 = arith.constant dense<0.000000e+00> : vector<16x256xf32>
      %125 = tpu.matmul %122, %124, %cst_72 {dimension_numbers = #tpu.dot_dimension_numbers<[1], [0], [0], [1], [0, 0, 1, 1], [], []>} : vector<16x256xbf16>, vector<256x256xbf16>, vector<16x256xf32> -> vector<16x256xf32>
      %126 = arith.addf %118, %125 : vector<16x256xf32>
      %127 = vector.extract_strided_slice %77 {offsets = [0, 12, 0], sizes = [2, 8, 128], strides = [1, 1, 1]} : vector<2x32x128xbf16> to vector<2x8x128xbf16>
      %128 = vector.extract_strided_slice %77 {offsets = [0, 13, 0], sizes = [2, 8, 128], strides = [1, 1, 1]} : vector<2x32x128xbf16> to vector<2x8x128xbf16>
      %129 = tpu.concatenate %127, %128 in 2 : vector<2x8x128xbf16>, vector<2x8x128xbf16> -> vector<2x8x256xbf16>
      %130 = vector.shape_cast %129 : vector<2x8x256xbf16> to vector<16x256xbf16>
      %c6_73 = arith.constant 6 : index
      %c0_74 = arith.constant 0 : index
      %c0_75 = arith.constant 0 : index
      %131 = vector.load %arg5[%c6_73, %c0_74, %c0_75] : memref<11x256x256xbf16, #tpu.memory_space<vmem>>, vector<1x256x256xbf16>
      %132 = vector.shape_cast %131 : vector<1x256x256xbf16> to vector<256x256xbf16>
      %cst_76 = arith.constant dense<0.000000e+00> : vector<16x256xf32>
      %133 = tpu.matmul %130, %132, %cst_76 {dimension_numbers = #tpu.dot_dimension_numbers<[1], [0], [0], [1], [0, 0, 1, 1], [], []>} : vector<16x256xbf16>, vector<256x256xbf16>, vector<16x256xf32> -> vector<16x256xf32>
      %134 = arith.addf %126, %133 : vector<16x256xf32>
      %135 = vector.extract_strided_slice %77 {offsets = [0, 14, 0], sizes = [2, 8, 128], strides = [1, 1, 1]} : vector<2x32x128xbf16> to vector<2x8x128xbf16>
      %136 = vector.extract_strided_slice %77 {offsets = [0, 15, 0], sizes = [2, 8, 128], strides = [1, 1, 1]} : vector<2x32x128xbf16> to vector<2x8x128xbf16>
      %137 = tpu.concatenate %135, %136 in 2 : vector<2x8x128xbf16>, vector<2x8x128xbf16> -> vector<2x8x256xbf16>
      %138 = vector.shape_cast %137 : vector<2x8x256xbf16> to vector<16x256xbf16>
      %c7_77 = arith.constant 7 : index
      %c0_78 = arith.constant 0 : index
      %c0_79 = arith.constant 0 : index
      %139 = vector.load %arg5[%c7_77, %c0_78, %c0_79] : memref<11x256x256xbf16, #tpu.memory_space<vmem>>, vector<1x256x256xbf16>
      %140 = vector.shape_cast %139 : vector<1x256x256xbf16> to vector<256x256xbf16>
      %cst_80 = arith.constant dense<0.000000e+00> : vector<16x256xf32>
      %141 = tpu.matmul %138, %140, %cst_80 {dimension_numbers = #tpu.dot_dimension_numbers<[1], [0], [0], [1], [0, 0, 1, 1], [], []>} : vector<16x256xbf16>, vector<256x256xbf16>, vector<16x256xf32> -> vector<16x256xf32>
      %142 = arith.addf %134, %141 : vector<16x256xf32>
      %143 = vector.extract_strided_slice %77 {offsets = [0, 16, 0], sizes = [2, 8, 128], strides = [1, 1, 1]} : vector<2x32x128xbf16> to vector<2x8x128xbf16>
      %144 = vector.extract_strided_slice %77 {offsets = [0, 17, 0], sizes = [2, 8, 128], strides = [1, 1, 1]} : vector<2x32x128xbf16> to vector<2x8x128xbf16>
      %145 = tpu.concatenate %143, %144 in 2 : vector<2x8x128xbf16>, vector<2x8x128xbf16> -> vector<2x8x256xbf16>
      %146 = vector.shape_cast %145 : vector<2x8x256xbf16> to vector<16x256xbf16>
      %c8 = arith.constant 8 : index
      %c0_81 = arith.constant 0 : index
      %c0_82 = arith.constant 0 : index
      %147 = vector.load %arg5[%c8, %c0_81, %c0_82] : memref<11x256x256xbf16, #tpu.memory_space<vmem>>, vector<1x256x256xbf16>
      %148 = vector.shape_cast %147 : vector<1x256x256xbf16> to vector<256x256xbf16>
      %cst_83 = arith.constant dense<0.000000e+00> : vector<16x256xf32>
      %149 = tpu.matmul %146, %148, %cst_83 {dimension_numbers = #tpu.dot_dimension_numbers<[1], [0], [0], [1], [0, 0, 1, 1], [], []>} : vector<16x256xbf16>, vector<256x256xbf16>, vector<16x256xf32> -> vector<16x256xf32>
      %150 = arith.addf %142, %149 : vector<16x256xf32>
      %151 = vector.extract_strided_slice %77 {offsets = [0, 18, 0], sizes = [2, 8, 128], strides = [1, 1, 1]} : vector<2x32x128xbf16> to vector<2x8x128xbf16>
      %152 = vector.extract_strided_slice %77 {offsets = [0, 19, 0], sizes = [2, 8, 128], strides = [1, 1, 1]} : vector<2x32x128xbf16> to vector<2x8x128xbf16>
      %153 = tpu.concatenate %151, %152 in 2 : vector<2x8x128xbf16>, vector<2x8x128xbf16> -> vector<2x8x256xbf16>
      %154 = vector.shape_cast %153 : vector<2x8x256xbf16> to vector<16x256xbf16>
      %c9 = arith.constant 9 : index
      %c0_84 = arith.constant 0 : index
      %c0_85 = arith.constant 0 : index
      %155 = vector.load %arg5[%c9, %c0_84, %c0_85] : memref<11x256x256xbf16, #tpu.memory_space<vmem>>, vector<1x256x256xbf16>
      %156 = vector.shape_cast %155 : vector<1x256x256xbf16> to vector<256x256xbf16>
      %cst_86 = arith.constant dense<0.000000e+00> : vector<16x256xf32>
      %157 = tpu.matmul %154, %156, %cst_86 {dimension_numbers = #tpu.dot_dimension_numbers<[1], [0], [0], [1], [0, 0, 1, 1], [], []>} : vector<16x256xbf16>, vector<256x256xbf16>, vector<16x256xf32> -> vector<16x256xf32>
      %158 = arith.addf %150, %157 : vector<16x256xf32>
      %159 = vector.extract_strided_slice %77 {offsets = [0, 20, 0], sizes = [2, 8, 128], strides = [1, 1, 1]} : vector<2x32x128xbf16> to vector<2x8x128xbf16>
      %160 = vector.extract_strided_slice %77 {offsets = [0, 20, 0], sizes = [2, 8, 128], strides = [1, 1, 1]} : vector<2x32x128xbf16> to vector<2x8x128xbf16>
      %161 = tpu.concatenate %159, %160 in 2 : vector<2x8x128xbf16>, vector<2x8x128xbf16> -> vector<2x8x256xbf16>
      %162 = vector.shape_cast %161 : vector<2x8x256xbf16> to vector<16x256xbf16>
      %c10 = arith.constant 10 : index
      %c0_87 = arith.constant 0 : index
      %c0_88 = arith.constant 0 : index
      %163 = vector.load %arg5[%c10, %c0_87, %c0_88] : memref<11x256x256xbf16, #tpu.memory_space<vmem>>, vector<1x256x256xbf16>
      %164 = vector.shape_cast %163 : vector<1x256x256xbf16> to vector<256x256xbf16>
      %cst_89 = arith.constant dense<0.000000e+00> : vector<16x256xf32>
      %165 = tpu.matmul %162, %164, %cst_89 {dimension_numbers = #tpu.dot_dimension_numbers<[1], [0], [0], [1], [0, 0, 1, 1], [], []>} : vector<16x256xbf16>, vector<256x256xbf16>, vector<16x256xf32> -> vector<16x256xf32>
      %166 = arith.addf %158, %165 : vector<16x256xf32>
      %c0_90 = arith.constant 0 : index
      %c0_91 = arith.constant 0 : index
      %167 = vector.load %arg6[%c0_90, %c0_91] : memref<1x256xf32, #tpu.memory_space<vmem>>, vector<1x256xf32>
      %168 = vector.broadcast %167 : vector<1x256xf32> to vector<16x256xf32>
      %169 = arith.addf %166, %168 : vector<16x256xf32>
      %cst_92 = arith.constant 0.000000e+00 : f32
      %170 = vector.broadcast %cst_92 : f32 to vector<16x256xf32>
      %171 = arith.maximumf %169, %170 : vector<16x256xf32>
      %172 = vector.shape_cast %171 : vector<16x256xf32> to vector<2x8x256xf32>
      %173 = arith.truncf %172 : vector<2x8x256xf32> to vector<2x8x256xbf16>
      %c0_93 = arith.constant 0 : index
      %c0_94 = arith.constant 0 : index
      %c0_95 = arith.constant 0 : index
      %174 = vector.load %arg12[%c0_93, %c0_94, %c0_95] : memref<2x8x256xbf16, #tpu.memory_space<vmem>>, vector<2x8x256xbf16>
      tpu.vector_store %arg12[%c0_93, %c0_94, %c0_95], %173 {strides = array<i32>} : memref<2x8x256xbf16, #tpu.memory_space<vmem>>, vector<2x8x256xbf16>,
      %cst_96 = arith.constant 0.000000e+00 : f32
      %175 = vector.broadcast %cst_96 : f32 to vector<2x128xf32>
      %c0_97 = arith.constant 0 : index
      %c0_98 = arith.constant 0 : index
      %176 = vector.load %arg13[%c0_97, %c0_98] : memref<2x128xf32, #tpu.memory_space<vmem>>, vector<2x128xf32>
      tpu.vector_store %arg13[%c0_97, %c0_98], %175 {strides = array<i32>} : memref<2x128xf32, #tpu.memory_space<vmem>>, vector<2x128xf32>,
    } else {
    }
    %c0 = arith.constant 0 : index
    %c0_1 = arith.constant 0 : index
    %c0_2 = arith.constant 0 : index
    %3 = vector.load %arg12[%c0, %c0_1, %c0_2] : memref<2x8x256xbf16, #tpu.memory_space<vmem>>, vector<2x8x256xbf16>
    %cst = arith.constant 0.000000e+00 : f32
    %4 = vector.broadcast %cst : f32 to vector<2x256xf32>
    %5 = vector.extract_strided_slice %3 {offsets = [0, 0, 0], sizes = [2, 1, 256], strides = [1, 1, 1]} : vector<2x8x256xbf16> to vector<2x1x256xbf16>
    %6 = vector.shape_cast %5 : vector<2x1x256xbf16> to vector<2x256xbf16>
    %c0_3 = arith.constant 0 : index
    %c0_4 = arith.constant 0 : index
    %c0_5 = arith.constant 0 : index
    %7 = vector.load %arg7[%c0_3, %c0_4, %c0_5] : memref<8x256x256xbf16, #tpu.memory_space<vmem>>, vector<1x256x256xbf16>
    %8 = vector.shape_cast %7 : vector<1x256x256xbf16> to vector<256x256xbf16>
    %cst_6 = arith.constant dense<0.000000e+00> : vector<2x256xf32>
    %9 = tpu.matmul %6, %8, %cst_6 {dimension_numbers = #tpu.dot_dimension_numbers<[1], [0], [0], [1], [0, 0, 1, 1], [], []>} : vector<2x256xbf16>, vector<256x256xbf16>, vector<2x256xf32> -> vector<2x256xf32>
    %10 = arith.addf %4, %9 : vector<2x256xf32>
    %11 = vector.extract_strided_slice %3 {offsets = [0, 1, 0], sizes = [2, 1, 256], strides = [1, 1, 1]} : vector<2x8x256xbf16> to vector<2x1x256xbf16>
    %12 = vector.shape_cast %11 : vector<2x1x256xbf16> to vector<2x256xbf16>
    %c1 = arith.constant 1 : index
    %c0_7 = arith.constant 0 : index
    %c0_8 = arith.constant 0 : index
    %13 = vector.load %arg7[%c1, %c0_7, %c0_8] : memref<8x256x256xbf16, #tpu.memory_space<vmem>>, vector<1x256x256xbf16>
    %14 = vector.shape_cast %13 : vector<1x256x256xbf16> to vector<256x256xbf16>
    %cst_9 = arith.constant dense<0.000000e+00> : vector<2x256xf32>
    %15 = tpu.matmul %12, %14, %cst_9 {dimension_numbers = #tpu.dot_dimension_numbers<[1], [0], [0], [1], [0, 0, 1, 1], [], []>} : vector<2x256xbf16>, vector<256x256xbf16>, vector<2x256xf32> -> vector<2x256xf32>
    %16 = arith.addf %10, %15 : vector<2x256xf32>
    %17 = vector.extract_strided_slice %3 {offsets = [0, 2, 0], sizes = [2, 1, 256], strides = [1, 1, 1]} : vector<2x8x256xbf16> to vector<2x1x256xbf16>
    %18 = vector.shape_cast %17 : vector<2x1x256xbf16> to vector<2x256xbf16>
    %c2 = arith.constant 2 : index
    %c0_10 = arith.constant 0 : index
    %c0_11 = arith.constant 0 : index
    %19 = vector.load %arg7[%c2, %c0_10, %c0_11] : memref<8x256x256xbf16, #tpu.memory_space<vmem>>, vector<1x256x256xbf16>
    %20 = vector.shape_cast %19 : vector<1x256x256xbf16> to vector<256x256xbf16>
    %cst_12 = arith.constant dense<0.000000e+00> : vector<2x256xf32>
    %21 = tpu.matmul %18, %20, %cst_12 {dimension_numbers = #tpu.dot_dimension_numbers<[1], [0], [0], [1], [0, 0, 1, 1], [], []>} : vector<2x256xbf16>, vector<256x256xbf16>, vector<2x256xf32> -> vector<2x256xf32>
    %22 = arith.addf %16, %21 : vector<2x256xf32>
    %23 = vector.extract_strided_slice %3 {offsets = [0, 3, 0], sizes = [2, 1, 256], strides = [1, 1, 1]} : vector<2x8x256xbf16> to vector<2x1x256xbf16>
    %24 = vector.shape_cast %23 : vector<2x1x256xbf16> to vector<2x256xbf16>
    %c3 = arith.constant 3 : index
    %c0_13 = arith.constant 0 : index
    %c0_14 = arith.constant 0 : index
    %25 = vector.load %arg7[%c3, %c0_13, %c0_14] : memref<8x256x256xbf16, #tpu.memory_space<vmem>>, vector<1x256x256xbf16>
    %26 = vector.shape_cast %25 : vector<1x256x256xbf16> to vector<256x256xbf16>
    %cst_15 = arith.constant dense<0.000000e+00> : vector<2x256xf32>
    %27 = tpu.matmul %24, %26, %cst_15 {dimension_numbers = #tpu.dot_dimension_numbers<[1], [0], [0], [1], [0, 0, 1, 1], [], []>} : vector<2x256xbf16>, vector<256x256xbf16>, vector<2x256xf32> -> vector<2x256xf32>
    %28 = arith.addf %22, %27 : vector<2x256xf32>
    %29 = vector.extract_strided_slice %3 {offsets = [0, 4, 0], sizes = [2, 1, 256], strides = [1, 1, 1]} : vector<2x8x256xbf16> to vector<2x1x256xbf16>
    %30 = vector.shape_cast %29 : vector<2x1x256xbf16> to vector<2x256xbf16>
    %c4 = arith.constant 4 : index
    %c0_16 = arith.constant 0 : index
    %c0_17 = arith.constant 0 : index
    %31 = vector.load %arg7[%c4, %c0_16, %c0_17] : memref<8x256x256xbf16, #tpu.memory_space<vmem>>, vector<1x256x256xbf16>
    %32 = vector.shape_cast %31 : vector<1x256x256xbf16> to vector<256x256xbf16>
    %cst_18 = arith.constant dense<0.000000e+00> : vector<2x256xf32>
    %33 = tpu.matmul %30, %32, %cst_18 {dimension_numbers = #tpu.dot_dimension_numbers<[1], [0], [0], [1], [0, 0, 1, 1], [], []>} : vector<2x256xbf16>, vector<256x256xbf16>, vector<2x256xf32> -> vector<2x256xf32>
    %34 = arith.addf %28, %33 : vector<2x256xf32>
    %35 = vector.extract_strided_slice %3 {offsets = [0, 5, 0], sizes = [2, 1, 256], strides = [1, 1, 1]} : vector<2x8x256xbf16> to vector<2x1x256xbf16>
    %36 = vector.shape_cast %35 : vector<2x1x256xbf16> to vector<2x256xbf16>
    %c5 = arith.constant 5 : index
    %c0_19 = arith.constant 0 : index
    %c0_20 = arith.constant 0 : index
    %37 = vector.load %arg7[%c5, %c0_19, %c0_20] : memref<8x256x256xbf16, #tpu.memory_space<vmem>>, vector<1x256x256xbf16>
    %38 = vector.shape_cast %37 : vector<1x256x256xbf16> to vector<256x256xbf16>
    %cst_21 = arith.constant dense<0.000000e+00> : vector<2x256xf32>
    %39 = tpu.matmul %36, %38, %cst_21 {dimension_numbers = #tpu.dot_dimension_numbers<[1], [0], [0], [1], [0, 0, 1, 1], [], []>} : vector<2x256xbf16>, vector<256x256xbf16>, vector<2x256xf32> -> vector<2x256xf32>
    %40 = arith.addf %34, %39 : vector<2x256xf32>
    %41 = vector.extract_strided_slice %3 {offsets = [0, 6, 0], sizes = [2, 1, 256], strides = [1, 1, 1]} : vector<2x8x256xbf16> to vector<2x1x256xbf16>
    %42 = vector.shape_cast %41 : vector<2x1x256xbf16> to vector<2x256xbf16>
    %c6 = arith.constant 6 : index
    %c0_22 = arith.constant 0 : index
    %c0_23 = arith.constant 0 : index
    %43 = vector.load %arg7[%c6, %c0_22, %c0_23] : memref<8x256x256xbf16, #tpu.memory_space<vmem>>, vector<1x256x256xbf16>
    %44 = vector.shape_cast %43 : vector<1x256x256xbf16> to vector<256x256xbf16>
    %cst_24 = arith.constant dense<0.000000e+00> : vector<2x256xf32>
    %45 = tpu.matmul %42, %44, %cst_24 {dimension_numbers = #tpu.dot_dimension_numbers<[1], [0], [0], [1], [0, 0, 1, 1], [], []>} : vector<2x256xbf16>, vector<256x256xbf16>, vector<2x256xf32> -> vector<2x256xf32>
    %46 = arith.addf %40, %45 : vector<2x256xf32>
    %47 = vector.extract_strided_slice %3 {offsets = [0, 7, 0], sizes = [2, 1, 256], strides = [1, 1, 1]} : vector<2x8x256xbf16> to vector<2x1x256xbf16>
    %48 = vector.shape_cast %47 : vector<2x1x256xbf16> to vector<2x256xbf16>
    %c7 = arith.constant 7 : index
    %c0_25 = arith.constant 0 : index
    %c0_26 = arith.constant 0 : index
    %49 = vector.load %arg7[%c7, %c0_25, %c0_26] : memref<8x256x256xbf16, #tpu.memory_space<vmem>>, vector<1x256x256xbf16>
    %50 = vector.shape_cast %49 : vector<1x256x256xbf16> to vector<256x256xbf16>
    %cst_27 = arith.constant dense<0.000000e+00> : vector<2x256xf32>
    %51 = tpu.matmul %48, %50, %cst_27 {dimension_numbers = #tpu.dot_dimension_numbers<[1], [0], [0], [1], [0, 0, 1, 1], [], []>} : vector<2x256xbf16>, vector<256x256xbf16>, vector<2x256xf32> -> vector<2x256xf32>
    %52 = arith.addf %46, %51 : vector<2x256xf32>
    %c0_28 = arith.constant 0 : index
    %c0_29 = arith.constant 0 : index
    %53 = vector.load %arg8[%c0_28, %c0_29] : memref<1x256xf32, #tpu.memory_space<vmem>>, vector<1x256xf32>
    %54 = vector.broadcast %53 : vector<1x256xf32> to vector<2x256xf32>
    %55 = arith.addf %52, %54 : vector<2x256xf32>
    %cst_30 = arith.constant 0.000000e+00 : f32
    %56 = vector.broadcast %cst_30 : f32 to vector<2x256xf32>
    %57 = arith.maximumf %55, %56 : vector<2x256xf32>
    %58 = arith.truncf %57 : vector<2x256xf32> to vector<2x256xbf16>
    %c0_31 = arith.constant 0 : index
    %c0_32 = arith.constant 0 : index
    %59 = vector.load %arg13[%c0_31, %c0_32] : memref<2x128xf32, #tpu.memory_space<vmem>>, vector<2x128xf32>
    %c0_33 = arith.constant 0 : index
    %c0_34 = arith.constant 0 : index
    %60 = vector.load %arg9[%c0_33, %c0_34] : memref<256x128xbf16, #tpu.memory_space<vmem>>, vector<256x128xbf16>
    %cst_35 = arith.constant dense<0.000000e+00> : vector<2x128xf32>
    %61 = tpu.matmul %58, %60, %cst_35 {dimension_numbers = #tpu.dot_dimension_numbers<[1], [0], [0], [1], [0, 0, 1, 1], [], []>} : vector<2x256xbf16>, vector<256x128xbf16>, vector<2x128xf32> -> vector<2x128xf32>
    %62 = arith.addf %59, %61 : vector<2x128xf32>
    %c0_36 = arith.constant 0 : index
    %c0_37 = arith.constant 0 : index
    %63 = vector.load %arg13[%c0_36, %c0_37] : memref<2x128xf32, #tpu.memory_space<vmem>>, vector<2x128xf32>
    tpu.vector_store %arg13[%c0_36, %c0_37], %62 {strides = array<i32>} : memref<2x128xf32, #tpu.memory_space<vmem>>, vector<2x128xf32>,
    %c3_i32 = arith.constant 3 : i32
    %64 = arith.cmpi eq, %arg1, %c3_i32 : i32
    %65 = arith.extui %64 : i1 to i32
    %c0_i32_38 = arith.constant 0 : i32
    %66 = arith.cmpi ne, %65, %c0_i32_38 : i32
    scf.if %66 {
      %c0_39 = arith.constant 0 : index
      %c0_40 = arith.constant 0 : index
      %67 = vector.load %arg13[%c0_39, %c0_40] : memref<2x128xf32, #tpu.memory_space<vmem>>, vector<2x128xf32>
      %c0_41 = arith.constant 0 : index
      %c0_42 = arith.constant 0 : index
      %68 = vector.load %arg10[%c0_41, %c0_42] : memref<1x128xf32, #tpu.memory_space<vmem>>, vector<1x128xf32>
      %69 = vector.broadcast %68 : vector<1x128xf32> to vector<2x128xf32>
      %70 = arith.addf %67, %69 : vector<2x128xf32>
      %71 = tpu.iota {dimensions = array<i32: 1>} : vector<1x128xi32>
      %c0_i32_43 = arith.constant 0 : i32
      %72 = vector.broadcast %c0_i32_43 : i32 to vector<1x128xi32>
      %73 = arith.cmpi eq, %71, %72 : vector<1x128xi32>
      %cst_44 = arith.constant 0.000000e+00 : f32
      %74 = vector.shape_cast %73 : vector<1x128xi1> to vector<1x128xi1>
      %75 = vector.broadcast %74 : vector<1x128xi1> to vector<2x128xi1>
      %76 = vector.broadcast %cst_44 : f32 to vector<2x128xf32>
      %77 = arith.select %75, %70, %76 : vector<2x128xi1>, vector<2x128xf32>
      %cst_45 = arith.constant dense<0.000000e+00> : vector<2xf32>
      %78 = vector.multi_reduction <add>, %77, %cst_45 [1] : vector<2x128xf32> to vector<2xf32>
      %79 = vector.shape_cast %78 : vector<2xf32> to vector<2x1xf32>
      %c1_i32 = arith.constant 1 : i32
      %80 = vector.broadcast %c1_i32 : i32 to vector<1x128xi32>
      %81 = arith.cmpi sge, %71, %80 : vector<1x128xi32>
      %c9_i32 = arith.constant 9 : i32
      %82 = vector.broadcast %c9_i32 : i32 to vector<1x128xi32>
      %83 = arith.cmpi slt, %71, %82 : vector<1x128xi32>
      %84 = arith.andi %81, %83 : vector<1x128xi1>
      %cst_46 = arith.constant 0.000000e+00 : f32
      %85 = vector.shape_cast %84 : vector<1x128xi1> to vector<1x128xi1>
      %86 = vector.broadcast %85 : vector<1x128xi1> to vector<2x128xi1>
      %87 = vector.broadcast %cst_46 : f32 to vector<2x128xf32>
      %88 = arith.select %86, %70, %87 : vector<2x128xi1>, vector<2x128xf32>
      %cst_47 = arith.constant dense<0.000000e+00> : vector<2xf32>
      %89 = vector.multi_reduction <add>, %88, %cst_47 [1] : vector<2x128xf32> to vector<2xf32>
      %90 = vector.shape_cast %89 : vector<2xf32> to vector<2x1xf32>
      %91 = vector.broadcast %79 : vector<2x1xf32> to vector<2x128xf32>
      %92 = arith.addf %70, %91 : vector<2x128xf32>
      %cst_48 = arith.constant 1.250000e-01 : f32
      %93 = vector.broadcast %cst_48 : f32 to vector<2x1xf32>
      %94 = arith.mulf %90, %93 : vector<2x1xf32>
      %95 = vector.broadcast %94 : vector<2x1xf32> to vector<2x128xf32>
      %96 = arith.subf %92, %95 : vector<2x128xf32>
      %c0_49 = arith.constant 0 : index
      %c0_50 = arith.constant 0 : index
      %97 = vector.load %arg11[%c0_49, %c0_50] : memref<2x128xf32, #tpu.memory_space<vmem>>, vector<2x128xf32>
      tpu.vector_store %arg11[%c0_49, %c0_50], %96 {strides = array<i32>} : memref<2x128xf32, #tpu.memory_space<vmem>>, vector<2x128xf32>,
    } else {
    }
    return
  }
  func.func @transform_0(%arg0: i32, %arg1: i32) -> (i32, i32, i32) {
    %c0_i32 = arith.constant 0 : i32
    %c0_i32_0 = arith.constant 0 : i32
    %c0_i32_1 = arith.constant 0 : i32
    return %arg0, %c0_i32, %c0_i32_0 : i32, i32, i32
  }
  func.func @transform_1(%arg0: i32, %arg1: i32) -> (i32, i32) {
    %c0_i32 = arith.constant 0 : i32
    %c0_i32_0 = arith.constant 0 : i32
    %c0_i32_1 = arith.constant 0 : i32
    return %c0_i32, %c0_i32_0 : i32, i32
  }
  func.func @transform_2(%arg0: i32, %arg1: i32) -> (i32, i32) {
    %c0_i32 = arith.constant 0 : i32
    %c0_i32_0 = arith.constant 0 : i32
    %c0_i32_1 = arith.constant 0 : i32
    return %c0_i32, %c0_i32_0 : i32, i32
  }
  func.func @transform_3(%arg0: i32, %arg1: i32) -> (i32, i32, i32) {
    %c0_i32 = arith.constant 0 : i32
    %c0_i32_0 = arith.constant 0 : i32
    %c0_i32_1 = arith.constant 0 : i32
    %c0_i32_2 = arith.constant 0 : i32
    return %c0_i32, %c0_i32_0, %c0_i32_1 : i32, i32, i32
  }
  func.func @transform_4(%arg0: i32, %arg1: i32) -> (i32, i32) {
    %c0_i32 = arith.constant 0 : i32
    %c0_i32_0 = arith.constant 0 : i32
    %c0_i32_1 = arith.constant 0 : i32
    return %c0_i32, %c0_i32_0 : i32, i32
  }
  func.func @transform_5(%arg0: i32, %arg1: i32) -> (i32, i32, i32) {
    %c0_i32 = arith.constant 0 : i32
    %c0_i32_0 = arith.constant 0 : i32
    %c0_i32_1 = arith.constant 0 : i32
    return %c0_i32, %c0_i32_0, %arg1 : i32, i32, i32
  }
  func.func @transform_6(%arg0: i32, %arg1: i32) -> (i32, i32) {
    %c0_i32 = arith.constant 0 : i32
    %c0_i32_0 = arith.constant 0 : i32
    return %c0_i32, %arg1 : i32, i32
  }
  func.func @transform_7(%arg0: i32, %arg1: i32) -> (i32, i32) {
    %c0_i32 = arith.constant 0 : i32
    %c0_i32_0 = arith.constant 0 : i32
    return %arg1, %c0_i32 : i32, i32
  }
  func.func @transform_8(%arg0: i32, %arg1: i32) -> (i32, i32) {
    %c0_i32 = arith.constant 0 : i32
    %c0_i32_0 = arith.constant 0 : i32
    %c0_i32_1 = arith.constant 0 : i32
    return %c0_i32, %c0_i32_0 : i32, i32
  }
  func.func @transform_9(%arg0: i32, %arg1: i32) -> (i32, i32) {
    %c0_i32 = arith.constant 0 : i32
    %c0_i32_0 = arith.constant 0 : i32
    return %arg0, %c0_i32 : i32, i32
  }
}

</mosaic_0001>

<llo_original>
// kernel: tpu_custom_call.1
$region0: #{tpu_custom_call.1}
  #allocation0 [shape = 'u32[]', space=smem, size = 0x4, offset = 0x4, fixed_abs, tag = 'smem constant byte address 0x4 - core index']
  #allocation1 [shape = 'u32[144,128]{1,0:T(1,128)}', space=vmem, size = 0x12000, scoped, tag = 'internal scratch']
  #allocation2 [shape = 'bf16[2,8,256]{2,1,0:T(8,128)(2,1)}', space=vmem, size = 0x2000, scoped, tag = 'scratch operand']
  #allocation3 [shape = 'f32[2,128]{1,0:T(2,128)}', space=vmem, size = 0x400, scoped, tag = 'scratch operand']
  %s0 = inlined_call_operand.hbm [shape: bf16[2,32,128], index: 0, kind: input, shape index: {}]
  %s1 = inlined_call_operand.hbm [shape: bf16[128,128], index: 1, kind: input, shape index: {}]
  %s2 = inlined_call_operand.hbm [shape: f32[1,128], index: 2, kind: input, shape index: {}]
  %s3 = inlined_call_operand.hbm [shape: bf16[11,256,256], index: 3, kind: input, shape index: {}]
  %s4 = inlined_call_operand.hbm [shape: f32[1,256], index: 4, kind: input, shape index: {}]
  %s5 = inlined_call_operand.hbm [shape: bf16[8,256,1024], index: 5, kind: input, shape index: {}]
  %s6 = inlined_call_operand.hbm [shape: f32[1,1024], index: 6, kind: input, shape index: {}]
  %s7 = inlined_call_operand.hbm [shape: bf16[1024,128], index: 7, kind: input, shape index: {}]
  %s8 = inlined_call_operand.hbm [shape: f32[1,128], index: 8, kind: input, shape index: {}]
  %s9 = inlined_call_operand.hbm [shape: f32[2,128], index: 9, kind: output, shape index: {}]
  %s10 = sld [smem:[#allocation0]]
  $region113: #{tpu_custom_call.1} parent=0
    _
  %s12 = ssub.s32 1, %s10
  %s13 = scalar_select 0, %s12, %s10
  $region1: #{tpu_custom_call.1} parent=0
    #allocation4 [shape = 'u8[16384]{0}', space=vmem, size = 0x4000, scoped, tag = 'input window, operand 0, single buffered']
    #allocation5 [shape = 's32[2]{0}', space=sflag, size = 0x8, scoped, tag = 'scoped memory for tpu_custom_call.1']
    #allocation6 [shape = 's32[2]{0}', space=sflag, size = 0x8, scoped, tag = 'scoped memory for tpu_custom_call.1']
    #allocation7 [shape = 'u8[32768]{0}', space=vmem, size = 0x8000, scoped, tag = 'input window, operand 1, single buffered']
    #allocation8 [shape = 's32[1]{0}', space=sflag, size = 0x4, scoped, tag = 'scoped memory for tpu_custom_call.1']
    #allocation9 [shape = 'u8[512]{0}', space=vmem, size = 0x400, scoped, tag = 'input window, operand 2, single buffered']
    #allocation10 [shape = 'u8[1441792]{0}', space=vmem, size = 0x160000, scoped, tag = 'input window, operand 3, single buffered']
    #allocation11 [shape = 's32[1]{0}', space=sflag, size = 0x4, scoped, tag = 'scoped memory for tpu_custom_call.1']
    #allocation12 [shape = 'u8[1024]{0}', space=vmem, size = 0x400, scoped, tag = 'input window, operand 4, single buffered']
    #allocation13 [shape = 'u8[2097152]{0}', space=vmem, size = 0x200000, scoped, tag = 'input window, operand 5']
    #allocation14 [shape = 's32[2]{0}', space=sflag, size = 0x8, scoped, tag = 'scoped memory for tpu_custom_call.1']
    #allocation15 [shape = 'u8[2048]{0}', space=vmem, size = 0x800, scoped, tag = 'input window, operand 6']
    #allocation16 [shape = 'u8[131072]{0}', space=vmem, size = 0x20000, scoped, tag = 'input window, operand 7']
    #allocation17 [shape = 's32[2]{0}', space=sflag, size = 0x8, scoped, tag = 'scoped memory for tpu_custom_call.1']
    #allocation18 [shape = 'u8[512]{0}', space=vmem, size = 0x400, scoped, tag = 'input window, operand 8, single buffered']
    #allocation19 [shape = 'u8[1024]{0}', space=vmem, size = 0x400, scoped, tag = 'output window, operand 0, single buffered']
    %14 = vsyncpa [#allocation5], 0
    %15 = vsyncpa [#allocation8], 0
    %16 = vsyncpa [#allocation11], 0
    %17 = vsyncpa [#allocation14], 0
    %s18 = scalar_lea.sflag [#allocation14], 1
    %19 = vsyncpa %s18, 0
    %20 = vsyncpa [#allocation17], 0
    %s21 = scalar_lea.sflag [#allocation17], 1
    %22 = vsyncpa %s21, 0
    %23 = vsyncpa [#allocation6], 0
    loop: start=0, step=1, limit=6
    $region2: #{tpu_custom_call.1} parent=1 // loop_pre_header
      _
    $region3: #{tpu_custom_call.1} parent=1 // loop_header
      %s25 = sphi 0, %s29
      %p26 = scmp.ge.s32.totalorder %s25, 6
      %s32 = sphi 0, %s44
      %s33 = sphi 0, %s40
      %s34 = sphi 0, %s32
      %s35 = sphi 0, %s33
      %s36 = sphi 0, %s34
      %s37 = sphi 0, %s35
      %s47 = sphi 0, %s49
      %s50 = sphi 0, %s47
      %s51 = sphi 0, %s50
      %s67 = sphi 0, %s51
      %s71 = sphi 0, %s71
      %s73 = sphi 0, %s71
      %s74 = sphi 0, %s73
      %s88 = sphi 0, %s74
      %s92 = sphi 0, %s92
      %s94 = sphi 0, %s92
      %s95 = sphi 0, %s94
      %s109 = sphi 0, %s95
      %s113 = sphi 0, %s113
      %s115 = sphi 0, %s113
      %s116 = sphi 0, %s115
      %s130 = sphi 0, %s116
      %s134 = sphi 0, %s134
      %s136 = sphi 0, %s134
      %s137 = sphi 0, %s136
      %s151 = sphi 0, %s137
      %s157 = sphi 0, %s159
      %s160 = sphi 0, %s157
      %s161 = sphi 0, %s160
      %s177 = sphi 0, %s161
      %s183 = sphi 0, %s185
      %s186 = sphi 0, %s183
      %s187 = sphi 0, %s186
      %s203 = sphi 0, %s187
      %s209 = sphi 0, %s211
      %s212 = sphi 0, %s209
      %s213 = sphi 0, %s212
      %s229 = sphi 0, %s213
      %s233 = sphi 0, %s233
      %s235 = sphi 0, %s233
      %s236 = sphi 0, %s235
      %s250 = sphi 0, %s236
      %s256 = sphi 0, %s258
      %s259 = sphi 0, %s256
      %s260 = sphi 0, %s259
      %s276 = sphi 0, %s260
    $region4: #{tpu_custom_call.1} parent=1 // loop_header_branch
      %28 = sbr.rel (%p26) target = $region8
    $region5: #{tpu_custom_call.1} parent=1 // loop_body
      %s30 = ssub.s32 %s25, 1
      %s31 = ssub.s32 %s25, 2
      %s38 = sadd.s32 1, %s33
      %p39 = scmp.ge.s32.totalorder %s38, 4
      %s40 = scalar_select %p39, 0, %s38
      %s41 = sadd.s32 1, %s32
      %s42 = scalar_select %p39, %s41, %s32
      %p43 = scmp.ge.s32.totalorder %s42, 1
      %s44 = scalar_select %p43, 0, %s42
      %s45 = ssub.s32 %s32, %s44
      %p46 = scmp.eq.s32.totalorder %s45, 0
      %s48 = sadd.s32 %s47, 1
      %s49 = scalar_select %p46, %s47, %s48
      %p52 = pneg %p46
      %p53 = scmp.eq.s32.totalorder %s25, 3
      %p54 = por %p52, %p53
      %p55 = scmp.ne.s32.totalorder %s47, %s50
      %p56 = scmp.eq.s32.totalorder %s25, 0
      %p57 = por %p55, %p56
      %p58 = scmp.ne.s32.totalorder %s47, %s50
      %p59 = scmp.eq.s32.totalorder %s30, 3
      %p60 = por %p58, %p59
      %p61 = scmp.ne.s32.totalorder %s50, %s51
      %p62 = scmp.eq.s32.totalorder %s30, 0
      %p63 = por %p61, %p62
      %p64 = scmp.ne.s32.totalorder %s50, %s51
      %p65 = scmp.eq.s32.totalorder %s31, 3
      %p66 = por %p64, %p65
      %p68 = scmp.ne.s32.totalorder %s51, %s67
      %p69 = scmp.eq.s32.totalorder %s31, 0
      %p70 = por %p68, %p69
      %s72 = sadd.s32 %s71, 1
      %p75 = scmp.eq.s32.totalorder %s25, 3
      %p76 = scmp.ne.s32.totalorder %s71, %s73
      %p77 = scmp.eq.s32.totalorder %s25, 0
      %p78 = por %p76, %p77
      %p79 = scmp.ne.s32.totalorder %s71, %s73
      %p80 = scmp.eq.s32.totalorder %s30, 3
      %p81 = por %p79, %p80
      %p82 = scmp.ne.s32.totalorder %s73, %s74
      %p83 = scmp.eq.s32.totalorder %s30, 0
      %p84 = por %p82, %p83
      %p85 = scmp.ne.s32.totalorder %s73, %s74
      %p86 = scmp.eq.s32.totalorder %s31, 3
      %p87 = por %p85, %p86
      %p89 = scmp.ne.s32.totalorder %s74, %s88
      %p90 = scmp.eq.s32.totalorder %s31, 0
      %p91 = por %p89, %p90
      %s93 = sadd.s32 %s92, 1
      %p96 = scmp.eq.s32.totalorder %s25, 3
      %p97 = scmp.ne.s32.totalorder %s92, %s94
      %p98 = scmp.eq.s32.totalorder %s25, 0
      %p99 = por %p97, %p98
      %p100 = scmp.ne.s32.totalorder %s92, %s94
      %p101 = scmp.eq.s32.totalorder %s30, 3
      %p102 = por %p100, %p101
      %p103 = scmp.ne.s32.totalorder %s94, %s95
      %p104 = scmp.eq.s32.totalorder %s30, 0
      %p105 = por %p103, %p104
      %p106 = scmp.ne.s32.totalorder %s94, %s95
      %p107 = scmp.eq.s32.totalorder %s31, 3
      %p108 = por %p106, %p107
      %p110 = scmp.ne.s32.totalorder %s95, %s109
      %p111 = scmp.eq.s32.totalorder %s31, 0
      %p112 = por %p110, %p111
      %s114 = sadd.s32 %s113, 1
      %p117 = scmp.eq.s32.totalorder %s25, 3
      %p118 = scmp.ne.s32.totalorder %s113, %s115
      %p119 = scmp.eq.s32.totalorder %s25, 0
      %p120 = por %p118, %p119
      %p121 = scmp.ne.s32.totalorder %s113, %s115
      %p122 = scmp.eq.s32.totalorder %s30, 3
      %p123 = por %p121, %p122
      %p124 = scmp.ne.s32.totalorder %s115, %s116
      %p125 = scmp.eq.s32.totalorder %s30, 0
      %p126 = por %p124, %p125
      %p127 = scmp.ne.s32.totalorder %s115, %s116
      %p128 = scmp.eq.s32.totalorder %s31, 3
      %p129 = por %p127, %p128
      %p131 = scmp.ne.s32.totalorder %s116, %s130
      %p132 = scmp.eq.s32.totalorder %s31, 0
      %p133 = por %p131, %p132
      %s135 = sadd.s32 %s134, 1
      %p138 = scmp.eq.s32.totalorder %s25, 3
      %p139 = scmp.ne.s32.totalorder %s134, %s136
      %p140 = scmp.eq.s32.totalorder %s25, 0
      %p141 = por %p139, %p140
      %p142 = scmp.ne.s32.totalorder %s134, %s136
      %p143 = scmp.eq.s32.totalorder %s30, 3
      %p144 = por %p142, %p143
      %p145 = scmp.ne.s32.totalorder %s136, %s137
      %p146 = scmp.eq.s32.totalorder %s30, 0
      %p147 = por %p145, %p146
      %p148 = scmp.ne.s32.totalorder %s136, %s137
      %p149 = scmp.eq.s32.totalorder %s31, 3
      %p150 = por %p148, %p149
      %p152 = scmp.ne.s32.totalorder %s137, %s151
      %p153 = scmp.eq.s32.totalorder %s31, 0
      %p154 = por %p152, %p153
      %s155 = ssub.s32 %s33, %s40
      %p156 = scmp.eq.s32.totalorder %s155, 0
      %s158 = sadd.s32 %s157, 1
      %s159 = scalar_select %p156, %s157, %s158
      %p162 = pneg %p156
      %p163 = scmp.eq.s32.totalorder %s25, 3
      %p164 = por %p162, %p163
      %p165 = scmp.ne.s32.totalorder %s157, %s160
      %p166 = scmp.eq.s32.totalorder %s25, 0
      %p167 = por %p165, %p166
      %p168 = scmp.ne.s32.totalorder %s157, %s160
      %p169 = scmp.eq.s32.totalorder %s30, 3
      %p170 = por %p168, %p169
      %p171 = scmp.ne.s32.totalorder %s160, %s161
      %p172 = scmp.eq.s32.totalorder %s30, 0
      %p173 = por %p171, %p172
      %p174 = scmp.ne.s32.totalorder %s160, %s161
      %p175 = scmp.eq.s32.totalorder %s31, 3
      %p176 = por %p174, %p175
      %p178 = scmp.ne.s32.totalorder %s161, %s177
      %p179 = scmp.eq.s32.totalorder %s31, 0
      %p180 = por %p178, %p179
      %s181 = ssub.s32 %s33, %s40
      %p182 = scmp.eq.s32.totalorder %s181, 0
      %s184 = sadd.s32 %s183, 1
      %s185 = scalar_select %p182, %s183, %s184
      %p188 = pneg %p182
      %p189 = scmp.eq.s32.totalorder %s25, 3
      %p190 = por %p188, %p189
      %p191 = scmp.ne.s32.totalorder %s183, %s186
      %p192 = scmp.eq.s32.totalorder %s25, 0
      %p193 = por %p191, %p192
      %p194 = scmp.ne.s32.totalorder %s183, %s186
      %p195 = scmp.eq.s32.totalorder %s30, 3
      %p196 = por %p194, %p195
      %p197 = scmp.ne.s32.totalorder %s186, %s187
      %p198 = scmp.eq.s32.totalorder %s30, 0
      %p199 = por %p197, %p198
      %p200 = scmp.ne.s32.totalorder %s186, %s187
      %p201 = scmp.eq.s32.totalorder %s31, 3
      %p202 = por %p200, %p201
      %p204 = scmp.ne.s32.totalorder %s187, %s203
      %p205 = scmp.eq.s32.totalorder %s31, 0
      %p206 = por %p204, %p205
      %s207 = ssub.s32 %s33, %s40
      %p208 = scmp.eq.s32.totalorder %s207, 0
      %s210 = sadd.s32 %s209, 1
      %s211 = scalar_select %p208, %s209, %s210
      %p214 = pneg %p208
      %p215 = scmp.eq.s32.totalorder %s25, 3
      %p216 = por %p214, %p215
      %p217 = scmp.ne.s32.totalorder %s209, %s212
      %p218 = scmp.eq.s32.totalorder %s25, 0
      %p219 = por %p217, %p218
      %p220 = scmp.ne.s32.totalorder %s209, %s212
      %p221 = scmp.eq.s32.totalorder %s30, 3
      %p222 = por %p220, %p221
      %p223 = scmp.ne.s32.totalorder %s212, %s213
      %p224 = scmp.eq.s32.totalorder %s30, 0
      %p225 = por %p223, %p224
      %p226 = scmp.ne.s32.totalorder %s212, %s213
      %p227 = scmp.eq.s32.totalorder %s31, 3
      %p228 = por %p226, %p227
      %p230 = scmp.ne.s32.totalorder %s213, %s229
      %p231 = scmp.eq.s32.totalorder %s31, 0
      %p232 = por %p230, %p231
      %s234 = sadd.s32 %s233, 1
      %p237 = scmp.eq.s32.totalorder %s25, 3
      %p238 = scmp.ne.s32.totalorder %s233, %s235
      %p239 = scmp.eq.s32.totalorder %s25, 0
      %p240 = por %p238, %p239
      %p241 = scmp.ne.s32.totalorder %s233, %s235
      %p242 = scmp.eq.s32.totalorder %s30, 3
      %p243 = por %p241, %p242
      %p244 = scmp.ne.s32.totalorder %s235, %s236
      %p245 = scmp.eq.s32.totalorder %s30, 0
      %p246 = por %p244, %p245
      %p247 = scmp.ne.s32.totalorder %s235, %s236
      %p248 = scmp.eq.s32.totalorder %s31, 3
      %p249 = por %p247, %p248
      %p251 = scmp.ne.s32.totalorder %s236, %s250
      %p252 = scmp.eq.s32.totalorder %s31, 0
      %p253 = por %p251, %p252
      %s254 = ssub.s32 %s32, %s44
      %p255 = scmp.eq.s32.totalorder %s254, 0
      %s257 = sadd.s32 %s256, 1
      %s258 = scalar_select %p255, %s256, %s257
      %p261 = pneg %p255
      %p262 = scmp.eq.s32.totalorder %s25, 3
      %p263 = por %p261, %p262
      %p264 = scmp.ne.s32.totalorder %s256, %s259
      %p265 = scmp.eq.s32.totalorder %s25, 0
      %p266 = por %p264, %p265
      %p267 = scmp.ne.s32.totalorder %s256, %s259
      %p268 = scmp.eq.s32.totalorder %s30, 3
      %p269 = por %p267, %p268
      %p270 = scmp.ne.s32.totalorder %s259, %s260
      %p271 = scmp.eq.s32.totalorder %s30, 0
      %p272 = por %p270, %p271
      %p273 = scmp.ne.s32.totalorder %s259, %s260
      %p274 = scmp.eq.s32.totalorder %s31, 3
      %p275 = por %p273, %p274
      %p277 = scmp.ne.s32.totalorder %s260, %s276
      %p278 = scmp.eq.s32.totalorder %s31, 0
      %p279 = por %p277, %p278
      %p280 = scmp.le.s32.totalorder 1, %s25
      %p281 = scmp.lt.s32.totalorder %s25, 5
      %p282 = pnand %p280, %p281
      %p283 = pneg %p282
      // Predicated region
      $region9: #{tpu_custom_call.1} parent=5 // pred_check
        _
      $region10: #{tpu_custom_call.1} parent=5 // pred_check_branch
        %285 = sbr.rel (%p282) target = $region12
      $region11: #{tpu_custom_call.1} parent=5 // pred_region
        %s286 = ssub.s32 %s25, 1
        // Predicated region
        $region13: #{tpu_custom_call.1} parent=11 // pred_check
          %p287 = pneg %p63
        $region14: #{tpu_custom_call.1} parent=11 // pred_check_branch
          %289 = sbr.rel (%p287) target = $region16
        $region15: #{tpu_custom_call.1} parent=11 // pred_region
          %s290 = smul.u32 2, %s34
          %s292 = ssub.s32 512, 512
          %293 = vsyncadd [#allocation5], %s292
          %s294 = smul.addr %s290, 4
          %s295 = smul.addr %s294, 64
          %s296 = scalar_lea.hbm %s0, %s295
          %s297 = sshll.u32 [#allocation4], 4
          %s298 = int_to_ptr.vmem [resolvable:$true] %s297
          %303 = dma.hbm_to_vmem [thread:$0]  %s296, 512, %s298, [#allocation5], 64, 64, 4
        $region16: #{tpu_custom_call.1} parent=11 // pred_fallthru
          _
        // Predicated region
        $region17: #{tpu_custom_call.1} parent=11 // pred_check
          %p304 = pneg %p84
        $region18: #{tpu_custom_call.1} parent=11 // pred_check_branch
          %306 = sbr.rel (%p304) target = $region20
        $region19: #{tpu_custom_call.1} parent=11 // pred_region
          %s308 = ssub.s32 1024, 1024
          %309 = vsyncadd [#allocation8], %s308
          %s310 = sshll.u32 [#allocation7], 4
          %s311 = int_to_ptr.vmem [resolvable:$true] %s310
          %316 = dma.hbm_to_vmem [thread:$0]  %s1, 1024, %s311, [#allocation8], 64, 64, 4
        $region20: #{tpu_custom_call.1} parent=11 // pred_fallthru
          _
        // Predicated region
        $region21: #{tpu_custom_call.1} parent=11 // pred_check
          %p317 = pneg %p105
        $region22: #{tpu_custom_call.1} parent=11 // pred_check_branch
          %319 = sbr.rel (%p317) target = $region24
        $region23: #{tpu_custom_call.1} parent=11 // pred_region
          %s321 = ssub.s32 16, 16
          %322 = vsyncadd [#allocation8], %s321
          %s324 = sshll.u32 [#allocation9], 4
          %s325 = int_to_ptr.vmem [resolvable:$true] %s324
          %327 = dma.hbm_to_vmem [thread:$0]  %s2, 16, %s325, [#allocation8]
        $region24: #{tpu_custom_call.1} parent=11 // pred_fallthru
          _
        // Predicated region
        $region25: #{tpu_custom_call.1} parent=11 // pred_check
          %p328 = pneg %p126
        $region26: #{tpu_custom_call.1} parent=11 // pred_check_branch
          %330 = sbr.rel (%p328) target = $region28
        $region27: #{tpu_custom_call.1} parent=11 // pred_region
          %s332 = ssub.s32 45056, 45056
          %333 = vsyncadd [#allocation11], %s332
          %s334 = sshll.u32 [#allocation10], 4
          %s335 = int_to_ptr.vmem [resolvable:$true] %s334
          %340 = dma.hbm_to_vmem [thread:$0]  %s3, 45056, %s335, [#allocation11], 128, 128, 8
        $region28: #{tpu_custom_call.1} parent=11 // pred_fallthru
          _
        // Predicated region
        $region29: #{tpu_custom_call.1} parent=11 // pred_check
          %p341 = pneg %p147
        $region30: #{tpu_custom_call.1} parent=11 // pred_check_branch
          %343 = sbr.rel (%p341) target = $region32
        $region31: #{tpu_custom_call.1} parent=11 // pred_region
          %s345 = ssub.s32 32, 32
          %346 = vsyncadd [#allocation11], %s345
          %s348 = sshll.u32 [#allocation12], 4
          %s349 = int_to_ptr.vmem [resolvable:$true] %s348
          %351 = dma.hbm_to_vmem [thread:$0]  %s4, 32, %s349, [#allocation11]
        $region32: #{tpu_custom_call.1} parent=11 // pred_fallthru
          _
        // Predicated region
        $region33: #{tpu_custom_call.1} parent=11 // pred_check
          %p352 = pneg %p246
        $region34: #{tpu_custom_call.1} parent=11 // pred_check_branch
          %354 = sbr.rel (%p352) target = $region36
        $region35: #{tpu_custom_call.1} parent=11 // pred_region
          %s356 = ssub.s32 16, 16
          %357 = vsyncadd [#allocation17], %s356
          %s359 = sshll.u32 [#allocation18], 4
          %s360 = int_to_ptr.vmem [resolvable:$true] %s359
          %362 = dma.hbm_to_vmem [thread:$0]  %s8, 16, %s360, [#allocation17]
        $region36: #{tpu_custom_call.1} parent=11 // pred_fallthru
          _
      $region12: #{tpu_custom_call.1} parent=5 // pred_fallthru
        _
      %p363 = scmp.lt.s32.totalorder %s25, 4
      // Predicated region
      $region37: #{tpu_custom_call.1} parent=5 // pred_check
        %p364 = pneg %p363
      $region38: #{tpu_custom_call.1} parent=5 // pred_check_branch
        %366 = sbr.rel (%p364) target = $region40
      $region39: #{tpu_custom_call.1} parent=5 // pred_region
        // Predicated region
        $region41: #{tpu_custom_call.1} parent=39 // pred_check
          %p367 = pneg %p167
        $region42: #{tpu_custom_call.1} parent=39 // pred_check_branch
          %369 = sbr.rel (%p367) target = $region44
        $region43: #{tpu_custom_call.1} parent=39 // pred_region
          %s370 = sand.u32 %s25, 1
          %s371 = scalar_lea.sflag [#allocation14], %s370
          %s372 = sand.u32 %s157, 1
          %s373 = smul.addr %s372, 2048
          %s374 = scalar_lea.vmem [#allocation13], %s373
          %s375 = smul.u32 2, %s33
          %s377 = ssub.s32 32768, 32768
          %378 = vsyncadd %s371, %s377
          %s379 = smul.addr %s375, 64
          %s380 = scalar_lea.hbm %s5, %s379
          %s381 = sshll.u32 %s374, 4
          %s382 = int_to_ptr.vmem [resolvable:$true] %s381
          %387 = dma.hbm_to_vmem [thread:$0]  %s380, 32768, %s382, %s371, 512, 128, 8
        $region44: #{tpu_custom_call.1} parent=39 // pred_fallthru
          _
        // Predicated region
        $region45: #{tpu_custom_call.1} parent=39 // pred_check
          %p388 = pneg %p193
        $region46: #{tpu_custom_call.1} parent=39 // pred_check_branch
          %390 = sbr.rel (%p388) target = $region48
        $region47: #{tpu_custom_call.1} parent=39 // pred_region
          %s391 = sand.u32 %s25, 1
          %s392 = scalar_lea.sflag [#allocation14], %s391
          %s393 = sand.u32 %s183, 1
          %s394 = smul.addr %s393, 2
          %s395 = scalar_lea.vmem [#allocation15], %s394
          %s396 = smul.u32 2, %s33
          %s398 = ssub.s32 32, 32
          %399 = vsyncadd %s392, %s398
          %s400 = smul.addr %s396, 16
          %s401 = scalar_lea.hbm %s6, %s400
          %s403 = sshll.u32 %s395, 4
          %s404 = int_to_ptr.vmem [resolvable:$true] %s403
          %406 = dma.hbm_to_vmem [thread:$0]  %s401, 32, %s404, %s392
        $region48: #{tpu_custom_call.1} parent=39 // pred_fallthru
          _
        // Predicated region
        $region49: #{tpu_custom_call.1} parent=39 // pred_check
          %p407 = pneg %p219
        $region50: #{tpu_custom_call.1} parent=39 // pred_check_branch
          %409 = sbr.rel (%p407) target = $region52
        $region51: #{tpu_custom_call.1} parent=39 // pred_region
          %s410 = sand.u32 %s25, 1
          %s411 = scalar_lea.sflag [#allocation17], %s410
          %s412 = sand.u32 %s209, 1
          %s413 = smul.addr %s412, 128
          %s414 = scalar_lea.vmem [#allocation16], %s413
          %s415 = smul.u32 32, %s33
          %s417 = ssub.s32 2048, 2048
          %418 = vsyncadd %s411, %s417
          %s419 = smul.addr %s415, 64
          %s420 = scalar_lea.hbm %s7, %s419
          %s421 = sshll.u32 %s414, 4
          %s422 = int_to_ptr.vmem [resolvable:$true] %s421
          %427 = dma.hbm_to_vmem [thread:$0]  %s420, 2048, %s422, %s411, 64, 64, 4
        $region52: #{tpu_custom_call.1} parent=39 // pred_fallthru
          _
      $region40: #{tpu_custom_call.1} parent=5 // pred_fallthru
        _
      %p428 = scmp.le.s32.totalorder 1, %s25
      %p429 = scmp.lt.s32.totalorder %s25, 5
      %p430 = pnand %p428, %p429
      %p431 = pneg %p430
      // Predicated region
      $region53: #{tpu_custom_call.1} parent=5 // pred_check
        _
      $region54: #{tpu_custom_call.1} parent=5 // pred_check_branch
        %433 = sbr.rel (%p430) target = $region56
      $region55: #{tpu_custom_call.1} parent=5 // pred_region
        %s434 = ssub.s32 %s25, 1
        // Predicated region
        $region57: #{tpu_custom_call.1} parent=55 // pred_check
          %p435 = pneg %p63
        $region58: #{tpu_custom_call.1} parent=55 // pred_check_branch
          %437 = sbr.rel (%p435) target = $region60
        $region59: #{tpu_custom_call.1} parent=55 // pred_region
          %438 = dma.done [#allocation5], 512
        $region60: #{tpu_custom_call.1} parent=55 // pred_fallthru
          _
        // Predicated region
        $region61: #{tpu_custom_call.1} parent=55 // pred_check
          %p439 = pneg %p84
        $region62: #{tpu_custom_call.1} parent=55 // pred_check_branch
          %441 = sbr.rel (%p439) target = $region64
        $region63: #{tpu_custom_call.1} parent=55 // pred_region
          %442 = dma.done [#allocation8], 1024
        $region64: #{tpu_custom_call.1} parent=55 // pred_fallthru
          _
        // Predicated region
        $region65: #{tpu_custom_call.1} parent=55 // pred_check
          %p443 = pneg %p105
        $region66: #{tpu_custom_call.1} parent=55 // pred_check_branch
          %445 = sbr.rel (%p443) target = $region68
        $region67: #{tpu_custom_call.1} parent=55 // pred_region
          %446 = dma.done [#allocation8], 16
        $region68: #{tpu_custom_call.1} parent=55 // pred_fallthru
          _
        // Predicated region
        $region69: #{tpu_custom_call.1} parent=55 // pred_check
          %p447 = pneg %p126
        $region70: #{tpu_custom_call.1} parent=55 // pred_check_branch
          %449 = sbr.rel (%p447) target = $region72
        $region71: #{tpu_custom_call.1} parent=55 // pred_region
          %450 = dma.done [#allocation11], 45056
        $region72: #{tpu_custom_call.1} parent=55 // pred_fallthru
          _
        // Predicated region
        $region73: #{tpu_custom_call.1} parent=55 // pred_check
          %p451 = pneg %p147
        $region74: #{tpu_custom_call.1} parent=55 // pred_check_branch
          %453 = sbr.rel (%p451) target = $region76
        $region75: #{tpu_custom_call.1} parent=55 // pred_region
          %454 = dma.done [#allocation11], 32
        $region76: #{tpu_custom_call.1} parent=55 // pred_fallthru
          _
        %s455 = sand.u32 %s30, 1
        %s456 = scalar_lea.sflag [#allocation14], %s455
        %s457 = sand.u32 %s160, 1
        %s458 = smul.addr %s457, 2048
        %s459 = scalar_lea.vmem [#allocation13], %s458
        // Predicated region
        $region77: #{tpu_custom_call.1} parent=55 // pred_check
          %p460 = pneg %p173
        $region78: #{tpu_custom_call.1} parent=55 // pred_check_branch
          %462 = sbr.rel (%p460) target = $region80
        $region79: #{tpu_custom_call.1} parent=55 // pred_region
          %463 = dma.done %s456, 32768
        $region80: #{tpu_custom_call.1} parent=55 // pred_fallthru
          _
        %s464 = sand.u32 %s30, 1
        %s465 = scalar_lea.sflag [#allocation14], %s464
        %s466 = sand.u32 %s186, 1
        %s467 = smul.addr %s466, 2
        %s468 = scalar_lea.vmem [#allocation15], %s467
        // Predicated region
        $region81: #{tpu_custom_call.1} parent=55 // pred_check
          %p469 = pneg %p199
        $region82: #{tpu_custom_call.1} parent=55 // pred_check_branch
          %471 = sbr.rel (%p469) target = $region84
        $region83: #{tpu_custom_call.1} parent=55 // pred_region
          %472 = dma.done %s465, 32
        $region84: #{tpu_custom_call.1} parent=55 // pred_fallthru
          _
        %s473 = sand.u32 %s30, 1
        %s474 = scalar_lea.sflag [#allocation17], %s473
        %s475 = sand.u32 %s212, 1
        %s476 = smul.addr %s475, 128
        %s477 = scalar_lea.vmem [#allocation16], %s476
        // Predicated region
        $region85: #{tpu_custom_call.1} parent=55 // pred_check
          %p478 = pneg %p225
        $region86: #{tpu_custom_call.1} parent=55 // pred_check_branch
          %480 = sbr.rel (%p478) target = $region88
        $region87: #{tpu_custom_call.1} parent=55 // pred_region
          %481 = dma.done %s474, 2048
        $region88: #{tpu_custom_call.1} parent=55 // pred_fallthru
          _
        // Predicated region
        $region89: #{tpu_custom_call.1} parent=55 // pred_check
          %p482 = pneg %p246
        $region90: #{tpu_custom_call.1} parent=55 // pred_check_branch
          %484 = sbr.rel (%p482) target = $region92
        $region91: #{tpu_custom_call.1} parent=55 // pred_region
          %485 = dma.done [#allocation17], 16
        $region92: #{tpu_custom_call.1} parent=55 // pred_fallthru
          _
        %p486 = pneg %p63
        %p487 = pneg %p60
        %p488 = pneg %p84
        %p489 = pneg %p81
        %p490 = pneg %p105
        %p491 = pneg %p102
        %p492 = pneg %p126
        %p493 = pneg %p123
        %p494 = pneg %p147
        %p495 = pneg %p144
        %s496 = sand.u32 %s30, 1
        %s497 = scalar_lea.sflag [#allocation14], %s496
        %s498 = sand.u32 %s160, 1
        %s499 = smul.addr %s498, 2048
        %s500 = scalar_lea.vmem [#allocation13], %s499
        %p501 = pneg %p173
        %p502 = pneg %p170
        %s503 = sand.u32 %s30, 1
        %s504 = scalar_lea.sflag [#allocation14], %s503
        %s505 = sand.u32 %s186, 1
        %s506 = smul.addr %s505, 2
        %s507 = scalar_lea.vmem [#allocation15], %s506
        %p508 = pneg %p199
        %p509 = pneg %p196
        %s510 = sand.u32 %s30, 1
        %s511 = scalar_lea.sflag [#allocation17], %s510
        %s512 = sand.u32 %s212, 1
        %s513 = smul.addr %s512, 128
        %s514 = scalar_lea.vmem [#allocation16], %s513
        %p515 = pneg %p225
        %p516 = pneg %p222
        %p517 = pneg %p246
        %p518 = pneg %p243
        %p519 = pneg %p272
        %p520 = pneg %p269
        %s521 = smul.u32 2, %s34
        %s522 = smul.u32 2, %s35
        %s523 = smul.u32 2, %s35
        %s524 = smul.u32 32, %s35
        %p526 = scmp.eq.s32.totalorder %s35, 0
        // Predicated region
        $region93: #{tpu_custom_call.1} parent=55 // pred_check
          %p527 = pneg %p526
        $region94: #{tpu_custom_call.1} parent=55 // pred_check_branch
          %529 = sbr.rel (%p527) target = $region96
        $region95: #{tpu_custom_call.1} parent=55 // pred_region
          %v530 = vld [vmem:[#allocation4] sm:$0xf]
          %v531 = vld [vmem:[#allocation4 + $0x4] sm:$0xf]
          %v532 = vld [vmem:[#allocation4 + $0x8] sm:$0xf]
          %v533 = vld [vmem:[#allocation4 + $0xc] sm:$0xf]
          %v534 = vld [vmem:[#allocation4 + $0x10] sm:$0xf]
          %v535 = vld [vmem:[#allocation4 + $0x14] sm:$0xf]
          %v536 = vld [vmem:[#allocation4 + $0x18] sm:$0xf]
          %v537 = vld [vmem:[#allocation4 + $0x1c] sm:$0xf]
          %v538 = vld [vmem:[#allocation7] sm:$0xf]
          %v539 = vld [vmem:[#allocation7 + $0x4] sm:$0xf]
          %v540 = vld [vmem:[#allocation7 + $0x8] sm:$0xf]
          %v541 = vld [vmem:[#allocation7 + $0xc] sm:$0xf]
          %v542 = vld [vmem:[#allocation7 + $0x10] sm:$0xf]
          %v543 = vld [vmem:[#allocation7 + $0x14] sm:$0xf]
          %v544 = vld [vmem:[#allocation7 + $0x18] sm:$0xf]
          %v545 = vld [vmem:[#allocation7 + $0x1c] sm:$0xf]
          %v546 = vld [vmem:[#allocation7 + $0x20] sm:$0xf]
          %v547 = vld [vmem:[#allocation7 + $0x24] sm:$0xf]
          %v548 = vld [vmem:[#allocation7 + $0x28] sm:$0xf]
          %v549 = vld [vmem:[#allocation7 + $0x2c] sm:$0xf]
          %v550 = vld [vmem:[#allocation7 + $0x30] sm:$0xf]
          %v551 = vld [vmem:[#allocation7 + $0x34] sm:$0xf]
          %v552 = vld [vmem:[#allocation7 + $0x38] sm:$0xf]
          %v553 = vld [vmem:[#allocation7 + $0x3c] sm:$0xf]
          %v554 = vld [vmem:[#allocation9] sm:$0x1]
          %v556 = vlaneseq
          %v557 = vshrl.u32 %v556, 7
          %v558 = vsub.s32 0, %v557
          %v559 = vrot.slane %v554, %v558
          %v569 = vunpack.c.l.b16 %v530
          %v570 = vunpack.c.l.b16 %v531
          %v571 = vunpack.c.l.b16 %v532
          %v572 = vunpack.c.l.b16 %v533
          %v573 = vunpack.c.l.b16 %v534
          %v574 = vunpack.c.l.b16 %v535
          %v575 = vunpack.c.l.b16 %v536
          %v576 = vunpack.c.l.b16 %v537
          %v577 = vpack.c.b16 %v570, %v569
          %v578 = vpack.c.b16 %v572, %v571
          %v579 = vpack.c.b16 %v574, %v573
          %v580 = vpack.c.b16 %v576, %v575
          %v601 = vunpack.c.l.b16 %v538
          %v602 = vunpack.c.l.b16 %v539
          %v603 = vunpack.c.l.b16 %v540
          %v604 = vunpack.c.l.b16 %v541
          %v605 = vunpack.c.l.b16 %v542
          %v606 = vunpack.c.l.b16 %v543
          %v607 = vunpack.c.l.b16 %v544
          %v608 = vunpack.c.l.b16 %v545
          %v609 = vunpack.c.l.b16 %v546
          %v610 = vunpack.c.l.b16 %v547
          %v611 = vunpack.c.l.b16 %v548
          %v612 = vunpack.c.l.b16 %v549
          %v613 = vunpack.c.l.b16 %v550
          %v614 = vunpack.c.l.b16 %v551
          %v615 = vunpack.c.l.b16 %v552
          %v616 = vunpack.c.l.b16 %v553
          %v617 = vpack.c.b16 %v602, %v601
          %v618 = vpack.c.b16 %v604, %v603
          %v619 = vpack.c.b16 %v606, %v605
          %v620 = vpack.c.b16 %v608, %v607
          %v621 = vpack.c.b16 %v610, %v609
          %v622 = vpack.c.b16 %v612, %v611
          %v623 = vpack.c.b16 %v614, %v613
          %v624 = vpack.c.b16 %v616, %v615
          %633 = vmatprep.subr.bf16.mxu0 0
          %634 = vmatpush1.bf16.msra.mxu0 %v624
          %635 = vmatprep.subr.bf16.mxu0 0
          %636 = vmatpush1.bf16.msra.mxu0 %v623
          %637 = vmatprep.subr.bf16.mxu0 0
          %638 = vmatpush1.bf16.msra.mxu0 %v622
          %639 = vmatprep.subr.bf16.mxu0 0
          %640 = vmatpush1.bf16.msra.mxu0 %v621
          %641 = vmatprep.subr.bf16.mxu0 0
          %642 = vmatpush1.bf16.msra.mxu0 %v620
          %643 = vmatprep.subr.bf16.mxu0 0
          %644 = vmatpush1.bf16.msra.mxu0 %v619
          %645 = vmatprep.subr.bf16.mxu0 0
          %646 = vmatpush1.bf16.msra.mxu0 %v618
          %647 = vmatprep.subr.bf16.mxu0 0
          %648 = vmatpush1.bf16.msra.mxu0 %v617
          %649 = vmatprep.subr.bf16.mxu0 0
          %650 = vmatpush2.bf16.msra.mxu0 0
          %651 = vmatprep.subr.bf16.mxu0 0
          %652 = vmatpush2.bf16.msra.mxu0 0
          %653 = vmatprep.subr.bf16.mxu0 0
          %654 = vmatpush2.bf16.msra.mxu0 0
          %655 = vmatprep.subr.bf16.mxu0 0
          %656 = vmatpush2.bf16.msra.mxu0 0
          %657 = vmatprep.subr.bf16.mxu0 0
          %658 = vmatpush2.bf16.msra.mxu0 0
          %659 = vmatprep.subr.bf16.mxu0 0
          %660 = vmatpush2.bf16.msra.mxu0 0
          %661 = vmatprep.subr.bf16.mxu0 0
          %662 = vmatpush2.bf16.msra.mxu0 0
          %663 = vmatprep.subr.bf16.mxu0 0
          %664 = vmatpush2.bf16.msra.mxu0 0
          %665 = vmatprep.mubr.bf16.mxu0 0
          %666 = vmatmul.mubr.bf16.gmra.mxu0 %v577
          %v667 = vpop.f32.mrf.mxu0
          %v668 = vadd.f32 %v559, %v667
          %v669 = vpop.f32.mrf.mxu0
          %v670 = vpop.f32.mrf.mxu0
          %v671 = vadd.f32 %v559, %v670
          %v672 = vpop.f32.mrf.mxu0
          %673 = vmatprep.mubr.bf16.mxu0 0
          %674 = vmatmul.mubr.bf16.gmra.mxu0 %v578
          %v675 = vpop.f32.mrf.mxu0
          %v676 = vadd.f32 %v559, %v675
          %v677 = vpop.f32.mrf.mxu0
          %v678 = vpop.f32.mrf.mxu0
          %v679 = vadd.f32 %v559, %v678
          %v680 = vpop.f32.mrf.mxu0
          %681 = vmatprep.mubr.bf16.mxu0 0
          %682 = vmatmul.mubr.bf16.gmra.mxu0 %v579
          %v683 = vpop.f32.mrf.mxu0
          %v684 = vadd.f32 %v559, %v683
          %v685 = vpop.f32.mrf.mxu0
          %v686 = vpop.f32.mrf.mxu0
          %v687 = vadd.f32 %v559, %v686
          %v688 = vpop.f32.mrf.mxu0
          %689 = vmatprep.mubr.bf16.mxu0 0
          %690 = vmatmul.mubr.bf16.gmra.mxu0 %v580
          %v691 = vpop.f32.mrf.mxu0
          %v692 = vadd.f32 %v559, %v691
          %v693 = vpop.f32.mrf.mxu0
          %v694 = vpop.f32.mrf.mxu0
          %v695 = vadd.f32 %v559, %v694
          %v696 = vpop.f32.mrf.mxu0
          %697 = vdwg.mxu0
          %v698 = vmax.f32 %v668, 0.0
          %v699 = vmax.f32 %v671, 0.0
          %v700 = vmax.f32 %v676, 0.0
          %v701 = vmax.f32 %v679, 0.0
          %v702 = vmax.f32 %v684, 0.0
          %v703 = vmax.f32 %v687, 0.0
          %v704 = vmax.f32 %v692, 0.0
          %v705 = vmax.f32 %v695, 0.0
          %v706 = vpack.c.bf16 %v699, %v698
          %v707 = vpack.c.bf16 %v701, %v700
          %v708 = vpack.c.bf16 %v703, %v702
          %v709 = vpack.c.bf16 %v705, %v704
          %v711 = vshrl.u32 %v706, 16
          %v713 = vshll.u32 %v706, 16
          %v715 = vrot.slane %v713, 1
          %v716 = vor.u32 %v711, %v715
          %v718 = vshrl.u32 %v708, 16
          %v720 = vshll.u32 %v708, 16
          %v722 = vrot.slane %v720, 1
          %v723 = vor.u32 %v718, %v722
          %v726 = vunpack.c.l.b16 %v706
          %v727 = vunpack.c.l.b16 %v716
          %v728 = vunpack.c.l.b16 %v708
          %v729 = vunpack.c.l.b16 %v723
          %v730 = vld [vmem:[#allocation10] sm:$0xff]
          %v731 = vld [vmem:[#allocation10 + $0x8] sm:$0xff]
          %v732 = vld [vmem:[#allocation10 + $0x10] sm:$0xff]
          %v733 = vld [vmem:[#allocation10 + $0x18] sm:$0xff]
          %v734 = vld [vmem:[#allocation10 + $0x20] sm:$0xff]
          %v735 = vld [vmem:[#allocation10 + $0x28] sm:$0xff]
          %v736 = vld [vmem:[#allocation10 + $0x30] sm:$0xff]
          %v737 = vld [vmem:[#allocation10 + $0x38] sm:$0xff]
          %v738 = vld [vmem:[#allocation10 + $0x40] sm:$0xff]
          %v739 = vld [vmem:[#allocation10 + $0x48] sm:$0xff]
          %v740 = vld [vmem:[#allocation10 + $0x50] sm:$0xff]
          %v741 = vld [vmem:[#allocation10 + $0x58] sm:$0xff]
          %v742 = vld [vmem:[#allocation10 + $0x60] sm:$0xff]
          %v743 = vld [vmem:[#allocation10 + $0x68] sm:$0xff]
          %v744 = vld [vmem:[#allocation10 + $0x70] sm:$0xff]
          %v745 = vld [vmem:[#allocation10 + $0x78] sm:$0xff]
          %v746 = vld [vmem:[#allocation10 + $0x80] sm:$0xff]
          %v747 = vld [vmem:[#allocation10 + $0x88] sm:$0xff]
          %v748 = vld [vmem:[#allocation10 + $0x90] sm:$0xff]
          %v749 = vld [vmem:[#allocation10 + $0x98] sm:$0xff]
          %v750 = vld [vmem:[#allocation10 + $0xa0] sm:$0xff]
          %v751 = vld [vmem:[#allocation10 + $0xa8] sm:$0xff]
          %v752 = vld [vmem:[#allocation10 + $0xb0] sm:$0xff]
          %v753 = vld [vmem:[#allocation10 + $0xb8] sm:$0xff]
          %v754 = vld [vmem:[#allocation10 + $0xc0] sm:$0xff]
          %v755 = vld [vmem:[#allocation10 + $0xc8] sm:$0xff]
          %v756 = vld [vmem:[#allocation10 + $0xd0] sm:$0xff]
          %v757 = vld [vmem:[#allocation10 + $0xd8] sm:$0xff]
          %v758 = vld [vmem:[#allocation10 + $0xe0] sm:$0xff]
          %v759 = vld [vmem:[#allocation10 + $0xe8] sm:$0xff]
          %v760 = vld [vmem:[#allocation10 + $0xf0] sm:$0xff]
          %v761 = vld [vmem:[#allocation10 + $0xf8] sm:$0xff]
          %v762 = vunpack.c.h.b16 %v706
          %v763 = vunpack.c.h.b16 %v716
          %v764 = vunpack.c.h.b16 %v708
          %v765 = vunpack.c.h.b16 %v723
          %v766 = vpack.c.b16 %v727, %v726
          %v767 = vpack.c.b16 %v763, %v762
          %v768 = vpack.c.b16 %v729, %v728
          %v769 = vpack.c.b16 %v765, %v764
          %vm770 = vcmask 1042432
          %vm771 = vcmask 1046532
          %vm772 = vmor %vm770, %vm771
          %v773 = vrot.slane %v766, 5
          %v774 = vrot.slane %v773, 4
          %v775 = vrot.slane %v767, 5
          %v776 = vsel %vm772, %v774, %v775
          %v777 = vrot.slane %v768, 5
          %v778 = vrot.slane %v777, 4
          %v779 = vrot.slane %v769, 5
          %v780 = vsel %vm772, %v778, %v779
          %s781 = scalar_lea.vmem [#allocation10], 256
          %v782 = vld [vmem:[%s781] sm:$0xff]
          %v783 = vld [vmem:[%s781 + $0x8] sm:$0xff]
          %v784 = vld [vmem:[%s781 + $0x10] sm:$0xff]
          %v785 = vld [vmem:[%s781 + $0x18] sm:$0xff]
          %v786 = vld [vmem:[%s781 + $0x20] sm:$0xff]
          %v787 = vld [vmem:[%s781 + $0x28] sm:$0xff]
          %v788 = vld [vmem:[%s781 + $0x30] sm:$0xff]
          %v789 = vld [vmem:[%s781 + $0x38] sm:$0xff]
          %v790 = vld [vmem:[%s781 + $0x40] sm:$0xff]
          %v791 = vld [vmem:[%s781 + $0x48] sm:$0xff]
          %v792 = vld [vmem:[%s781 + $0x50] sm:$0xff]
          %v793 = vld [vmem:[%s781 + $0x58] sm:$0xff]
          %v794 = vld [vmem:[%s781 + $0x60] sm:$0xff]
          %v795 = vld [vmem:[%s781 + $0x68] sm:$0xff]
          %v796 = vld [vmem:[%s781 + $0x70] sm:$0xff]
          %v797 = vld [vmem:[%s781 + $0x78] sm:$0xff]
          %v798 = vld [vmem:[%s781 + $0x80] sm:$0xff]
          %v799 = vld [vmem:[%s781 + $0x88] sm:$0xff]
          %v800 = vld [vmem:[%s781 + $0x90] sm:$0xff]
          %v801 = vld [vmem:[%s781 + $0x98] sm:$0xff]
          %v802 = vld [vmem:[%s781 + $0xa0] sm:$0xff]
          %v803 = vld [vmem:[%s781 + $0xa8] sm:$0xff]
          %v804 = vld [vmem:[%s781 + $0xb0] sm:$0xff]
          %v805 = vld [vmem:[%s781 + $0xb8] sm:$0xff]
          %v806 = vld [vmem:[%s781 + $0xc0] sm:$0xff]
          %v807 = vld [vmem:[%s781 + $0xc8] sm:$0xff]
          %v808 = vld [vmem:[%s781 + $0xd0] sm:$0xff]
          %v809 = vld [vmem:[%s781 + $0xd8] sm:$0xff]
          %v810 = vld [vmem:[%s781 + $0xe0] sm:$0xff]
          %v811 = vld [vmem:[%s781 + $0xe8] sm:$0xff]
          %v812 = vld [vmem:[%s781 + $0xf0] sm:$0xff]
          %v813 = vld [vmem:[%s781 + $0xf8] sm:$0xff]
          %v814 = vunpack.c.l.b16 %v776
          %v815 = vunpack.c.h.b16 %v776
          %v816 = vunpack.c.l.b16 %v780
          %v817 = vunpack.c.h.b16 %v780
          %v818 = vpack.c.b16 %v816, %v814
          %v819 = vpack.c.b16 %v817, %v815
          %v854 = vunpack.c.l.b16 %v782
          %v855 = vunpack.c.h.b16 %v782
          %v856 = vunpack.c.l.b16 %v783
          %v857 = vunpack.c.h.b16 %v783
          %v858 = vunpack.c.l.b16 %v784
          %v859 = vunpack.c.h.b16 %v784
          %v860 = vunpack.c.l.b16 %v785
          %v861 = vunpack.c.h.b16 %v785
          %v862 = vunpack.c.l.b16 %v786
          %v863 = vunpack.c.h.b16 %v786
          %v864 = vunpack.c.l.b16 %v787
          %v865 = vunpack.c.h.b16 %v787
          %v866 = vunpack.c.l.b16 %v788
          %v867 = vunpack.c.h.b16 %v788
          %v868 = vunpack.c.l.b16 %v789
          %v869 = vunpack.c.h.b16 %v789
          %v870 = vunpack.c.l.b16 %v790
          %v871 = vunpack.c.h.b16 %v790
          %v872 = vunpack.c.l.b16 %v791
          %v873 = vunpack.c.h.b16 %v791
          %v874 = vunpack.c.l.b16 %v792
          %v875 = vunpack.c.h.b16 %v792
          %v876 = vunpack.c.l.b16 %v793
          %v877 = vunpack.c.h.b16 %v793
          %v878 = vunpack.c.l.b16 %v794
          %v879 = vunpack.c.h.b16 %v794
          %v880 = vunpack.c.l.b16 %v795
          %v881 = vunpack.c.h.b16 %v795
          %v882 = vunpack.c.l.b16 %v796
          %v883 = vunpack.c.h.b16 %v796
          %v884 = vunpack.c.l.b16 %v797
          %v885 = vunpack.c.h.b16 %v797
          %v886 = vunpack.c.l.b16 %v798
          %v887 = vunpack.c.h.b16 %v798
          %v888 = vunpack.c.l.b16 %v799
          %v889 = vunpack.c.h.b16 %v799
          %v890 = vunpack.c.l.b16 %v800
          %v891 = vunpack.c.h.b16 %v800
          %v892 = vunpack.c.l.b16 %v801
          %v893 = vunpack.c.h.b16 %v801
          %v894 = vunpack.c.l.b16 %v802
          %v895 = vunpack.c.h.b16 %v802
          %v896 = vunpack.c.l.b16 %v803
          %v897 = vunpack.c.h.b16 %v803
          %v898 = vunpack.c.l.b16 %v804
          %v899 = vunpack.c.h.b16 %v804
          %v900 = vunpack.c.l.b16 %v805
          %v901 = vunpack.c.h.b16 %v805
          %v902 = vunpack.c.l.b16 %v806
          %v903 = vunpack.c.h.b16 %v806
          %v904 = vunpack.c.l.b16 %v807
          %v905 = vunpack.c.h.b16 %v807
          %v906 = vunpack.c.l.b16 %v808
          %v907 = vunpack.c.h.b16 %v808
          %v908 = vunpack.c.l.b16 %v809
          %v909 = vunpack.c.h.b16 %v809
          %v910 = vunpack.c.l.b16 %v810
          %v911 = vunpack.c.h.b16 %v810
          %v912 = vunpack.c.l.b16 %v811
          %v913 = vunpack.c.h.b16 %v811
          %v914 = vunpack.c.l.b16 %v812
          %v915 = vunpack.c.h.b16 %v812
          %v916 = vunpack.c.l.b16 %v813
          %v917 = vunpack.c.h.b16 %v813
          %v918 = vpack.c.b16 %v856, %v854
          %v919 = vpack.c.b16 %v857, %v855
          %v920 = vpack.c.b16 %v860, %v858
          %v921 = vpack.c.b16 %v861, %v859
          %v922 = vpack.c.b16 %v864, %v862
          %v923 = vpack.c.b16 %v865, %v863
          %v924 = vpack.c.b16 %v868, %v866
          %v925 = vpack.c.b16 %v869, %v867
          %v926 = vpack.c.b16 %v872, %v870
          %v927 = vpack.c.b16 %v873, %v871
          %v928 = vpack.c.b16 %v876, %v874
          %v929 = vpack.c.b16 %v877, %v875
          %v930 = vpack.c.b16 %v880, %v878
          %v931 = vpack.c.b16 %v881, %v879
          %v932 = vpack.c.b16 %v884, %v882
          %v933 = vpack.c.b16 %v885, %v883
          %v934 = vpack.c.b16 %v888, %v886
          %v935 = vpack.c.b16 %v889, %v887
          %v936 = vpack.c.b16 %v892, %v890
          %v937 = vpack.c.b16 %v893, %v891
          %v938 = vpack.c.b16 %v896, %v894
          %v939 = vpack.c.b16 %v897, %v895
          %v940 = vpack.c.b16 %v900, %v898
          %v941 = vpack.c.b16 %v901, %v899
          %v942 = vpack.c.b16 %v904, %v902
          %v943 = vpack.c.b16 %v905, %v903
          %v944 = vpack.c.b16 %v908, %v906
          %v945 = vpack.c.b16 %v909, %v907
          %v946 = vpack.c.b16 %v912, %v910
          %v947 = vpack.c.b16 %v913, %v911
          %v948 = vpack.c.b16 %v916, %v914
          %v949 = vpack.c.b16 %v917, %v915
          %982 = vmatprep.subr.bf16.mxu0 %v933
          %983 = vmatpush1.bf16.msra.mxu0 %v932
          %984 = vmatprep.subr.bf16.mxu0 %v931
          %985 = vmatpush1.bf16.msra.mxu0 %v930
          %986 = vmatprep.subr.bf16.mxu0 %v929
          %987 = vmatpush1.bf16.msra.mxu0 %v928
          %988 = vmatprep.subr.bf16.mxu0 %v927
          %989 = vmatpush1.bf16.msra.mxu0 %v926
          %990 = vmatprep.subr.bf16.mxu0 %v925
          %991 = vmatpush1.bf16.msra.mxu0 %v924
          %992 = vmatprep.subr.bf16.mxu0 %v923
          %993 = vmatpush1.bf16.msra.mxu0 %v922
          %994 = vmatprep.subr.bf16.mxu0 %v921
          %995 = vmatpush1.bf16.msra.mxu0 %v920
          %996 = vmatprep.subr.bf16.mxu0 %v919
          %997 = vmatpush1.bf16.msra.mxu0 %v918
          %998 = vmatprep.subr.bf16.mxu0 %v949
          %999 = vmatpush2.bf16.msra.mxu0 %v948
          %1000 = vmatprep.subr.bf16.mxu0 %v947
          %1001 = vmatpush2.bf16.msra.mxu0 %v946
          %1002 = vmatprep.subr.bf16.mxu0 %v945
          %1003 = vmatpush2.bf16.msra.mxu0 %v944
          %1004 = vmatprep.subr.bf16.mxu0 %v943
          %1005 = vmatpush2.bf16.msra.mxu0 %v942
          %1006 = vmatprep.subr.bf16.mxu0 %v941
          %1007 = vmatpush2.bf16.msra.mxu0 %v940
          %1008 = vmatprep.subr.bf16.mxu0 %v939
          %1009 = vmatpush2.bf16.msra.mxu0 %v938
          %1010 = vmatprep.subr.bf16.mxu0 %v937
          %1011 = vmatpush2.bf16.msra.mxu0 %v936
          %1012 = vmatprep.subr.bf16.mxu0 %v935
          %1013 = vmatpush2.bf16.msra.mxu0 %v934
          %1014 = vmatprep.mubr.bf16.mxu0 %v819
          %1015 = vmatmul.mubr.bf16.gmra.mxu0 %v818
          %v1016 = vpop.f32.mrf.mxu0
          %v1017 = vadd.f32 0.0, %v1016
          %v1018 = vpop.f32.mrf.mxu0
          %v1019 = vadd.f32 0.0, %v1018
          %v1020 = vpop.f32.mrf.mxu0
          %v1021 = vadd.f32 0.0, %v1020
          %v1022 = vpop.f32.mrf.mxu0
          %v1023 = vadd.f32 0.0, %v1022
          %1024 = vdwg.mxu0
          %v1025 = vpack.c.b16 %v728, %v726
          %v1026 = vpack.c.b16 %v729, %v727
          %v1061 = vunpack.c.l.b16 %v730
          %v1062 = vunpack.c.h.b16 %v730
          %v1063 = vunpack.c.l.b16 %v731
          %v1064 = vunpack.c.h.b16 %v731
          %v1065 = vunpack.c.l.b16 %v732
          %v1066 = vunpack.c.h.b16 %v732
          %v1067 = vunpack.c.l.b16 %v733
          %v1068 = vunpack.c.h.b16 %v733
          %v1069 = vunpack.c.l.b16 %v734
          %v1070 = vunpack.c.h.b16 %v734
          %v1071 = vunpack.c.l.b16 %v735
          %v1072 = vunpack.c.h.b16 %v735
          %v1073 = vunpack.c.l.b16 %v736
          %v1074 = vunpack.c.h.b16 %v736
          %v1075 = vunpack.c.l.b16 %v737
          %v1076 = vunpack.c.h.b16 %v737
          %v1077 = vunpack.c.l.b16 %v738
          %v1078 = vunpack.c.h.b16 %v738
          %v1079 = vunpack.c.l.b16 %v739
          %v1080 = vunpack.c.h.b16 %v739
          %v1081 = vunpack.c.l.b16 %v740
          %v1082 = vunpack.c.h.b16 %v740
          %v1083 = vunpack.c.l.b16 %v741
          %v1084 = vunpack.c.h.b16 %v741
          %v1085 = vunpack.c.l.b16 %v742
          %v1086 = vunpack.c.h.b16 %v742
          %v1087 = vunpack.c.l.b16 %v743
          %v1088 = vunpack.c.h.b16 %v743
          %v1089 = vunpack.c.l.b16 %v744
          %v1090 = vunpack.c.h.b16 %v744
          %v1091 = vunpack.c.l.b16 %v745
          %v1092 = vunpack.c.h.b16 %v745
          %v1093 = vunpack.c.l.b16 %v746
          %v1094 = vunpack.c.h.b16 %v746
          %v1095 = vunpack.c.l.b16 %v747
          %v1096 = vunpack.c.h.b16 %v747
          %v1097 = vunpack.c.l.b16 %v748
          %v1098 = vunpack.c.h.b16 %v748
          %v1099 = vunpack.c.l.b16 %v749
          %v1100 = vunpack.c.h.b16 %v749
          %v1101 = vunpack.c.l.b16 %v750
          %v1102 = vunpack.c.h.b16 %v750
          %v1103 = vunpack.c.l.b16 %v751
          %v1104 = vunpack.c.h.b16 %v751
          %v1105 = vunpack.c.l.b16 %v752
          %v1106 = vunpack.c.h.b16 %v752
          %v1107 = vunpack.c.l.b16 %v753
          %v1108 = vunpack.c.h.b16 %v753
          %v1109 = vunpack.c.l.b16 %v754
          %v1110 = vunpack.c.h.b16 %v754
          %v1111 = vunpack.c.l.b16 %v755
          %v1112 = vunpack.c.h.b16 %v755
          %v1113 = vunpack.c.l.b16 %v756
          %v1114 = vunpack.c.h.b16 %v756
          %v1115 = vunpack.c.l.b16 %v757
          %v1116 = vunpack.c.h.b16 %v757
          %v1117 = vunpack.c.l.b16 %v758
          %v1118 = vunpack.c.h.b16 %v758
          %v1119 = vunpack.c.l.b16 %v759
          %v1120 = vunpack.c.h.b16 %v759
          %v1121 = vunpack.c.l.b16 %v760
          %v1122 = vunpack.c.h.b16 %v760
          %v1123 = vunpack.c.l.b16 %v761
          %v1124 = vunpack.c.h.b16 %v761
          %v1125 = vpack.c.b16 %v1063, %v1061
          %v1126 = vpack.c.b16 %v1064, %v1062
          %v1127 = vpack.c.b16 %v1067, %v1065
          %v1128 = vpack.c.b16 %v1068, %v1066
          %v1129 = vpack.c.b16 %v1071, %v1069
          %v1130 = vpack.c.b16 %v1072, %v1070
          %v1131 = vpack.c.b16 %v1075, %v1073
          %v1132 = vpack.c.b16 %v1076, %v1074
          %v1133 = vpack.c.b16 %v1079, %v1077
          %v1134 = vpack.c.b16 %v1080, %v1078
          %v1135 = vpack.c.b16 %v1083, %v1081
          %v1136 = vpack.c.b16 %v1084, %v1082
          %v1137 = vpack.c.b16 %v1087, %v1085
          %v1138 = vpack.c.b16 %v1088, %v1086
          %v1139 = vpack.c.b16 %v1091, %v1089
          %v1140 = vpack.c.b16 %v1092, %v1090
          %v1141 = vpack.c.b16 %v1095, %v1093
          %v1142 = vpack.c.b16 %v1096, %v1094
          %v1143 = vpack.c.b16 %v1099, %v1097
          %v1144 = vpack.c.b16 %v1100, %v1098
          %v1145 = vpack.c.b16 %v1103, %v1101
          %v1146 = vpack.c.b16 %v1104, %v1102
          %v1147 = vpack.c.b16 %v1107, %v1105
          %v1148 = vpack.c.b16 %v1108, %v1106
          %v1149 = vpack.c.b16 %v1111, %v1109
          %v1150 = vpack.c.b16 %v1112, %v1110
          %v1151 = vpack.c.b16 %v1115, %v1113
          %v1152 = vpack.c.b16 %v1116, %v1114
          %v1153 = vpack.c.b16 %v1119, %v1117
          %v1154 = vpack.c.b16 %v1120, %v1118
          %v1155 = vpack.c.b16 %v1123, %v1121
          %v1156 = vpack.c.b16 %v1124, %v1122
          %1189 = vmatprep.subr.bf16.mxu0 %v1140
          %1190 = vmatpush1.bf16.msra.mxu0 %v1139
          %1191 = vmatprep.subr.bf16.mxu0 %v1138
          %1192 = vmatpush1.bf16.msra.mxu0 %v1137
          %1193 = vmatprep.subr.bf16.mxu0 %v1136
          %1194 = vmatpush1.bf16.msra.mxu0 %v1135
          %1195 = vmatprep.subr.bf16.mxu0 %v1134
          %1196 = vmatpush1.bf16.msra.mxu0 %v1133
          %1197 = vmatprep.subr.bf16.mxu0 %v1132
          %1198 = vmatpush1.bf16.msra.mxu0 %v1131
          %1199 = vmatprep.subr.bf16.mxu0 %v1130
          %1200 = vmatpush1.bf16.msra.mxu0 %v1129
          %1201 = vmatprep.subr.bf16.mxu0 %v1128
          %1202 = vmatpush1.bf16.msra.mxu0 %v1127
          %1203 = vmatprep.subr.bf16.mxu0 %v1126
          %1204 = vmatpush1.bf16.msra.mxu0 %v1125
          %1205 = vmatprep.subr.bf16.mxu0 %v1156
          %1206 = vmatpush2.bf16.msra.mxu0 %v1155
          %1207 = vmatprep.subr.bf16.mxu0 %v1154
          %1208 = vmatpush2.bf16.msra.mxu0 %v1153
          %1209 = vmatprep.subr.bf16.mxu0 %v1152
          %1210 = vmatpush2.bf16.msra.mxu0 %v1151
          %1211 = vmatprep.subr.bf16.mxu0 %v1150
          %1212 = vmatpush2.bf16.msra.mxu0 %v1149
          %1213 = vmatprep.subr.bf16.mxu0 %v1148
          %1214 = vmatpush2.bf16.msra.mxu0 %v1147
          %1215 = vmatprep.subr.bf16.mxu0 %v1146
          %1216 = vmatpush2.bf16.msra.mxu0 %v1145
          %1217 = vmatprep.subr.bf16.mxu0 %v1144
          %1218 = vmatpush2.bf16.msra.mxu0 %v1143
          %1219 = vmatprep.subr.bf16.mxu0 %v1142
          %1220 = vmatpush2.bf16.msra.mxu0 %v1141
          %1221 = vmatprep.mubr.bf16.mxu0 %v1026
          %1222 = vmatmul.mubr.bf16.gmra.mxu0 %v1025
          %v1223 = vpop.f32.mrf.mxu0
          %v1224 = vadd.f32 %v1017, %v1223
          %v1225 = vpop.f32.mrf.mxu0
          %v1226 = vadd.f32 %v1019, %v1225
          %v1227 = vpop.f32.mrf.mxu0
          %v1228 = vadd.f32 %v1021, %v1227
          %v1229 = vpop.f32.mrf.mxu0
          %v1230 = vadd.f32 %v1023, %v1229
          %1231 = vdwg.mxu0
          %vm1232 = vcmask 1041408
          %vm1233 = vcmask 1045508
          %vm1234 = vmor %vm1232, %vm1233
          %v1235 = vrot.slane %v766, 6
          %v1236 = vrot.slane %v1235, 4
          %v1237 = vrot.slane %v767, 6
          %v1238 = vsel %vm1234, %v1236, %v1237
          %v1239 = vrot.slane %v768, 6
          %v1240 = vrot.slane %v1239, 4
          %v1241 = vrot.slane %v769, 6
          %v1242 = vsel %vm1234, %v1240, %v1241
          %s1243 = scalar_lea.vmem [#allocation10], 512
          %v1244 = vld [vmem:[%s1243] sm:$0xff]
          %v1245 = vld [vmem:[%s1243 + $0x8] sm:$0xff]
          %v1246 = vld [vmem:[%s1243 + $0x10] sm:$0xff]
          %v1247 = vld [vmem:[%s1243 + $0x18] sm:$0xff]
          %v1248 = vld [vmem:[%s1243 + $0x20] sm:$0xff]
          %v1249 = vld [vmem:[%s1243 + $0x28] sm:$0xff]
          %v1250 = vld [vmem:[%s1243 + $0x30] sm:$0xff]
          %v1251 = vld [vmem:[%s1243 + $0x38] sm:$0xff]
          %v1252 = vld [vmem:[%s1243 + $0x40] sm:$0xff]
          %v1253 = vld [vmem:[%s1243 + $0x48] sm:$0xff]
          %v1254 = vld [vmem:[%s1243 + $0x50] sm:$0xff]
          %v1255 = vld [vmem:[%s1243 + $0x58] sm:$0xff]
          %v1256 = vld [vmem:[%s1243 + $0x60] sm:$0xff]
          %v1257 = vld [vmem:[%s1243 + $0x68] sm:$0xff]
          %v1258 = vld [vmem:[%s1243 + $0x70] sm:$0xff]
          %v1259 = vld [vmem:[%s1243 + $0x78] sm:$0xff]
          %v1260 = vld [vmem:[%s1243 + $0x80] sm:$0xff]
          %v1261 = vld [vmem:[%s1243 + $0x88] sm:$0xff]
          %v1262 = vld [vmem:[%s1243 + $0x90] sm:$0xff]
          %v1263 = vld [vmem:[%s1243 + $0x98] sm:$0xff]
          %v1264 = vld [vmem:[%s1243 + $0xa0] sm:$0xff]
          %v1265 = vld [vmem:[%s1243 + $0xa8] sm:$0xff]
          %v1266 = vld [vmem:[%s1243 + $0xb0] sm:$0xff]
          %v1267 = vld [vmem:[%s1243 + $0xb8] sm:$0xff]
          %v1268 = vld [vmem:[%s1243 + $0xc0] sm:$0xff]
          %v1269 = vld [vmem:[%s1243 + $0xc8] sm:$0xff]
          %v1270 = vld [vmem:[%s1243 + $0xd0] sm:$0xff]
          %v1271 = vld [vmem:[%s1243 + $0xd8] sm:$0xff]
          %v1272 = vld [vmem:[%s1243 + $0xe0] sm:$0xff]
          %v1273 = vld [vmem:[%s1243 + $0xe8] sm:$0xff]
          %v1274 = vld [vmem:[%s1243 + $0xf0] sm:$0xff]
          %v1275 = vld [vmem:[%s1243 + $0xf8] sm:$0xff]
          %v1276 = vunpack.c.l.b16 %v1238
          %v1277 = vunpack.c.h.b16 %v1238
          %v1278 = vunpack.c.l.b16 %v1242
          %v1279 = vunpack.c.h.b16 %v1242
          %v1280 = vpack.c.b16 %v1278, %v1276
          %v1281 = vpack.c.b16 %v1279, %v1277
          %v1316 = vunpack.c.l.b16 %v1244
          %v1317 = vunpack.c.h.b16 %v1244
          %v1318 = vunpack.c.l.b16 %v1245
          %v1319 = vunpack.c.h.b16 %v1245
          %v1320 = vunpack.c.l.b16 %v1246
          %v1321 = vunpack.c.h.b16 %v1246
          %v1322 = vunpack.c.l.b16 %v1247
          %v1323 = vunpack.c.h.b16 %v1247
          %v1324 = vunpack.c.l.b16 %v1248
          %v1325 = vunpack.c.h.b16 %v1248
          %v1326 = vunpack.c.l.b16 %v1249
          %v1327 = vunpack.c.h.b16 %v1249
          %v1328 = vunpack.c.l.b16 %v1250
          %v1329 = vunpack.c.h.b16 %v1250
          %v1330 = vunpack.c.l.b16 %v1251
          %v1331 = vunpack.c.h.b16 %v1251
          %v1332 = vunpack.c.l.b16 %v1252
          %v1333 = vunpack.c.h.b16 %v1252
          %v1334 = vunpack.c.l.b16 %v1253
          %v1335 = vunpack.c.h.b16 %v1253
          %v1336 = vunpack.c.l.b16 %v1254
          %v1337 = vunpack.c.h.b16 %v1254
          %v1338 = vunpack.c.l.b16 %v1255
          %v1339 = vunpack.c.h.b16 %v1255
          %v1340 = vunpack.c.l.b16 %v1256
          %v1341 = vunpack.c.h.b16 %v1256
          %v1342 = vunpack.c.l.b16 %v1257
          %v1343 = vunpack.c.h.b16 %v1257
          %v1344 = vunpack.c.l.b16 %v1258
          %v1345 = vunpack.c.h.b16 %v1258
          %v1346 = vunpack.c.l.b16 %v1259
          %v1347 = vunpack.c.h.b16 %v1259
          %v1348 = vunpack.c.l.b16 %v1260
          %v1349 = vunpack.c.h.b16 %v1260
          %v1350 = vunpack.c.l.b16 %v1261
          %v1351 = vunpack.c.h.b16 %v1261
          %v1352 = vunpack.c.l.b16 %v1262
          %v1353 = vunpack.c.h.b16 %v1262
          %v1354 = vunpack.c.l.b16 %v1263
          %v1355 = vunpack.c.h.b16 %v1263
          %v1356 = vunpack.c.l.b16 %v1264
          %v1357 = vunpack.c.h.b16 %v1264
          %v1358 = vunpack.c.l.b16 %v1265
          %v1359 = vunpack.c.h.b16 %v1265
          %v1360 = vunpack.c.l.b16 %v1266
          %v1361 = vunpack.c.h.b16 %v1266
          %v1362 = vunpack.c.l.b16 %v1267
          %v1363 = vunpack.c.h.b16 %v1267
          %v1364 = vunpack.c.l.b16 %v1268
          %v1365 = vunpack.c.h.b16 %v1268
          %v1366 = vunpack.c.l.b16 %v1269
          %v1367 = vunpack.c.h.b16 %v1269
          %v1368 = vunpack.c.l.b16 %v1270
          %v1369 = vunpack.c.h.b16 %v1270
          %v1370 = vunpack.c.l.b16 %v1271
          %v1371 = vunpack.c.h.b16 %v1271
          %v1372 = vunpack.c.l.b16 %v1272
          %v1373 = vunpack.c.h.b16 %v1272
          %v1374 = vunpack.c.l.b16 %v1273
          %v1375 = vunpack.c.h.b16 %v1273
          %v1376 = vunpack.c.l.b16 %v1274
          %v1377 = vunpack.c.h.b16 %v1274
          %v1378 = vunpack.c.l.b16 %v1275
          %v1379 = vunpack.c.h.b16 %v1275
          %v1380 = vpack.c.b16 %v1318, %v1316
          %v1381 = vpack.c.b16 %v1319, %v1317
          %v1382 = vpack.c.b16 %v1322, %v1320
          %v1383 = vpack.c.b16 %v1323, %v1321
          %v1384 = vpack.c.b16 %v1326, %v1324
          %v1385 = vpack.c.b16 %v1327, %v1325
          %v1386 = vpack.c.b16 %v1330, %v1328
          %v1387 = vpack.c.b16 %v1331, %v1329
          %v1388 = vpack.c.b16 %v1334, %v1332
          %v1389 = vpack.c.b16 %v1335, %v1333
          %v1390 = vpack.c.b16 %v1338, %v1336
          %v1391 = vpack.c.b16 %v1339, %v1337
          %v1392 = vpack.c.b16 %v1342, %v1340
          %v1393 = vpack.c.b16 %v1343, %v1341
          %v1394 = vpack.c.b16 %v1346, %v1344
          %v1395 = vpack.c.b16 %v1347, %v1345
          %v1396 = vpack.c.b16 %v1350, %v1348
          %v1397 = vpack.c.b16 %v1351, %v1349
          %v1398 = vpack.c.b16 %v1354, %v1352
          %v1399 = vpack.c.b16 %v1355, %v1353
          %v1400 = vpack.c.b16 %v1358, %v1356
          %v1401 = vpack.c.b16 %v1359, %v1357
          %v1402 = vpack.c.b16 %v1362, %v1360
          %v1403 = vpack.c.b16 %v1363, %v1361
          %v1404 = vpack.c.b16 %v1366, %v1364
          %v1405 = vpack.c.b16 %v1367, %v1365
          %v1406 = vpack.c.b16 %v1370, %v1368
          %v1407 = vpack.c.b16 %v1371, %v1369
          %v1408 = vpack.c.b16 %v1374, %v1372
          %v1409 = vpack.c.b16 %v1375, %v1373
          %v1410 = vpack.c.b16 %v1378, %v1376
          %v1411 = vpack.c.b16 %v1379, %v1377
          %1444 = vmatprep.subr.bf16.mxu0 %v1395
          %1445 = vmatpush1.bf16.msra.mxu0 %v1394
          %1446 = vmatprep.subr.bf16.mxu0 %v1393
          %1447 = vmatpush1.bf16.msra.mxu0 %v1392
          %1448 = vmatprep.subr.bf16.mxu0 %v1391
          %1449 = vmatpush1.bf16.msra.mxu0 %v1390
          %1450 = vmatprep.subr.bf16.mxu0 %v1389
          %1451 = vmatpush1.bf16.msra.mxu0 %v1388
          %1452 = vmatprep.subr.bf16.mxu0 %v1387
          %1453 = vmatpush1.bf16.msra.mxu0 %v1386
          %1454 = vmatprep.subr.bf16.mxu0 %v1385
          %1455 = vmatpush1.bf16.msra.mxu0 %v1384
          %1456 = vmatprep.subr.bf16.mxu0 %v1383
          %1457 = vmatpush1.bf16.msra.mxu0 %v1382
          %1458 = vmatprep.subr.bf16.mxu0 %v1381
          %1459 = vmatpush1.bf16.msra.mxu0 %v1380
          %1460 = vmatprep.subr.bf16.mxu0 %v1411
          %1461 = vmatpush2.bf16.msra.mxu0 %v1410
          %1462 = vmatprep.subr.bf16.mxu0 %v1409
          %1463 = vmatpush2.bf16.msra.mxu0 %v1408
          %1464 = vmatprep.subr.bf16.mxu0 %v1407
          %1465 = vmatpush2.bf16.msra.mxu0 %v1406
          %1466 = vmatprep.subr.bf16.mxu0 %v1405
          %1467 = vmatpush2.bf16.msra.mxu0 %v1404
          %1468 = vmatprep.subr.bf16.mxu0 %v1403
          %1469 = vmatpush2.bf16.msra.mxu0 %v1402
          %1470 = vmatprep.subr.bf16.mxu0 %v1401
          %1471 = vmatpush2.bf16.msra.mxu0 %v1400
          %1472 = vmatprep.subr.bf16.mxu0 %v1399
          %1473 = vmatpush2.bf16.msra.mxu0 %v1398
          %1474 = vmatprep.subr.bf16.mxu0 %v1397
          %1475 = vmatpush2.bf16.msra.mxu0 %v1396
          %1476 = vmatprep.mubr.bf16.mxu0 %v1281
          %1477 = vmatmul.mubr.bf16.gmra.mxu0 %v1280
          %v1478 = vpop.f32.mrf.mxu0
          %v1479 = vadd.f32 0.0, %v1478
          %v1480 = vpop.f32.mrf.mxu0
          %v1481 = vadd.f32 0.0, %v1480
          %v1482 = vpop.f32.mrf.mxu0
          %v1483 = vadd.f32 0.0, %v1482
          %v1484 = vpop.f32.mrf.mxu0
          %v1485 = vadd.f32 0.0, %v1484
          %1486 = vdwg.mxu0
          %v1487 = vadd.f32 %v1224, %v1479
          %v1488 = vadd.f32 %v1226, %v1481
          %v1489 = vadd.f32 %v1228, %v1483
          %v1490 = vadd.f32 %v1230, %v1485
          %vm1491 = vcmask 1040384
          %vm1492 = vcmask 1044484
          %vm1493 = vmor %vm1491, %vm1492
          %v1494 = vrot.slane %v766, 7
          %v1495 = vrot.slane %v1494, 4
          %v1496 = vrot.slane %v767, 7
          %v1497 = vsel %vm1493, %v1495, %v1496
          %v1498 = vrot.slane %v768, 7
          %v1499 = vrot.slane %v1498, 4
          %v1500 = vrot.slane %v769, 7
          %v1501 = vsel %vm1493, %v1499, %v1500
          %s1502 = scalar_lea.vmem [#allocation10], 768
          %v1503 = vld [vmem:[%s1502] sm:$0xff]
          %v1504 = vld [vmem:[%s1502 + $0x8] sm:$0xff]
          %v1505 = vld [vmem:[%s1502 + $0x10] sm:$0xff]
          %v1506 = vld [vmem:[%s1502 + $0x18] sm:$0xff]
          %v1507 = vld [vmem:[%s1502 + $0x20] sm:$0xff]
          %v1508 = vld [vmem:[%s1502 + $0x28] sm:$0xff]
          %v1509 = vld [vmem:[%s1502 + $0x30] sm:$0xff]
          %v1510 = vld [vmem:[%s1502 + $0x38] sm:$0xff]
          %v1511 = vld [vmem:[%s1502 + $0x40] sm:$0xff]
          %v1512 = vld [vmem:[%s1502 + $0x48] sm:$0xff]
          %v1513 = vld [vmem:[%s1502 + $0x50] sm:$0xff]
          %v1514 = vld [vmem:[%s1502 + $0x58] sm:$0xff]
          %v1515 = vld [vmem:[%s1502 + $0x60] sm:$0xff]
          %v1516 = vld [vmem:[%s1502 + $0x68] sm:$0xff]
          %v1517 = vld [vmem:[%s1502 + $0x70] sm:$0xff]
          %v1518 = vld [vmem:[%s1502 + $0x78] sm:$0xff]
          %v1519 = vld [vmem:[%s1502 + $0x80] sm:$0xff]
          %v1520 = vld [vmem:[%s1502 + $0x88] sm:$0xff]
          %v1521 = vld [vmem:[%s1502 + $0x90] sm:$0xff]
          %v1522 = vld [vmem:[%s1502 + $0x98] sm:$0xff]
          %v1523 = vld [vmem:[%s1502 + $0xa0] sm:$0xff]
          %v1524 = vld [vmem:[%s1502 + $0xa8] sm:$0xff]
          %v1525 = vld [vmem:[%s1502 + $0xb0] sm:$0xff]
          %v1526 = vld [vmem:[%s1502 + $0xb8] sm:$0xff]
          %v1527 = vld [vmem:[%s1502 + $0xc0] sm:$0xff]
          %v1528 = vld [vmem:[%s1502 + $0xc8] sm:$0xff]
          %v1529 = vld [vmem:[%s1502 + $0xd0] sm:$0xff]
          %v1530 = vld [vmem:[%s1502 + $0xd8] sm:$0xff]
          %v1531 = vld [vmem:[%s1502 + $0xe0] sm:$0xff]
          %v1532 = vld [vmem:[%s1502 + $0xe8] sm:$0xff]
          %v1533 = vld [vmem:[%s1502 + $0xf0] sm:$0xff]
          %v1534 = vld [vmem:[%s1502 + $0xf8] sm:$0xff]
          %v1535 = vunpack.c.l.b16 %v1497
          %v1536 = vunpack.c.h.b16 %v1497
          %v1537 = vunpack.c.l.b16 %v1501
          %v1538 = vunpack.c.h.b16 %v1501
          %v1539 = vpack.c.b16 %v1537, %v1535
          %v1540 = vpack.c.b16 %v1538, %v1536
          %v1575 = vunpack.c.l.b16 %v1503
          %v1576 = vunpack.c.h.b16 %v1503
          %v1577 = vunpack.c.l.b16 %v1504
          %v1578 = vunpack.c.h.b16 %v1504
          %v1579 = vunpack.c.l.b16 %v1505
          %v1580 = vunpack.c.h.b16 %v1505
          %v1581 = vunpack.c.l.b16 %v1506
          %v1582 = vunpack.c.h.b16 %v1506
          %v1583 = vunpack.c.l.b16 %v1507
          %v1584 = vunpack.c.h.b16 %v1507
          %v1585 = vunpack.c.l.b16 %v1508
          %v1586 = vunpack.c.h.b16 %v1508
          %v1587 = vunpack.c.l.b16 %v1509
          %v1588 = vunpack.c.h.b16 %v1509
          %v1589 = vunpack.c.l.b16 %v1510
          %v1590 = vunpack.c.h.b16 %v1510
          %v1591 = vunpack.c.l.b16 %v1511
          %v1592 = vunpack.c.h.b16 %v1511
          %v1593 = vunpack.c.l.b16 %v1512
          %v1594 = vunpack.c.h.b16 %v1512
          %v1595 = vunpack.c.l.b16 %v1513
          %v1596 = vunpack.c.h.b16 %v1513
          %v1597 = vunpack.c.l.b16 %v1514
          %v1598 = vunpack.c.h.b16 %v1514
          %v1599 = vunpack.c.l.b16 %v1515
          %v1600 = vunpack.c.h.b16 %v1515
          %v1601 = vunpack.c.l.b16 %v1516
          %v1602 = vunpack.c.h.b16 %v1516
          %v1603 = vunpack.c.l.b16 %v1517
          %v1604 = vunpack.c.h.b16 %v1517
          %v1605 = vunpack.c.l.b16 %v1518
          %v1606 = vunpack.c.h.b16 %v1518
          %v1607 = vunpack.c.l.b16 %v1519
          %v1608 = vunpack.c.h.b16 %v1519
          %v1609 = vunpack.c.l.b16 %v1520
          %v1610 = vunpack.c.h.b16 %v1520
          %v1611 = vunpack.c.l.b16 %v1521
          %v1612 = vunpack.c.h.b16 %v1521
          %v1613 = vunpack.c.l.b16 %v1522
          %v1614 = vunpack.c.h.b16 %v1522
          %v1615 = vunpack.c.l.b16 %v1523
          %v1616 = vunpack.c.h.b16 %v1523
          %v1617 = vunpack.c.l.b16 %v1524
          %v1618 = vunpack.c.h.b16 %v1524
          %v1619 = vunpack.c.l.b16 %v1525
          %v1620 = vunpack.c.h.b16 %v1525
          %v1621 = vunpack.c.l.b16 %v1526
          %v1622 = vunpack.c.h.b16 %v1526
          %v1623 = vunpack.c.l.b16 %v1527
          %v1624 = vunpack.c.h.b16 %v1527
          %v1625 = vunpack.c.l.b16 %v1528
          %v1626 = vunpack.c.h.b16 %v1528
          %v1627 = vunpack.c.l.b16 %v1529
          %v1628 = vunpack.c.h.b16 %v1529
          %v1629 = vunpack.c.l.b16 %v1530
          %v1630 = vunpack.c.h.b16 %v1530
          %v1631 = vunpack.c.l.b16 %v1531
          %v1632 = vunpack.c.h.b16 %v1531
          %v1633 = vunpack.c.l.b16 %v1532
          %v1634 = vunpack.c.h.b16 %v1532
          %v1635 = vunpack.c.l.b16 %v1533
          %v1636 = vunpack.c.h.b16 %v1533
          %v1637 = vunpack.c.l.b16 %v1534
          %v1638 = vunpack.c.h.b16 %v1534
          %v1639 = vpack.c.b16 %v1577, %v1575
          %v1640 = vpack.c.b16 %v1578, %v1576
          %v1641 = vpack.c.b16 %v1581, %v1579
          %v1642 = vpack.c.b16 %v1582, %v1580
          %v1643 = vpack.c.b16 %v1585, %v1583
          %v1644 = vpack.c.b16 %v1586, %v1584
          %v1645 = vpack.c.b16 %v1589, %v1587
          %v1646 = vpack.c.b16 %v1590, %v1588
          %v1647 = vpack.c.b16 %v1593, %v1591
          %v1648 = vpack.c.b16 %v1594, %v1592
          %v1649 = vpack.c.b16 %v1597, %v1595
          %v1650 = vpack.c.b16 %v1598, %v1596
          %v1651 = vpack.c.b16 %v1601, %v1599
          %v1652 = vpack.c.b16 %v1602, %v1600
          %v1653 = vpack.c.b16 %v1605, %v1603
          %v1654 = vpack.c.b16 %v1606, %v1604
          %v1655 = vpack.c.b16 %v1609, %v1607
          %v1656 = vpack.c.b16 %v1610, %v1608
          %v1657 = vpack.c.b16 %v1613, %v1611
          %v1658 = vpack.c.b16 %v1614, %v1612
          %v1659 = vpack.c.b16 %v1617, %v1615
          %v1660 = vpack.c.b16 %v1618, %v1616
          %v1661 = vpack.c.b16 %v1621, %v1619
          %v1662 = vpack.c.b16 %v1622, %v1620
          %v1663 = vpack.c.b16 %v1625, %v1623
          %v1664 = vpack.c.b16 %v1626, %v1624
          %v1665 = vpack.c.b16 %v1629, %v1627
          %v1666 = vpack.c.b16 %v1630, %v1628
          %v1667 = vpack.c.b16 %v1633, %v1631
          %v1668 = vpack.c.b16 %v1634, %v1632
          %v1669 = vpack.c.b16 %v1637, %v1635
          %v1670 = vpack.c.b16 %v1638, %v1636
          %1703 = vmatprep.subr.bf16.mxu0 %v1654
          %1704 = vmatpush1.bf16.msra.mxu0 %v1653
          %1705 = vmatprep.subr.bf16.mxu0 %v1652
          %1706 = vmatpush1.bf16.msra.mxu0 %v1651
          %1707 = vmatprep.subr.bf16.mxu0 %v1650
          %1708 = vmatpush1.bf16.msra.mxu0 %v1649
          %1709 = vmatprep.subr.bf16.mxu0 %v1648
          %1710 = vmatpush1.bf16.msra.mxu0 %v1647
          %1711 = vmatprep.subr.bf16.mxu0 %v1646
          %1712 = vmatpush1.bf16.msra.mxu0 %v1645
          %1713 = vmatprep.subr.bf16.mxu0 %v1644
          %1714 = vmatpush1.bf16.msra.mxu0 %v1643
          %1715 = vmatprep.subr.bf16.mxu0 %v1642
          %1716 = vmatpush1.bf16.msra.mxu0 %v1641
          %1717 = vmatprep.subr.bf16.mxu0 %v1640
          %1718 = vmatpush1.bf16.msra.mxu0 %v1639
          %1719 = vmatprep.subr.bf16.mxu0 %v1670
          %1720 = vmatpush2.bf16.msra.mxu0 %v1669
          %1721 = vmatprep.subr.bf16.mxu0 %v1668
          %1722 = vmatpush2.bf16.msra.mxu0 %v1667
          %1723 = vmatprep.subr.bf16.mxu0 %v1666
          %1724 = vmatpush2.bf16.msra.mxu0 %v1665
          %1725 = vmatprep.subr.bf16.mxu0 %v1664
          %1726 = vmatpush2.bf16.msra.mxu0 %v1663
          %1727 = vmatprep.subr.bf16.mxu0 %v1662
          %1728 = vmatpush2.bf16.msra.mxu0 %v1661
          %1729 = vmatprep.subr.bf16.mxu0 %v1660
          %1730 = vmatpush2.bf16.msra.mxu0 %v1659
          %1731 = vmatprep.subr.bf16.mxu0 %v1658
          %1732 = vmatpush2.bf16.msra.mxu0 %v1657
          %1733 = vmatprep.subr.bf16.mxu0 %v1656
          %1734 = vmatpush2.bf16.msra.mxu0 %v1655
          %1735 = vmatprep.mubr.bf16.mxu0 %v1540
          %1736 = vmatmul.mubr.bf16.gmra.mxu0 %v1539
          %v1737 = vpop.f32.mrf.mxu0
          %v1738 = vadd.f32 0.0, %v1737
          %v1739 = vpop.f32.mrf.mxu0
          %v1740 = vadd.f32 0.0, %v1739
          %v1741 = vpop.f32.mrf.mxu0
          %v1742 = vadd.f32 0.0, %v1741
          %v1743 = vpop.f32.mrf.mxu0
          %v1744 = vadd.f32 0.0, %v1743
          %1745 = vdwg.mxu0
          %v1746 = vadd.f32 %v1487, %v1738
          %v1747 = vadd.f32 %v1488, %v1740
          %v1748 = vadd.f32 %v1489, %v1742
          %v1749 = vadd.f32 %v1490, %v1744
          %vm1750 = vsmask.f32 7424
          %v1752 = vshll.u32 %v707, 16
          %v1754 = vrot.slane %v1752, 1
          %v1755 = vsel %vm1750, %v716, %v1754
          %v1757 = vshll.u32 %v709, 16
          %v1759 = vrot.slane %v1757, 1
          %v1760 = vsel %vm1750, %v723, %v1759
          %v1761 = vunpack.c.h.b16 %v1755
          %v1762 = vunpack.c.h.b16 %v1760
          %s1763 = scalar_lea.vmem [#allocation10], 1024
          %v1764 = vld [vmem:[%s1763] sm:$0xff]
          %v1765 = vld [vmem:[%s1763 + $0x8] sm:$0xff]
          %v1766 = vld [vmem:[%s1763 + $0x10] sm:$0xff]
          %v1767 = vld [vmem:[%s1763 + $0x18] sm:$0xff]
          %v1768 = vld [vmem:[%s1763 + $0x20] sm:$0xff]
          %v1769 = vld [vmem:[%s1763 + $0x28] sm:$0xff]
          %v1770 = vld [vmem:[%s1763 + $0x30] sm:$0xff]
          %v1771 = vld [vmem:[%s1763 + $0x38] sm:$0xff]
          %v1772 = vld [vmem:[%s1763 + $0x40] sm:$0xff]
          %v1773 = vld [vmem:[%s1763 + $0x48] sm:$0xff]
          %v1774 = vld [vmem:[%s1763 + $0x50] sm:$0xff]
          %v1775 = vld [vmem:[%s1763 + $0x58] sm:$0xff]
          %v1776 = vld [vmem:[%s1763 + $0x60] sm:$0xff]
          %v1777 = vld [vmem:[%s1763 + $0x68] sm:$0xff]
          %v1778 = vld [vmem:[%s1763 + $0x70] sm:$0xff]
          %v1779 = vld [vmem:[%s1763 + $0x78] sm:$0xff]
          %v1780 = vld [vmem:[%s1763 + $0x80] sm:$0xff]
          %v1781 = vld [vmem:[%s1763 + $0x88] sm:$0xff]
          %v1782 = vld [vmem:[%s1763 + $0x90] sm:$0xff]
          %v1783 = vld [vmem:[%s1763 + $0x98] sm:$0xff]
          %v1784 = vld [vmem:[%s1763 + $0xa0] sm:$0xff]
          %v1785 = vld [vmem:[%s1763 + $0xa8] sm:$0xff]
          %v1786 = vld [vmem:[%s1763 + $0xb0] sm:$0xff]
          %v1787 = vld [vmem:[%s1763 + $0xb8] sm:$0xff]
          %v1788 = vld [vmem:[%s1763 + $0xc0] sm:$0xff]
          %v1789 = vld [vmem:[%s1763 + $0xc8] sm:$0xff]
          %v1790 = vld [vmem:[%s1763 + $0xd0] sm:$0xff]
          %v1791 = vld [vmem:[%s1763 + $0xd8] sm:$0xff]
          %v1792 = vld [vmem:[%s1763 + $0xe0] sm:$0xff]
          %v1793 = vld [vmem:[%s1763 + $0xe8] sm:$0xff]
          %v1794 = vld [vmem:[%s1763 + $0xf0] sm:$0xff]
          %v1795 = vld [vmem:[%s1763 + $0xf8] sm:$0xff]
          %v1796 = vpack.c.b16 %v764, %v762
          %v1797 = vpack.c.b16 %v1762, %v1761
          %v1832 = vunpack.c.l.b16 %v1764
          %v1833 = vunpack.c.h.b16 %v1764
          %v1834 = vunpack.c.l.b16 %v1765
          %v1835 = vunpack.c.h.b16 %v1765
          %v1836 = vunpack.c.l.b16 %v1766
          %v1837 = vunpack.c.h.b16 %v1766
          %v1838 = vunpack.c.l.b16 %v1767
          %v1839 = vunpack.c.h.b16 %v1767
          %v1840 = vunpack.c.l.b16 %v1768
          %v1841 = vunpack.c.h.b16 %v1768
          %v1842 = vunpack.c.l.b16 %v1769
          %v1843 = vunpack.c.h.b16 %v1769
          %v1844 = vunpack.c.l.b16 %v1770
          %v1845 = vunpack.c.h.b16 %v1770
          %v1846 = vunpack.c.l.b16 %v1771
          %v1847 = vunpack.c.h.b16 %v1771
          %v1848 = vunpack.c.l.b16 %v1772
          %v1849 = vunpack.c.h.b16 %v1772
          %v1850 = vunpack.c.l.b16 %v1773
          %v1851 = vunpack.c.h.b16 %v1773
          %v1852 = vunpack.c.l.b16 %v1774
          %v1853 = vunpack.c.h.b16 %v1774
          %v1854 = vunpack.c.l.b16 %v1775
          %v1855 = vunpack.c.h.b16 %v1775
          %v1856 = vunpack.c.l.b16 %v1776
          %v1857 = vunpack.c.h.b16 %v1776
          %v1858 = vunpack.c.l.b16 %v1777
          %v1859 = vunpack.c.h.b16 %v1777
          %v1860 = vunpack.c.l.b16 %v1778
          %v1861 = vunpack.c.h.b16 %v1778
          %v1862 = vunpack.c.l.b16 %v1779
          %v1863 = vunpack.c.h.b16 %v1779
          %v1864 = vunpack.c.l.b16 %v1780
          %v1865 = vunpack.c.h.b16 %v1780
          %v1866 = vunpack.c.l.b16 %v1781
          %v1867 = vunpack.c.h.b16 %v1781
          %v1868 = vunpack.c.l.b16 %v1782
          %v1869 = vunpack.c.h.b16 %v1782
          %v1870 = vunpack.c.l.b16 %v1783
          %v1871 = vunpack.c.h.b16 %v1783
          %v1872 = vunpack.c.l.b16 %v1784
          %v1873 = vunpack.c.h.b16 %v1784
          %v1874 = vunpack.c.l.b16 %v1785
          %v1875 = vunpack.c.h.b16 %v1785
          %v1876 = vunpack.c.l.b16 %v1786
          %v1877 = vunpack.c.h.b16 %v1786
          %v1878 = vunpack.c.l.b16 %v1787
          %v1879 = vunpack.c.h.b16 %v1787
          %v1880 = vunpack.c.l.b16 %v1788
          %v1881 = vunpack.c.h.b16 %v1788
          %v1882 = vunpack.c.l.b16 %v1789
          %v1883 = vunpack.c.h.b16 %v1789
          %v1884 = vunpack.c.l.b16 %v1790
          %v1885 = vunpack.c.h.b16 %v1790
          %v1886 = vunpack.c.l.b16 %v1791
          %v1887 = vunpack.c.h.b16 %v1791
          %v1888 = vunpack.c.l.b16 %v1792
          %v1889 = vunpack.c.h.b16 %v1792
          %v1890 = vunpack.c.l.b16 %v1793
          %v1891 = vunpack.c.h.b16 %v1793
          %v1892 = vunpack.c.l.b16 %v1794
          %v1893 = vunpack.c.h.b16 %v1794
          %v1894 = vunpack.c.l.b16 %v1795
          %v1895 = vunpack.c.h.b16 %v1795
          %v1896 = vpack.c.b16 %v1834, %v1832
          %v1897 = vpack.c.b16 %v1835, %v1833
          %v1898 = vpack.c.b16 %v1838, %v1836
          %v1899 = vpack.c.b16 %v1839, %v1837
          %v1900 = vpack.c.b16 %v1842, %v1840
          %v1901 = vpack.c.b16 %v1843, %v1841
          %v1902 = vpack.c.b16 %v1846, %v1844
          %v1903 = vpack.c.b16 %v1847, %v1845
          %v1904 = vpack.c.b16 %v1850, %v1848
          %v1905 = vpack.c.b16 %v1851, %v1849
          %v1906 = vpack.c.b16 %v1854, %v1852
          %v1907 = vpack.c.b16 %v1855, %v1853
          %v1908 = vpack.c.b16 %v1858, %v1856
          %v1909 = vpack.c.b16 %v1859, %v1857
          %v1910 = vpack.c.b16 %v1862, %v1860
          %v1911 = vpack.c.b16 %v1863, %v1861
          %v1912 = vpack.c.b16 %v1866, %v1864
          %v1913 = vpack.c.b16 %v1867, %v1865
          %v1914 = vpack.c.b16 %v1870, %v1868
          %v1915 = vpack.c.b16 %v1871, %v1869
          %v1916 = vpack.c.b16 %v1874, %v1872
          %v1917 = vpack.c.b16 %v1875, %v1873
          %v1918 = vpack.c.b16 %v1878, %v1876
          %v1919 = vpack.c.b16 %v1879, %v1877
          %v1920 = vpack.c.b16 %v1882, %v1880
          %v1921 = vpack.c.b16 %v1883, %v1881
          %v1922 = vpack.c.b16 %v1886, %v1884
          %v1923 = vpack.c.b16 %v1887, %v1885
          %v1924 = vpack.c.b16 %v1890, %v1888
          %v1925 = vpack.c.b16 %v1891, %v1889
          %v1926 = vpack.c.b16 %v1894, %v1892
          %v1927 = vpack.c.b16 %v1895, %v1893
          %1960 = vmatprep.subr.bf16.mxu0 %v1911
          %1961 = vmatpush1.bf16.msra.mxu0 %v1910
          %1962 = vmatprep.subr.bf16.mxu0 %v1909
          %1963 = vmatpush1.bf16.msra.mxu0 %v1908
          %1964 = vmatprep.subr.bf16.mxu0 %v1907
          %1965 = vmatpush1.bf16.msra.mxu0 %v1906
          %1966 = vmatprep.subr.bf16.mxu0 %v1905
          %1967 = vmatpush1.bf16.msra.mxu0 %v1904
          %1968 = vmatprep.subr.bf16.mxu0 %v1903
          %1969 = vmatpush1.bf16.msra.mxu0 %v1902
          %1970 = vmatprep.subr.bf16.mxu0 %v1901
          %1971 = vmatpush1.bf16.msra.mxu0 %v1900
          %1972 = vmatprep.subr.bf16.mxu0 %v1899
          %1973 = vmatpush1.bf16.msra.mxu0 %v1898
          %1974 = vmatprep.subr.bf16.mxu0 %v1897
          %1975 = vmatpush1.bf16.msra.mxu0 %v1896
          %1976 = vmatprep.subr.bf16.mxu0 %v1927
          %1977 = vmatpush2.bf16.msra.mxu0 %v1926
          %1978 = vmatprep.subr.bf16.mxu0 %v1925
          %1979 = vmatpush2.bf16.msra.mxu0 %v1924
          %1980 = vmatprep.subr.bf16.mxu0 %v1923
          %1981 = vmatpush2.bf16.msra.mxu0 %v1922
          %1982 = vmatprep.subr.bf16.mxu0 %v1921
          %1983 = vmatpush2.bf16.msra.mxu0 %v1920
          %1984 = vmatprep.subr.bf16.mxu0 %v1919
          %1985 = vmatpush2.bf16.msra.mxu0 %v1918
          %1986 = vmatprep.subr.bf16.mxu0 %v1917
          %1987 = vmatpush2.bf16.msra.mxu0 %v1916
          %1988 = vmatprep.subr.bf16.mxu0 %v1915
          %1989 = vmatpush2.bf16.msra.mxu0 %v1914
          %1990 = vmatprep.subr.bf16.mxu0 %v1913
          %1991 = vmatpush2.bf16.msra.mxu0 %v1912
          %1992 = vmatprep.mubr.bf16.mxu0 %v1797
          %1993 = vmatmul.mubr.bf16.gmra.mxu0 %v1796
          %v1994 = vpop.f32.mrf.mxu0
          %v1995 = vadd.f32 0.0, %v1994
          %v1996 = vpop.f32.mrf.mxu0
          %v1997 = vadd.f32 0.0, %v1996
          %v1998 = vpop.f32.mrf.mxu0
          %v1999 = vadd.f32 0.0, %v1998
          %v2000 = vpop.f32.mrf.mxu0
          %v2001 = vadd.f32 0.0, %v2000
          %2002 = vdwg.mxu0
          %v2003 = vadd.f32 %v1746, %v1995
          %v2004 = vadd.f32 %v1747, %v1997
          %v2005 = vadd.f32 %v1748, %v1999
          %v2006 = vadd.f32 %v1749, %v2001
          %v2007 = vshrl.u32 %v707, 16
          %v2009 = vor.u32 %v2007, %v1754
          %v2010 = vshrl.u32 %v709, 16
          %v2012 = vor.u32 %v2010, %v1759
          %v2015 = vunpack.c.l.b16 %v707
          %v2016 = vunpack.c.l.b16 %v2009
          %v2017 = vunpack.c.l.b16 %v709
          %v2018 = vunpack.c.l.b16 %v2012
          %v2019 = vpack.c.b16 %v1761, %v762
          %v2020 = vpack.c.b16 %v2016, %v2015
          %v2021 = vpack.c.b16 %v1762, %v764
          %v2022 = vpack.c.b16 %v2018, %v2017
          %v2023 = vrot.slane %v2019, 5
          %v2024 = vrot.slane %v2023, 4
          %v2025 = vrot.slane %v2020, 5
          %v2026 = vsel %vm772, %v2024, %v2025
          %v2027 = vrot.slane %v2021, 5
          %v2028 = vrot.slane %v2027, 4
          %v2029 = vrot.slane %v2022, 5
          %v2030 = vsel %vm772, %v2028, %v2029
          %s2031 = scalar_lea.vmem [#allocation10], 1280
          %v2032 = vld [vmem:[%s2031] sm:$0xff]
          %v2033 = vld [vmem:[%s2031 + $0x8] sm:$0xff]
          %v2034 = vld [vmem:[%s2031 + $0x10] sm:$0xff]
          %v2035 = vld [vmem:[%s2031 + $0x18] sm:$0xff]
          %v2036 = vld [vmem:[%s2031 + $0x20] sm:$0xff]
          %v2037 = vld [vmem:[%s2031 + $0x28] sm:$0xff]
          %v2038 = vld [vmem:[%s2031 + $0x30] sm:$0xff]
          %v2039 = vld [vmem:[%s2031 + $0x38] sm:$0xff]
          %v2040 = vld [vmem:[%s2031 + $0x40] sm:$0xff]
          %v2041 = vld [vmem:[%s2031 + $0x48] sm:$0xff]
          %v2042 = vld [vmem:[%s2031 + $0x50] sm:$0xff]
          %v2043 = vld [vmem:[%s2031 + $0x58] sm:$0xff]
          %v2044 = vld [vmem:[%s2031 + $0x60] sm:$0xff]
          %v2045 = vld [vmem:[%s2031 + $0x68] sm:$0xff]
          %v2046 = vld [vmem:[%s2031 + $0x70] sm:$0xff]
          %v2047 = vld [vmem:[%s2031 + $0x78] sm:$0xff]
          %v2048 = vld [vmem:[%s2031 + $0x80] sm:$0xff]
          %v2049 = vld [vmem:[%s2031 + $0x88] sm:$0xff]
          %v2050 = vld [vmem:[%s2031 + $0x90] sm:$0xff]
          %v2051 = vld [vmem:[%s2031 + $0x98] sm:$0xff]
          %v2052 = vld [vmem:[%s2031 + $0xa0] sm:$0xff]
          %v2053 = vld [vmem:[%s2031 + $0xa8] sm:$0xff]
          %v2054 = vld [vmem:[%s2031 + $0xb0] sm:$0xff]
          %v2055 = vld [vmem:[%s2031 + $0xb8] sm:$0xff]
          %v2056 = vld [vmem:[%s2031 + $0xc0] sm:$0xff]
          %v2057 = vld [vmem:[%s2031 + $0xc8] sm:$0xff]
          %v2058 = vld [vmem:[%s2031 + $0xd0] sm:$0xff]
          %v2059 = vld [vmem:[%s2031 + $0xd8] sm:$0xff]
          %v2060 = vld [vmem:[%s2031 + $0xe0] sm:$0xff]
          %v2061 = vld [vmem:[%s2031 + $0xe8] sm:$0xff]
          %v2062 = vld [vmem:[%s2031 + $0xf0] sm:$0xff]
          %v2063 = vld [vmem:[%s2031 + $0xf8] sm:$0xff]
          %v2064 = vunpack.c.l.b16 %v2026
          %v2065 = vunpack.c.h.b16 %v2026
          %v2066 = vunpack.c.l.b16 %v2030
          %v2067 = vunpack.c.h.b16 %v2030
          %v2068 = vpack.c.b16 %v2066, %v2064
          %v2069 = vpack.c.b16 %v2067, %v2065
          %v2104 = vunpack.c.l.b16 %v2032
          %v2105 = vunpack.c.h.b16 %v2032
          %v2106 = vunpack.c.l.b16 %v2033
          %v2107 = vunpack.c.h.b16 %v2033
          %v2108 = vunpack.c.l.b16 %v2034
          %v2109 = vunpack.c.h.b16 %v2034
          %v2110 = vunpack.c.l.b16 %v2035
          %v2111 = vunpack.c.h.b16 %v2035
          %v2112 = vunpack.c.l.b16 %v2036
          %v2113 = vunpack.c.h.b16 %v2036
          %v2114 = vunpack.c.l.b16 %v2037
          %v2115 = vunpack.c.h.b16 %v2037
          %v2116 = vunpack.c.l.b16 %v2038
          %v2117 = vunpack.c.h.b16 %v2038
          %v2118 = vunpack.c.l.b16 %v2039
          %v2119 = vunpack.c.h.b16 %v2039
          %v2120 = vunpack.c.l.b16 %v2040
          %v2121 = vunpack.c.h.b16 %v2040
          %v2122 = vunpack.c.l.b16 %v2041
          %v2123 = vunpack.c.h.b16 %v2041
          %v2124 = vunpack.c.l.b16 %v2042
          %v2125 = vunpack.c.h.b16 %v2042
          %v2126 = vunpack.c.l.b16 %v2043
          %v2127 = vunpack.c.h.b16 %v2043
          %v2128 = vunpack.c.l.b16 %v2044
          %v2129 = vunpack.c.h.b16 %v2044
          %v2130 = vunpack.c.l.b16 %v2045
          %v2131 = vunpack.c.h.b16 %v2045
          %v2132 = vunpack.c.l.b16 %v2046
          %v2133 = vunpack.c.h.b16 %v2046
          %v2134 = vunpack.c.l.b16 %v2047
          %v2135 = vunpack.c.h.b16 %v2047
          %v2136 = vunpack.c.l.b16 %v2048
          %v2137 = vunpack.c.h.b16 %v2048
          %v2138 = vunpack.c.l.b16 %v2049
          %v2139 = vunpack.c.h.b16 %v2049
          %v2140 = vunpack.c.l.b16 %v2050
          %v2141 = vunpack.c.h.b16 %v2050
          %v2142 = vunpack.c.l.b16 %v2051
          %v2143 = vunpack.c.h.b16 %v2051
          %v2144 = vunpack.c.l.b16 %v2052
          %v2145 = vunpack.c.h.b16 %v2052
          %v2146 = vunpack.c.l.b16 %v2053
          %v2147 = vunpack.c.h.b16 %v2053
          %v2148 = vunpack.c.l.b16 %v2054
          %v2149 = vunpack.c.h.b16 %v2054
          %v2150 = vunpack.c.l.b16 %v2055
          %v2151 = vunpack.c.h.b16 %v2055
          %v2152 = vunpack.c.l.b16 %v2056
          %v2153 = vunpack.c.h.b16 %v2056
          %v2154 = vunpack.c.l.b16 %v2057
          %v2155 = vunpack.c.h.b16 %v2057
          %v2156 = vunpack.c.l.b16 %v2058
          %v2157 = vunpack.c.h.b16 %v2058
          %v2158 = vunpack.c.l.b16 %v2059
          %v2159 = vunpack.c.h.b16 %v2059
          %v2160 = vunpack.c.l.b16 %v2060
          %v2161 = vunpack.c.h.b16 %v2060
          %v2162 = vunpack.c.l.b16 %v2061
          %v2163 = vunpack.c.h.b16 %v2061
          %v2164 = vunpack.c.l.b16 %v2062
          %v2165 = vunpack.c.h.b16 %v2062
          %v2166 = vunpack.c.l.b16 %v2063
          %v2167 = vunpack.c.h.b16 %v2063
          %v2168 = vpack.c.b16 %v2106, %v2104
          %v2169 = vpack.c.b16 %v2107, %v2105
          %v2170 = vpack.c.b16 %v2110, %v2108
          %v2171 = vpack.c.b16 %v2111, %v2109
          %v2172 = vpack.c.b16 %v2114, %v2112
          %v2173 = vpack.c.b16 %v2115, %v2113
          %v2174 = vpack.c.b16 %v2118, %v2116
          %v2175 = vpack.c.b16 %v2119, %v2117
          %v2176 = vpack.c.b16 %v2122, %v2120
          %v2177 = vpack.c.b16 %v2123, %v2121
          %v2178 = vpack.c.b16 %v2126, %v2124
          %v2179 = vpack.c.b16 %v2127, %v2125
          %v2180 = vpack.c.b16 %v2130, %v2128
          %v2181 = vpack.c.b16 %v2131, %v2129
          %v2182 = vpack.c.b16 %v2134, %v2132
          %v2183 = vpack.c.b16 %v2135, %v2133
          %v2184 = vpack.c.b16 %v2138, %v2136
          %v2185 = vpack.c.b16 %v2139, %v2137
          %v2186 = vpack.c.b16 %v2142, %v2140
          %v2187 = vpack.c.b16 %v2143, %v2141
          %v2188 = vpack.c.b16 %v2146, %v2144
          %v2189 = vpack.c.b16 %v2147, %v2145
          %v2190 = vpack.c.b16 %v2150, %v2148
          %v2191 = vpack.c.b16 %v2151, %v2149
          %v2192 = vpack.c.b16 %v2154, %v2152
          %v2193 = vpack.c.b16 %v2155, %v2153
          %v2194 = vpack.c.b16 %v2158, %v2156
          %v2195 = vpack.c.b16 %v2159, %v2157
          %v2196 = vpack.c.b16 %v2162, %v2160
          %v2197 = vpack.c.b16 %v2163, %v2161
          %v2198 = vpack.c.b16 %v2166, %v2164
          %v2199 = vpack.c.b16 %v2167, %v2165
          %2232 = vmatprep.subr.bf16.mxu0 %v2183
          %2233 = vmatpush1.bf16.msra.mxu0 %v2182
          %2234 = vmatprep.subr.bf16.mxu0 %v2181
          %2235 = vmatpush1.bf16.msra.mxu0 %v2180
          %2236 = vmatprep.subr.bf16.mxu0 %v2179
          %2237 = vmatpush1.bf16.msra.mxu0 %v2178
          %2238 = vmatprep.subr.bf16.mxu0 %v2177
          %2239 = vmatpush1.bf16.msra.mxu0 %v2176
          %2240 = vmatprep.subr.bf16.mxu0 %v2175
          %2241 = vmatpush1.bf16.msra.mxu0 %v2174
          %2242 = vmatprep.subr.bf16.mxu0 %v2173
          %2243 = vmatpush1.bf16.msra.mxu0 %v2172
          %2244 = vmatprep.subr.bf16.mxu0 %v2171
          %2245 = vmatpush1.bf16.msra.mxu0 %v2170
          %2246 = vmatprep.subr.bf16.mxu0 %v2169
          %2247 = vmatpush1.bf16.msra.mxu0 %v2168
          %2248 = vmatprep.subr.bf16.mxu0 %v2199
          %2249 = vmatpush2.bf16.msra.mxu0 %v2198
          %2250 = vmatprep.subr.bf16.mxu0 %v2197
          %2251 = vmatpush2.bf16.msra.mxu0 %v2196
          %2252 = vmatprep.subr.bf16.mxu0 %v2195
          %2253 = vmatpush2.bf16.msra.mxu0 %v2194
          %2254 = vmatprep.subr.bf16.mxu0 %v2193
          %2255 = vmatpush2.bf16.msra.mxu0 %v2192
          %2256 = vmatprep.subr.bf16.mxu0 %v2191
          %2257 = vmatpush2.bf16.msra.mxu0 %v2190
          %2258 = vmatprep.subr.bf16.mxu0 %v2189
          %2259 = vmatpush2.bf16.msra.mxu0 %v2188
          %2260 = vmatprep.subr.bf16.mxu0 %v2187
          %2261 = vmatpush2.bf16.msra.mxu0 %v2186
          %2262 = vmatprep.subr.bf16.mxu0 %v2185
          %2263 = vmatpush2.bf16.msra.mxu0 %v2184
          %2264 = vmatprep.mubr.bf16.mxu0 %v2069
          %2265 = vmatmul.mubr.bf16.gmra.mxu0 %v2068
          %v2266 = vpop.f32.mrf.mxu0
          %v2267 = vadd.f32 0.0, %v2266
          %v2268 = vpop.f32.mrf.mxu0
          %v2269 = vadd.f32 0.0, %v2268
          %v2270 = vpop.f32.mrf.mxu0
          %v2271 = vadd.f32 0.0, %v2270
          %v2272 = vpop.f32.mrf.mxu0
          %v2273 = vadd.f32 0.0, %v2272
          %2274 = vdwg.mxu0
          %v2275 = vadd.f32 %v2003, %v2267
          %v2276 = vadd.f32 %v2004, %v2269
          %v2277 = vadd.f32 %v2005, %v2271
          %v2278 = vadd.f32 %v2006, %v2273
          %v2279 = vrot.slane %v2019, 6
          %v2280 = vrot.slane %v2279, 4
          %v2281 = vrot.slane %v2020, 6
          %v2282 = vsel %vm1234, %v2280, %v2281
          %v2283 = vrot.slane %v2021, 6
          %v2284 = vrot.slane %v2283, 4
          %v2285 = vrot.slane %v2022, 6
          %v2286 = vsel %vm1234, %v2284, %v2285
          %s2287 = scalar_lea.vmem [#allocation10], 1536
          %v2288 = vld [vmem:[%s2287] sm:$0xff]
          %v2289 = vld [vmem:[%s2287 + $0x8] sm:$0xff]
          %v2290 = vld [vmem:[%s2287 + $0x10] sm:$0xff]
          %v2291 = vld [vmem:[%s2287 + $0x18] sm:$0xff]
          %v2292 = vld [vmem:[%s2287 + $0x20] sm:$0xff]
          %v2293 = vld [vmem:[%s2287 + $0x28] sm:$0xff]
          %v2294 = vld [vmem:[%s2287 + $0x30] sm:$0xff]
          %v2295 = vld [vmem:[%s2287 + $0x38] sm:$0xff]
          %v2296 = vld [vmem:[%s2287 + $0x40] sm:$0xff]
          %v2297 = vld [vmem:[%s2287 + $0x48] sm:$0xff]
          %v2298 = vld [vmem:[%s2287 + $0x50] sm:$0xff]
          %v2299 = vld [vmem:[%s2287 + $0x58] sm:$0xff]
          %v2300 = vld [vmem:[%s2287 + $0x60] sm:$0xff]
          %v2301 = vld [vmem:[%s2287 + $0x68] sm:$0xff]
          %v2302 = vld [vmem:[%s2287 + $0x70] sm:$0xff]
          %v2303 = vld [vmem:[%s2287 + $0x78] sm:$0xff]
          %v2304 = vld [vmem:[%s2287 + $0x80] sm:$0xff]
          %v2305 = vld [vmem:[%s2287 + $0x88] sm:$0xff]
          %v2306 = vld [vmem:[%s2287 + $0x90] sm:$0xff]
          %v2307 = vld [vmem:[%s2287 + $0x98] sm:$0xff]
          %v2308 = vld [vmem:[%s2287 + $0xa0] sm:$0xff]
          %v2309 = vld [vmem:[%s2287 + $0xa8] sm:$0xff]
          %v2310 = vld [vmem:[%s2287 + $0xb0] sm:$0xff]
          %v2311 = vld [vmem:[%s2287 + $0xb8] sm:$0xff]
          %v2312 = vld [vmem:[%s2287 + $0xc0] sm:$0xff]
          %v2313 = vld [vmem:[%s2287 + $0xc8] sm:$0xff]
          %v2314 = vld [vmem:[%s2287 + $0xd0] sm:$0xff]
          %v2315 = vld [vmem:[%s2287 + $0xd8] sm:$0xff]
          %v2316 = vld [vmem:[%s2287 + $0xe0] sm:$0xff]
          %v2317 = vld [vmem:[%s2287 + $0xe8] sm:$0xff]
          %v2318 = vld [vmem:[%s2287 + $0xf0] sm:$0xff]
          %v2319 = vld [vmem:[%s2287 + $0xf8] sm:$0xff]
          %v2320 = vunpack.c.l.b16 %v2282
          %v2321 = vunpack.c.h.b16 %v2282
          %v2322 = vunpack.c.l.b16 %v2286
          %v2323 = vunpack.c.h.b16 %v2286
          %v2324 = vpack.c.b16 %v2322, %v2320
          %v2325 = vpack.c.b16 %v2323, %v2321
          %v2360 = vunpack.c.l.b16 %v2288
          %v2361 = vunpack.c.h.b16 %v2288
          %v2362 = vunpack.c.l.b16 %v2289
          %v2363 = vunpack.c.h.b16 %v2289
          %v2364 = vunpack.c.l.b16 %v2290
          %v2365 = vunpack.c.h.b16 %v2290
          %v2366 = vunpack.c.l.b16 %v2291
          %v2367 = vunpack.c.h.b16 %v2291
          %v2368 = vunpack.c.l.b16 %v2292
          %v2369 = vunpack.c.h.b16 %v2292
          %v2370 = vunpack.c.l.b16 %v2293
          %v2371 = vunpack.c.h.b16 %v2293
          %v2372 = vunpack.c.l.b16 %v2294
          %v2373 = vunpack.c.h.b16 %v2294
          %v2374 = vunpack.c.l.b16 %v2295
          %v2375 = vunpack.c.h.b16 %v2295
          %v2376 = vunpack.c.l.b16 %v2296
          %v2377 = vunpack.c.h.b16 %v2296
          %v2378 = vunpack.c.l.b16 %v2297
          %v2379 = vunpack.c.h.b16 %v2297
          %v2380 = vunpack.c.l.b16 %v2298
          %v2381 = vunpack.c.h.b16 %v2298
          %v2382 = vunpack.c.l.b16 %v2299
          %v2383 = vunpack.c.h.b16 %v2299
          %v2384 = vunpack.c.l.b16 %v2300
          %v2385 = vunpack.c.h.b16 %v2300
          %v2386 = vunpack.c.l.b16 %v2301
          %v2387 = vunpack.c.h.b16 %v2301
          %v2388 = vunpack.c.l.b16 %v2302
          %v2389 = vunpack.c.h.b16 %v2302
          %v2390 = vunpack.c.l.b16 %v2303
          %v2391 = vunpack.c.h.b16 %v2303
          %v2392 = vunpack.c.l.b16 %v2304
          %v2393 = vunpack.c.h.b16 %v2304
          %v2394 = vunpack.c.l.b16 %v2305
          %v2395 = vunpack.c.h.b16 %v2305
          %v2396 = vunpack.c.l.b16 %v2306
          %v2397 = vunpack.c.h.b16 %v2306
          %v2398 = vunpack.c.l.b16 %v2307
          %v2399 = vunpack.c.h.b16 %v2307
          %v2400 = vunpack.c.l.b16 %v2308
          %v2401 = vunpack.c.h.b16 %v2308
          %v2402 = vunpack.c.l.b16 %v2309
          %v2403 = vunpack.c.h.b16 %v2309
          %v2404 = vunpack.c.l.b16 %v2310
          %v2405 = vunpack.c.h.b16 %v2310
          %v2406 = vunpack.c.l.b16 %v2311
          %v2407 = vunpack.c.h.b16 %v2311
          %v2408 = vunpack.c.l.b16 %v2312
          %v2409 = vunpack.c.h.b16 %v2312
          %v2410 = vunpack.c.l.b16 %v2313
          %v2411 = vunpack.c.h.b16 %v2313
          %v2412 = vunpack.c.l.b16 %v2314
          %v2413 = vunpack.c.h.b16 %v2314
          %v2414 = vunpack.c.l.b16 %v2315
          %v2415 = vunpack.c.h.b16 %v2315
          %v2416 = vunpack.c.l.b16 %v2316
          %v2417 = vunpack.c.h.b16 %v2316
          %v2418 = vunpack.c.l.b16 %v2317
          %v2419 = vunpack.c.h.b16 %v2317
          %v2420 = vunpack.c.l.b16 %v2318
          %v2421 = vunpack.c.h.b16 %v2318
          %v2422 = vunpack.c.l.b16 %v2319
          %v2423 = vunpack.c.h.b16 %v2319
          %v2424 = vpack.c.b16 %v2362, %v2360
          %v2425 = vpack.c.b16 %v2363, %v2361
          %v2426 = vpack.c.b16 %v2366, %v2364
          %v2427 = vpack.c.b16 %v2367, %v2365
          %v2428 = vpack.c.b16 %v2370, %v2368
          %v2429 = vpack.c.b16 %v2371, %v2369
          %v2430 = vpack.c.b16 %v2374, %v2372
          %v2431 = vpack.c.b16 %v2375, %v2373
          %v2432 = vpack.c.b16 %v2378, %v2376
          %v2433 = vpack.c.b16 %v2379, %v2377
          %v2434 = vpack.c.b16 %v2382, %v2380
          %v2435 = vpack.c.b16 %v2383, %v2381
          %v2436 = vpack.c.b16 %v2386, %v2384
          %v2437 = vpack.c.b16 %v2387, %v2385
          %v2438 = vpack.c.b16 %v2390, %v2388
          %v2439 = vpack.c.b16 %v2391, %v2389
          %v2440 = vpack.c.b16 %v2394, %v2392
          %v2441 = vpack.c.b16 %v2395, %v2393
          %v2442 = vpack.c.b16 %v2398, %v2396
          %v2443 = vpack.c.b16 %v2399, %v2397
          %v2444 = vpack.c.b16 %v2402, %v2400
          %v2445 = vpack.c.b16 %v2403, %v2401
          %v2446 = vpack.c.b16 %v2406, %v2404
          %v2447 = vpack.c.b16 %v2407, %v2405
          %v2448 = vpack.c.b16 %v2410, %v2408
          %v2449 = vpack.c.b16 %v2411, %v2409
          %v2450 = vpack.c.b16 %v2414, %v2412
          %v2451 = vpack.c.b16 %v2415, %v2413
          %v2452 = vpack.c.b16 %v2418, %v2416
          %v2453 = vpack.c.b16 %v2419, %v2417
          %v2454 = vpack.c.b16 %v2422, %v2420
          %v2455 = vpack.c.b16 %v2423, %v2421
          %2488 = vmatprep.subr.bf16.mxu0 %v2439
          %2489 = vmatpush1.bf16.msra.mxu0 %v2438
          %2490 = vmatprep.subr.bf16.mxu0 %v2437
          %2491 = vmatpush1.bf16.msra.mxu0 %v2436
          %2492 = vmatprep.subr.bf16.mxu0 %v2435
          %2493 = vmatpush1.bf16.msra.mxu0 %v2434
          %2494 = vmatprep.subr.bf16.mxu0 %v2433
          %2495 = vmatpush1.bf16.msra.mxu0 %v2432
          %2496 = vmatprep.subr.bf16.mxu0 %v2431
          %2497 = vmatpush1.bf16.msra.mxu0 %v2430
          %2498 = vmatprep.subr.bf16.mxu0 %v2429
          %2499 = vmatpush1.bf16.msra.mxu0 %v2428
          %2500 = vmatprep.subr.bf16.mxu0 %v2427
          %2501 = vmatpush1.bf16.msra.mxu0 %v2426
          %2502 = vmatprep.subr.bf16.mxu0 %v2425
          %2503 = vmatpush1.bf16.msra.mxu0 %v2424
          %2504 = vmatprep.subr.bf16.mxu0 %v2455
          %2505 = vmatpush2.bf16.msra.mxu0 %v2454
          %2506 = vmatprep.subr.bf16.mxu0 %v2453
          %2507 = vmatpush2.bf16.msra.mxu0 %v2452
          %2508 = vmatprep.subr.bf16.mxu0 %v2451
          %2509 = vmatpush2.bf16.msra.mxu0 %v2450
          %2510 = vmatprep.subr.bf16.mxu0 %v2449
          %2511 = vmatpush2.bf16.msra.mxu0 %v2448
          %2512 = vmatprep.subr.bf16.mxu0 %v2447
          %2513 = vmatpush2.bf16.msra.mxu0 %v2446
          %2514 = vmatprep.subr.bf16.mxu0 %v2445
          %2515 = vmatpush2.bf16.msra.mxu0 %v2444
          %2516 = vmatprep.subr.bf16.mxu0 %v2443
          %2517 = vmatpush2.bf16.msra.mxu0 %v2442
          %2518 = vmatprep.subr.bf16.mxu0 %v2441
          %2519 = vmatpush2.bf16.msra.mxu0 %v2440
          %2520 = vmatprep.mubr.bf16.mxu0 %v2325
          %2521 = vmatmul.mubr.bf16.gmra.mxu0 %v2324
          %v2522 = vpop.f32.mrf.mxu0
          %v2523 = vadd.f32 0.0, %v2522
          %v2524 = vpop.f32.mrf.mxu0
          %v2525 = vadd.f32 0.0, %v2524
          %v2526 = vpop.f32.mrf.mxu0
          %v2527 = vadd.f32 0.0, %v2526
          %v2528 = vpop.f32.mrf.mxu0
          %v2529 = vadd.f32 0.0, %v2528
          %2530 = vdwg.mxu0
          %v2531 = vadd.f32 %v2275, %v2523
          %v2532 = vadd.f32 %v2276, %v2525
          %v2533 = vadd.f32 %v2277, %v2527
          %v2534 = vadd.f32 %v2278, %v2529
          %v2535 = vsel %vm1750, %v711, %v1754
          %v2536 = vsel %vm1750, %v718, %v1759
          %v2537 = vunpack.c.h.b16 %v2535
          %v2538 = vunpack.c.h.b16 %v2536
          %v2539 = vpack.c.b16 %v2537, %v762
          %v2540 = vpack.c.b16 %v2538, %v764
          %v2541 = vrot.slane %v2539, 7
          %v2542 = vrot.slane %v2541, 4
          %v2543 = vrot.slane %v2020, 7
          %v2544 = vsel %vm1493, %v2542, %v2543
          %v2545 = vrot.slane %v2540, 7
          %v2546 = vrot.slane %v2545, 4
          %v2547 = vrot.slane %v2022, 7
          %v2548 = vsel %vm1493, %v2546, %v2547
          %s2549 = scalar_lea.vmem [#allocation10], 1792
          %v2550 = vld [vmem:[%s2549] sm:$0xff]
          %v2551 = vld [vmem:[%s2549 + $0x8] sm:$0xff]
          %v2552 = vld [vmem:[%s2549 + $0x10] sm:$0xff]
          %v2553 = vld [vmem:[%s2549 + $0x18] sm:$0xff]
          %v2554 = vld [vmem:[%s2549 + $0x20] sm:$0xff]
          %v2555 = vld [vmem:[%s2549 + $0x28] sm:$0xff]
          %v2556 = vld [vmem:[%s2549 + $0x30] sm:$0xff]
          %v2557 = vld [vmem:[%s2549 + $0x38] sm:$0xff]
          %v2558 = vld [vmem:[%s2549 + $0x40] sm:$0xff]
          %v2559 = vld [vmem:[%s2549 + $0x48] sm:$0xff]
          %v2560 = vld [vmem:[%s2549 + $0x50] sm:$0xff]
          %v2561 = vld [vmem:[%s2549 + $0x58] sm:$0xff]
          %v2562 = vld [vmem:[%s2549 + $0x60] sm:$0xff]
          %v2563 = vld [vmem:[%s2549 + $0x68] sm:$0xff]
          %v2564 = vld [vmem:[%s2549 + $0x70] sm:$0xff]
          %v2565 = vld [vmem:[%s2549 + $0x78] sm:$0xff]
          %v2566 = vld [vmem:[%s2549 + $0x80] sm:$0xff]
          %v2567 = vld [vmem:[%s2549 + $0x88] sm:$0xff]
          %v2568 = vld [vmem:[%s2549 + $0x90] sm:$0xff]
          %v2569 = vld [vmem:[%s2549 + $0x98] sm:$0xff]
          %v2570 = vld [vmem:[%s2549 + $0xa0] sm:$0xff]
          %v2571 = vld [vmem:[%s2549 + $0xa8] sm:$0xff]
          %v2572 = vld [vmem:[%s2549 + $0xb0] sm:$0xff]
          %v2573 = vld [vmem:[%s2549 + $0xb8] sm:$0xff]
          %v2574 = vld [vmem:[%s2549 + $0xc0] sm:$0xff]
          %v2575 = vld [vmem:[%s2549 + $0xc8] sm:$0xff]
          %v2576 = vld [vmem:[%s2549 + $0xd0] sm:$0xff]
          %v2577 = vld [vmem:[%s2549 + $0xd8] sm:$0xff]
          %v2578 = vld [vmem:[%s2549 + $0xe0] sm:$0xff]
          %v2579 = vld [vmem:[%s2549 + $0xe8] sm:$0xff]
          %v2580 = vld [vmem:[%s2549 + $0xf0] sm:$0xff]
          %v2581 = vld [vmem:[%s2549 + $0xf8] sm:$0xff]
          %v2582 = vunpack.c.l.b16 %v2544
          %v2583 = vunpack.c.h.b16 %v2544
          %v2584 = vunpack.c.l.b16 %v2548
          %v2585 = vunpack.c.h.b16 %v2548
          %v2586 = vpack.c.b16 %v2584, %v2582
          %v2587 = vpack.c.b16 %v2585, %v2583
          %v2622 = vunpack.c.l.b16 %v2550
          %v2623 = vunpack.c.h.b16 %v2550
          %v2624 = vunpack.c.l.b16 %v2551
          %v2625 = vunpack.c.h.b16 %v2551
          %v2626 = vunpack.c.l.b16 %v2552
          %v2627 = vunpack.c.h.b16 %v2552
          %v2628 = vunpack.c.l.b16 %v2553
          %v2629 = vunpack.c.h.b16 %v2553
          %v2630 = vunpack.c.l.b16 %v2554
          %v2631 = vunpack.c.h.b16 %v2554
          %v2632 = vunpack.c.l.b16 %v2555
          %v2633 = vunpack.c.h.b16 %v2555
          %v2634 = vunpack.c.l.b16 %v2556
          %v2635 = vunpack.c.h.b16 %v2556
          %v2636 = vunpack.c.l.b16 %v2557
          %v2637 = vunpack.c.h.b16 %v2557
          %v2638 = vunpack.c.l.b16 %v2558
          %v2639 = vunpack.c.h.b16 %v2558
          %v2640 = vunpack.c.l.b16 %v2559
          %v2641 = vunpack.c.h.b16 %v2559
          %v2642 = vunpack.c.l.b16 %v2560
          %v2643 = vunpack.c.h.b16 %v2560
          %v2644 = vunpack.c.l.b16 %v2561
          %v2645 = vunpack.c.h.b16 %v2561
          %v2646 = vunpack.c.l.b16 %v2562
          %v2647 = vunpack.c.h.b16 %v2562
          %v2648 = vunpack.c.l.b16 %v2563
          %v2649 = vunpack.c.h.b16 %v2563
          %v2650 = vunpack.c.l.b16 %v2564
          %v2651 = vunpack.c.h.b16 %v2564
          %v2652 = vunpack.c.l.b16 %v2565
          %v2653 = vunpack.c.h.b16 %v2565
          %v2654 = vunpack.c.l.b16 %v2566
          %v2655 = vunpack.c.h.b16 %v2566
          %v2656 = vunpack.c.l.b16 %v2567
          %v2657 = vunpack.c.h.b16 %v2567
          %v2658 = vunpack.c.l.b16 %v2568
          %v2659 = vunpack.c.h.b16 %v2568
          %v2660 = vunpack.c.l.b16 %v2569
          %v2661 = vunpack.c.h.b16 %v2569
          %v2662 = vunpack.c.l.b16 %v2570
          %v2663 = vunpack.c.h.b16 %v2570
          %v2664 = vunpack.c.l.b16 %v2571
          %v2665 = vunpack.c.h.b16 %v2571
          %v2666 = vunpack.c.l.b16 %v2572
          %v2667 = vunpack.c.h.b16 %v2572
          %v2668 = vunpack.c.l.b16 %v2573
          %v2669 = vunpack.c.h.b16 %v2573
          %v2670 = vunpack.c.l.b16 %v2574
          %v2671 = vunpack.c.h.b16 %v2574
          %v2672 = vunpack.c.l.b16 %v2575
          %v2673 = vunpack.c.h.b16 %v2575
          %v2674 = vunpack.c.l.b16 %v2576
          %v2675 = vunpack.c.h.b16 %v2576
          %v2676 = vunpack.c.l.b16 %v2577
          %v2677 = vunpack.c.h.b16 %v2577
          %v2678 = vunpack.c.l.b16 %v2578
          %v2679 = vunpack.c.h.b16 %v2578
          %v2680 = vunpack.c.l.b16 %v2579
          %v2681 = vunpack.c.h.b16 %v2579
          %v2682 = vunpack.c.l.b16 %v2580
          %v2683 = vunpack.c.h.b16 %v2580
          %v2684 = vunpack.c.l.b16 %v2581
          %v2685 = vunpack.c.h.b16 %v2581
          %v2686 = vpack.c.b16 %v2624, %v2622
          %v2687 = vpack.c.b16 %v2625, %v2623
          %v2688 = vpack.c.b16 %v2628, %v2626
          %v2689 = vpack.c.b16 %v2629, %v2627
          %v2690 = vpack.c.b16 %v2632, %v2630
          %v2691 = vpack.c.b16 %v2633, %v2631
          %v2692 = vpack.c.b16 %v2636, %v2634
          %v2693 = vpack.c.b16 %v2637, %v2635
          %v2694 = vpack.c.b16 %v2640, %v2638
          %v2695 = vpack.c.b16 %v2641, %v2639
          %v2696 = vpack.c.b16 %v2644, %v2642
          %v2697 = vpack.c.b16 %v2645, %v2643
          %v2698 = vpack.c.b16 %v2648, %v2646
          %v2699 = vpack.c.b16 %v2649, %v2647
          %v2700 = vpack.c.b16 %v2652, %v2650
          %v2701 = vpack.c.b16 %v2653, %v2651
          %v2702 = vpack.c.b16 %v2656, %v2654
          %v2703 = vpack.c.b16 %v2657, %v2655
          %v2704 = vpack.c.b16 %v2660, %v2658
          %v2705 = vpack.c.b16 %v2661, %v2659
          %v2706 = vpack.c.b16 %v2664, %v2662
          %v2707 = vpack.c.b16 %v2665, %v2663
          %v2708 = vpack.c.b16 %v2668, %v2666
          %v2709 = vpack.c.b16 %v2669, %v2667
          %v2710 = vpack.c.b16 %v2672, %v2670
          %v2711 = vpack.c.b16 %v2673, %v2671
          %v2712 = vpack.c.b16 %v2676, %v2674
          %v2713 = vpack.c.b16 %v2677, %v2675
          %v2714 = vpack.c.b16 %v2680, %v2678
          %v2715 = vpack.c.b16 %v2681, %v2679
          %v2716 = vpack.c.b16 %v2684, %v2682
          %v2717 = vpack.c.b16 %v2685, %v2683
          %2750 = vmatprep.subr.bf16.mxu0 %v2701
          %2751 = vmatpush1.bf16.msra.mxu0 %v2700
          %2752 = vmatprep.subr.bf16.mxu0 %v2699
          %2753 = vmatpush1.bf16.msra.mxu0 %v2698
          %2754 = vmatprep.subr.bf16.mxu0 %v2697
          %2755 = vmatpush1.bf16.msra.mxu0 %v2696
          %2756 = vmatprep.subr.bf16.mxu0 %v2695
          %2757 = vmatpush1.bf16.msra.mxu0 %v2694
          %2758 = vmatprep.subr.bf16.mxu0 %v2693
          %2759 = vmatpush1.bf16.msra.mxu0 %v2692
          %2760 = vmatprep.subr.bf16.mxu0 %v2691
          %2761 = vmatpush1.bf16.msra.mxu0 %v2690
          %2762 = vmatprep.subr.bf16.mxu0 %v2689
          %2763 = vmatpush1.bf16.msra.mxu0 %v2688
          %2764 = vmatprep.subr.bf16.mxu0 %v2687
          %2765 = vmatpush1.bf16.msra.mxu0 %v2686
          %2766 = vmatprep.subr.bf16.mxu0 %v2717
          %2767 = vmatpush2.bf16.msra.mxu0 %v2716
          %2768 = vmatprep.subr.bf16.mxu0 %v2715
          %2769 = vmatpush2.bf16.msra.mxu0 %v2714
          %2770 = vmatprep.subr.bf16.mxu0 %v2713
          %2771 = vmatpush2.bf16.msra.mxu0 %v2712
          %2772 = vmatprep.subr.bf16.mxu0 %v2711
          %2773 = vmatpush2.bf16.msra.mxu0 %v2710
          %2774 = vmatprep.subr.bf16.mxu0 %v2709
          %2775 = vmatpush2.bf16.msra.mxu0 %v2708
          %2776 = vmatprep.subr.bf16.mxu0 %v2707
          %2777 = vmatpush2.bf16.msra.mxu0 %v2706
          %2778 = vmatprep.subr.bf16.mxu0 %v2705
          %2779 = vmatpush2.bf16.msra.mxu0 %v2704
          %2780 = vmatprep.subr.bf16.mxu0 %v2703
          %2781 = vmatpush2.bf16.msra.mxu0 %v2702
          %2782 = vmatprep.mubr.bf16.mxu0 %v2587
          %2783 = vmatmul.mubr.bf16.gmra.mxu0 %v2586
          %v2784 = vpop.f32.mrf.mxu0
          %v2785 = vadd.f32 0.0, %v2784
          %v2786 = vpop.f32.mrf.mxu0
          %v2787 = vadd.f32 0.0, %v2786
          %v2788 = vpop.f32.mrf.mxu0
          %v2789 = vadd.f32 0.0, %v2788
          %v2790 = vpop.f32.mrf.mxu0
          %v2791 = vadd.f32 0.0, %v2790
          %2792 = vdwg.mxu0
          %v2793 = vadd.f32 %v2531, %v2785
          %v2794 = vadd.f32 %v2532, %v2787
          %v2795 = vadd.f32 %v2533, %v2789
          %v2796 = vadd.f32 %v2534, %v2791
          %s2797 = scalar_lea.vmem [#allocation10], 2048
          %v2798 = vld [vmem:[%s2797] sm:$0xff]
          %v2799 = vld [vmem:[%s2797 + $0x8] sm:$0xff]
          %v2800 = vld [vmem:[%s2797 + $0x10] sm:$0xff]
          %v2801 = vld [vmem:[%s2797 + $0x18] sm:$0xff]
          %v2802 = vld [vmem:[%s2797 + $0x20] sm:$0xff]
          %v2803 = vld [vmem:[%s2797 + $0x28] sm:$0xff]
          %v2804 = vld [vmem:[%s2797 + $0x30] sm:$0xff]
          %v2805 = vld [vmem:[%s2797 + $0x38] sm:$0xff]
          %v2806 = vld [vmem:[%s2797 + $0x40] sm:$0xff]
          %v2807 = vld [vmem:[%s2797 + $0x48] sm:$0xff]
          %v2808 = vld [vmem:[%s2797 + $0x50] sm:$0xff]
          %v2809 = vld [vmem:[%s2797 + $0x58] sm:$0xff]
          %v2810 = vld [vmem:[%s2797 + $0x60] sm:$0xff]
          %v2811 = vld [vmem:[%s2797 + $0x68] sm:$0xff]
          %v2812 = vld [vmem:[%s2797 + $0x70] sm:$0xff]
          %v2813 = vld [vmem:[%s2797 + $0x78] sm:$0xff]
          %v2814 = vld [vmem:[%s2797 + $0x80] sm:$0xff]
          %v2815 = vld [vmem:[%s2797 + $0x88] sm:$0xff]
          %v2816 = vld [vmem:[%s2797 + $0x90] sm:$0xff]
          %v2817 = vld [vmem:[%s2797 + $0x98] sm:$0xff]
          %v2818 = vld [vmem:[%s2797 + $0xa0] sm:$0xff]
          %v2819 = vld [vmem:[%s2797 + $0xa8] sm:$0xff]
          %v2820 = vld [vmem:[%s2797 + $0xb0] sm:$0xff]
          %v2821 = vld [vmem:[%s2797 + $0xb8] sm:$0xff]
          %v2822 = vld [vmem:[%s2797 + $0xc0] sm:$0xff]
          %v2823 = vld [vmem:[%s2797 + $0xc8] sm:$0xff]
          %v2824 = vld [vmem:[%s2797 + $0xd0] sm:$0xff]
          %v2825 = vld [vmem:[%s2797 + $0xd8] sm:$0xff]
          %v2826 = vld [vmem:[%s2797 + $0xe0] sm:$0xff]
          %v2827 = vld [vmem:[%s2797 + $0xe8] sm:$0xff]
          %v2828 = vld [vmem:[%s2797 + $0xf0] sm:$0xff]
          %v2829 = vld [vmem:[%s2797 + $0xf8] sm:$0xff]
          %v2830 = vpack.c.b16 %v2017, %v2015
          %v2831 = vpack.c.b16 %v2018, %v2016
          %v2866 = vunpack.c.l.b16 %v2798
          %v2867 = vunpack.c.h.b16 %v2798
          %v2868 = vunpack.c.l.b16 %v2799
          %v2869 = vunpack.c.h.b16 %v2799
          %v2870 = vunpack.c.l.b16 %v2800
          %v2871 = vunpack.c.h.b16 %v2800
          %v2872 = vunpack.c.l.b16 %v2801
          %v2873 = vunpack.c.h.b16 %v2801
          %v2874 = vunpack.c.l.b16 %v2802
          %v2875 = vunpack.c.h.b16 %v2802
          %v2876 = vunpack.c.l.b16 %v2803
          %v2877 = vunpack.c.h.b16 %v2803
          %v2878 = vunpack.c.l.b16 %v2804
          %v2879 = vunpack.c.h.b16 %v2804
          %v2880 = vunpack.c.l.b16 %v2805
          %v2881 = vunpack.c.h.b16 %v2805
          %v2882 = vunpack.c.l.b16 %v2806
          %v2883 = vunpack.c.h.b16 %v2806
          %v2884 = vunpack.c.l.b16 %v2807
          %v2885 = vunpack.c.h.b16 %v2807
          %v2886 = vunpack.c.l.b16 %v2808
          %v2887 = vunpack.c.h.b16 %v2808
          %v2888 = vunpack.c.l.b16 %v2809
          %v2889 = vunpack.c.h.b16 %v2809
          %v2890 = vunpack.c.l.b16 %v2810
          %v2891 = vunpack.c.h.b16 %v2810
          %v2892 = vunpack.c.l.b16 %v2811
          %v2893 = vunpack.c.h.b16 %v2811
          %v2894 = vunpack.c.l.b16 %v2812
          %v2895 = vunpack.c.h.b16 %v2812
          %v2896 = vunpack.c.l.b16 %v2813
          %v2897 = vunpack.c.h.b16 %v2813
          %v2898 = vunpack.c.l.b16 %v2814
          %v2899 = vunpack.c.h.b16 %v2814
          %v2900 = vunpack.c.l.b16 %v2815
          %v2901 = vunpack.c.h.b16 %v2815
          %v2902 = vunpack.c.l.b16 %v2816
          %v2903 = vunpack.c.h.b16 %v2816
          %v2904 = vunpack.c.l.b16 %v2817
          %v2905 = vunpack.c.h.b16 %v2817
          %v2906 = vunpack.c.l.b16 %v2818
          %v2907 = vunpack.c.h.b16 %v2818
          %v2908 = vunpack.c.l.b16 %v2819
          %v2909 = vunpack.c.h.b16 %v2819
          %v2910 = vunpack.c.l.b16 %v2820
          %v2911 = vunpack.c.h.b16 %v2820
          %v2912 = vunpack.c.l.b16 %v2821
          %v2913 = vunpack.c.h.b16 %v2821
          %v2914 = vunpack.c.l.b16 %v2822
          %v2915 = vunpack.c.h.b16 %v2822
          %v2916 = vunpack.c.l.b16 %v2823
          %v2917 = vunpack.c.h.b16 %v2823
          %v2918 = vunpack.c.l.b16 %v2824
          %v2919 = vunpack.c.h.b16 %v2824
          %v2920 = vunpack.c.l.b16 %v2825
          %v2921 = vunpack.c.h.b16 %v2825
          %v2922 = vunpack.c.l.b16 %v2826
          %v2923 = vunpack.c.h.b16 %v2826
          %v2924 = vunpack.c.l.b16 %v2827
          %v2925 = vunpack.c.h.b16 %v2827
          %v2926 = vunpack.c.l.b16 %v2828
          %v2927 = vunpack.c.h.b16 %v2828
          %v2928 = vunpack.c.l.b16 %v2829
          %v2929 = vunpack.c.h.b16 %v2829
          %v2930 = vpack.c.b16 %v2868, %v2866
          %v2931 = vpack.c.b16 %v2869, %v2867
          %v2932 = vpack.c.b16 %v2872, %v2870
          %v2933 = vpack.c.b16 %v2873, %v2871
          %v2934 = vpack.c.b16 %v2876, %v2874
          %v2935 = vpack.c.b16 %v2877, %v2875
          %v2936 = vpack.c.b16 %v2880, %v2878
          %v2937 = vpack.c.b16 %v2881, %v2879
          %v2938 = vpack.c.b16 %v2884, %v2882
          %v2939 = vpack.c.b16 %v2885, %v2883
          %v2940 = vpack.c.b16 %v2888, %v2886
          %v2941 = vpack.c.b16 %v2889, %v2887
          %v2942 = vpack.c.b16 %v2892, %v2890
          %v2943 = vpack.c.b16 %v2893, %v2891
          %v2944 = vpack.c.b16 %v2896, %v2894
          %v2945 = vpack.c.b16 %v2897, %v2895
          %v2946 = vpack.c.b16 %v2900, %v2898
          %v2947 = vpack.c.b16 %v2901, %v2899
          %v2948 = vpack.c.b16 %v2904, %v2902
          %v2949 = vpack.c.b16 %v2905, %v2903
          %v2950 = vpack.c.b16 %v2908, %v2906
          %v2951 = vpack.c.b16 %v2909, %v2907
          %v2952 = vpack.c.b16 %v2912, %v2910
          %v2953 = vpack.c.b16 %v2913, %v2911
          %v2954 = vpack.c.b16 %v2916, %v2914
          %v2955 = vpack.c.b16 %v2917, %v2915
          %v2956 = vpack.c.b16 %v2920, %v2918
          %v2957 = vpack.c.b16 %v2921, %v2919
          %v2958 = vpack.c.b16 %v2924, %v2922
          %v2959 = vpack.c.b16 %v2925, %v2923
          %v2960 = vpack.c.b16 %v2928, %v2926
          %v2961 = vpack.c.b16 %v2929, %v2927
          %2994 = vmatprep.subr.bf16.mxu0 %v2945
          %2995 = vmatpush1.bf16.msra.mxu0 %v2944
          %2996 = vmatprep.subr.bf16.mxu0 %v2943
          %2997 = vmatpush1.bf16.msra.mxu0 %v2942
          %2998 = vmatprep.subr.bf16.mxu0 %v2941
          %2999 = vmatpush1.bf16.msra.mxu0 %v2940
          %3000 = vmatprep.subr.bf16.mxu0 %v2939
          %3001 = vmatpush1.bf16.msra.mxu0 %v2938
          %3002 = vmatprep.subr.bf16.mxu0 %v2937
          %3003 = vmatpush1.bf16.msra.mxu0 %v2936
          %3004 = vmatprep.subr.bf16.mxu0 %v2935
          %3005 = vmatpush1.bf16.msra.mxu0 %v2934
          %3006 = vmatprep.subr.bf16.mxu0 %v2933
          %3007 = vmatpush1.bf16.msra.mxu0 %v2932
          %3008 = vmatprep.subr.bf16.mxu0 %v2931
          %3009 = vmatpush1.bf16.msra.mxu0 %v2930
          %3010 = vmatprep.subr.bf16.mxu0 %v2961
          %3011 = vmatpush2.bf16.msra.mxu0 %v2960
          %3012 = vmatprep.subr.bf16.mxu0 %v2959
          %3013 = vmatpush2.bf16.msra.mxu0 %v2958
          %3014 = vmatprep.subr.bf16.mxu0 %v2957
          %3015 = vmatpush2.bf16.msra.mxu0 %v2956
          %3016 = vmatprep.subr.bf16.mxu0 %v2955
          %3017 = vmatpush2.bf16.msra.mxu0 %v2954
          %3018 = vmatprep.subr.bf16.mxu0 %v2953
          %3019 = vmatpush2.bf16.msra.mxu0 %v2952
          %3020 = vmatprep.subr.bf16.mxu0 %v2951
          %3021 = vmatpush2.bf16.msra.mxu0 %v2950
          %3022 = vmatprep.subr.bf16.mxu0 %v2949
          %3023 = vmatpush2.bf16.msra.mxu0 %v2948
          %3024 = vmatprep.subr.bf16.mxu0 %v2947
          %3025 = vmatpush2.bf16.msra.mxu0 %v2946
          %3026 = vmatprep.mubr.bf16.mxu0 %v2831
          %3027 = vmatmul.mubr.bf16.gmra.mxu0 %v2830
          %v3028 = vpop.f32.mrf.mxu0
          %v3029 = vadd.f32 0.0, %v3028
          %v3030 = vpop.f32.mrf.mxu0
          %v3031 = vadd.f32 0.0, %v3030
          %v3032 = vpop.f32.mrf.mxu0
          %v3033 = vadd.f32 0.0, %v3032
          %v3034 = vpop.f32.mrf.mxu0
          %v3035 = vadd.f32 0.0, %v3034
          %3036 = vdwg.mxu0
          %v3037 = vadd.f32 %v2793, %v3029
          %v3038 = vadd.f32 %v2794, %v3031
          %v3039 = vadd.f32 %v2795, %v3033
          %v3040 = vadd.f32 %v2796, %v3035
          %v3041 = vunpack.c.h.b16 %v707
          %v3042 = vunpack.c.h.b16 %v2009
          %v3043 = vunpack.c.h.b16 %v709
          %v3044 = vunpack.c.h.b16 %v2012
          %v3045 = vpack.c.b16 %v3042, %v3041
          %v3046 = vpack.c.b16 %v3044, %v3043
          %v3047 = vrot.slane %v2025, 4
          %v3048 = vrot.slane %v3045, 5
          %v3049 = vsel %vm772, %v3047, %v3048
          %v3050 = vrot.slane %v2029, 4
          %v3051 = vrot.slane %v3046, 5
          %v3052 = vsel %vm772, %v3050, %v3051
          %s3053 = scalar_lea.vmem [#allocation10], 2304
          %v3054 = vld [vmem:[%s3053] sm:$0xff]
          %v3055 = vld [vmem:[%s3053 + $0x8] sm:$0xff]
          %v3056 = vld [vmem:[%s3053 + $0x10] sm:$0xff]
          %v3057 = vld [vmem:[%s3053 + $0x18] sm:$0xff]
          %v3058 = vld [vmem:[%s3053 + $0x20] sm:$0xff]
          %v3059 = vld [vmem:[%s3053 + $0x28] sm:$0xff]
          %v3060 = vld [vmem:[%s3053 + $0x30] sm:$0xff]
          %v3061 = vld [vmem:[%s3053 + $0x38] sm:$0xff]
          %v3062 = vld [vmem:[%s3053 + $0x40] sm:$0xff]
          %v3063 = vld [vmem:[%s3053 + $0x48] sm:$0xff]
          %v3064 = vld [vmem:[%s3053 + $0x50] sm:$0xff]
          %v3065 = vld [vmem:[%s3053 + $0x58] sm:$0xff]
          %v3066 = vld [vmem:[%s3053 + $0x60] sm:$0xff]
          %v3067 = vld [vmem:[%s3053 + $0x68] sm:$0xff]
          %v3068 = vld [vmem:[%s3053 + $0x70] sm:$0xff]
          %v3069 = vld [vmem:[%s3053 + $0x78] sm:$0xff]
          %v3070 = vld [vmem:[%s3053 + $0x80] sm:$0xff]
          %v3071 = vld [vmem:[%s3053 + $0x88] sm:$0xff]
          %v3072 = vld [vmem:[%s3053 + $0x90] sm:$0xff]
          %v3073 = vld [vmem:[%s3053 + $0x98] sm:$0xff]
          %v3074 = vld [vmem:[%s3053 + $0xa0] sm:$0xff]
          %v3075 = vld [vmem:[%s3053 + $0xa8] sm:$0xff]
          %v3076 = vld [vmem:[%s3053 + $0xb0] sm:$0xff]
          %v3077 = vld [vmem:[%s3053 + $0xb8] sm:$0xff]
          %v3078 = vld [vmem:[%s3053 + $0xc0] sm:$0xff]
          %v3079 = vld [vmem:[%s3053 + $0xc8] sm:$0xff]
          %v3080 = vld [vmem:[%s3053 + $0xd0] sm:$0xff]
          %v3081 = vld [vmem:[%s3053 + $0xd8] sm:$0xff]
          %v3082 = vld [vmem:[%s3053 + $0xe0] sm:$0xff]
          %v3083 = vld [vmem:[%s3053 + $0xe8] sm:$0xff]
          %v3084 = vld [vmem:[%s3053 + $0xf0] sm:$0xff]
          %v3085 = vld [vmem:[%s3053 + $0xf8] sm:$0xff]
          %v3086 = vunpack.c.l.b16 %v3049
          %v3087 = vunpack.c.h.b16 %v3049
          %v3088 = vunpack.c.l.b16 %v3052
          %v3089 = vunpack.c.h.b16 %v3052
          %v3090 = vpack.c.b16 %v3088, %v3086
          %v3091 = vpack.c.b16 %v3089, %v3087
          %v3126 = vunpack.c.l.b16 %v3054
          %v3127 = vunpack.c.h.b16 %v3054
          %v3128 = vunpack.c.l.b16 %v3055
          %v3129 = vunpack.c.h.b16 %v3055
          %v3130 = vunpack.c.l.b16 %v3056
          %v3131 = vunpack.c.h.b16 %v3056
          %v3132 = vunpack.c.l.b16 %v3057
          %v3133 = vunpack.c.h.b16 %v3057
          %v3134 = vunpack.c.l.b16 %v3058
          %v3135 = vunpack.c.h.b16 %v3058
          %v3136 = vunpack.c.l.b16 %v3059
          %v3137 = vunpack.c.h.b16 %v3059
          %v3138 = vunpack.c.l.b16 %v3060
          %v3139 = vunpack.c.h.b16 %v3060
          %v3140 = vunpack.c.l.b16 %v3061
          %v3141 = vunpack.c.h.b16 %v3061
          %v3142 = vunpack.c.l.b16 %v3062
          %v3143 = vunpack.c.h.b16 %v3062
          %v3144 = vunpack.c.l.b16 %v3063
          %v3145 = vunpack.c.h.b16 %v3063
          %v3146 = vunpack.c.l.b16 %v3064
          %v3147 = vunpack.c.h.b16 %v3064
          %v3148 = vunpack.c.l.b16 %v3065
          %v3149 = vunpack.c.h.b16 %v3065
          %v3150 = vunpack.c.l.b16 %v3066
          %v3151 = vunpack.c.h.b16 %v3066
          %v3152 = vunpack.c.l.b16 %v3067
          %v3153 = vunpack.c.h.b16 %v3067
          %v3154 = vunpack.c.l.b16 %v3068
          %v3155 = vunpack.c.h.b16 %v3068
          %v3156 = vunpack.c.l.b16 %v3069
          %v3157 = vunpack.c.h.b16 %v3069
          %v3158 = vunpack.c.l.b16 %v3070
          %v3159 = vunpack.c.h.b16 %v3070
          %v3160 = vunpack.c.l.b16 %v3071
          %v3161 = vunpack.c.h.b16 %v3071
          %v3162 = vunpack.c.l.b16 %v3072
          %v3163 = vunpack.c.h.b16 %v3072
          %v3164 = vunpack.c.l.b16 %v3073
          %v3165 = vunpack.c.h.b16 %v3073
          %v3166 = vunpack.c.l.b16 %v3074
          %v3167 = vunpack.c.h.b16 %v3074
          %v3168 = vunpack.c.l.b16 %v3075
          %v3169 = vunpack.c.h.b16 %v3075
          %v3170 = vunpack.c.l.b16 %v3076
          %v3171 = vunpack.c.h.b16 %v3076
          %v3172 = vunpack.c.l.b16 %v3077
          %v3173 = vunpack.c.h.b16 %v3077
          %v3174 = vunpack.c.l.b16 %v3078
          %v3175 = vunpack.c.h.b16 %v3078
          %v3176 = vunpack.c.l.b16 %v3079
          %v3177 = vunpack.c.h.b16 %v3079
          %v3178 = vunpack.c.l.b16 %v3080
          %v3179 = vunpack.c.h.b16 %v3080
          %v3180 = vunpack.c.l.b16 %v3081
          %v3181 = vunpack.c.h.b16 %v3081
          %v3182 = vunpack.c.l.b16 %v3082
          %v3183 = vunpack.c.h.b16 %v3082
          %v3184 = vunpack.c.l.b16 %v3083
          %v3185 = vunpack.c.h.b16 %v3083
          %v3186 = vunpack.c.l.b16 %v3084
          %v3187 = vunpack.c.h.b16 %v3084
          %v3188 = vunpack.c.l.b16 %v3085
          %v3189 = vunpack.c.h.b16 %v3085
          %v3190 = vpack.c.b16 %v3128, %v3126
          %v3191 = vpack.c.b16 %v3129, %v3127
          %v3192 = vpack.c.b16 %v3132, %v3130
          %v3193 = vpack.c.b16 %v3133, %v3131
          %v3194 = vpack.c.b16 %v3136, %v3134
          %v3195 = vpack.c.b16 %v3137, %v3135
          %v3196 = vpack.c.b16 %v3140, %v3138
          %v3197 = vpack.c.b16 %v3141, %v3139
          %v3198 = vpack.c.b16 %v3144, %v3142
          %v3199 = vpack.c.b16 %v3145, %v3143
          %v3200 = vpack.c.b16 %v3148, %v3146
          %v3201 = vpack.c.b16 %v3149, %v3147
          %v3202 = vpack.c.b16 %v3152, %v3150
          %v3203 = vpack.c.b16 %v3153, %v3151
          %v3204 = vpack.c.b16 %v3156, %v3154
          %v3205 = vpack.c.b16 %v3157, %v3155
          %v3206 = vpack.c.b16 %v3160, %v3158
          %v3207 = vpack.c.b16 %v3161, %v3159
          %v3208 = vpack.c.b16 %v3164, %v3162
          %v3209 = vpack.c.b16 %v3165, %v3163
          %v3210 = vpack.c.b16 %v3168, %v3166
          %v3211 = vpack.c.b16 %v3169, %v3167
          %v3212 = vpack.c.b16 %v3172, %v3170
          %v3213 = vpack.c.b16 %v3173, %v3171
          %v3214 = vpack.c.b16 %v3176, %v3174
          %v3215 = vpack.c.b16 %v3177, %v3175
          %v3216 = vpack.c.b16 %v3180, %v3178
          %v3217 = vpack.c.b16 %v3181, %v3179
          %v3218 = vpack.c.b16 %v3184, %v3182
          %v3219 = vpack.c.b16 %v3185, %v3183
          %v3220 = vpack.c.b16 %v3188, %v3186
          %v3221 = vpack.c.b16 %v3189, %v3187
          %3254 = vmatprep.subr.bf16.mxu0 %v3205
          %3255 = vmatpush1.bf16.msra.mxu0 %v3204
          %3256 = vmatprep.subr.bf16.mxu0 %v3203
          %3257 = vmatpush1.bf16.msra.mxu0 %v3202
          %3258 = vmatprep.subr.bf16.mxu0 %v3201
          %3259 = vmatpush1.bf16.msra.mxu0 %v3200
          %3260 = vmatprep.subr.bf16.mxu0 %v3199
          %3261 = vmatpush1.bf16.msra.mxu0 %v3198
          %3262 = vmatprep.subr.bf16.mxu0 %v3197
          %3263 = vmatpush1.bf16.msra.mxu0 %v3196
          %3264 = vmatprep.subr.bf16.mxu0 %v3195
          %3265 = vmatpush1.bf16.msra.mxu0 %v3194
          %3266 = vmatprep.subr.bf16.mxu0 %v3193
          %3267 = vmatpush1.bf16.msra.mxu0 %v3192
          %3268 = vmatprep.subr.bf16.mxu0 %v3191
          %3269 = vmatpush1.bf16.msra.mxu0 %v3190
          %3270 = vmatprep.subr.bf16.mxu0 %v3221
          %3271 = vmatpush2.bf16.msra.mxu0 %v3220
          %3272 = vmatprep.subr.bf16.mxu0 %v3219
          %3273 = vmatpush2.bf16.msra.mxu0 %v3218
          %3274 = vmatprep.subr.bf16.mxu0 %v3217
          %3275 = vmatpush2.bf16.msra.mxu0 %v3216
          %3276 = vmatprep.subr.bf16.mxu0 %v3215
          %3277 = vmatpush2.bf16.msra.mxu0 %v3214
          %3278 = vmatprep.subr.bf16.mxu0 %v3213
          %3279 = vmatpush2.bf16.msra.mxu0 %v3212
          %3280 = vmatprep.subr.bf16.mxu0 %v3211
          %3281 = vmatpush2.bf16.msra.mxu0 %v3210
          %3282 = vmatprep.subr.bf16.mxu0 %v3209
          %3283 = vmatpush2.bf16.msra.mxu0 %v3208
          %3284 = vmatprep.subr.bf16.mxu0 %v3207
          %3285 = vmatpush2.bf16.msra.mxu0 %v3206
          %3286 = vmatprep.mubr.bf16.mxu0 %v3091
          %3287 = vmatmul.mubr.bf16.gmra.mxu0 %v3090
          %v3288 = vpop.f32.mrf.mxu0
          %v3289 = vadd.f32 0.0, %v3288
          %v3290 = vpop.f32.mrf.mxu0
          %v3291 = vadd.f32 0.0, %v3290
          %v3292 = vpop.f32.mrf.mxu0
          %v3293 = vadd.f32 0.0, %v3292
          %v3294 = vpop.f32.mrf.mxu0
          %v3295 = vadd.f32 0.0, %v3294
          %3296 = vdwg.mxu0
          %v3297 = vadd.f32 %v3037, %v3289
          %v3298 = vadd.f32 %v3038, %v3291
          %v3299 = vadd.f32 %v3039, %v3293
          %v3300 = vadd.f32 %v3040, %v3295
          %v3301 = vpack.c.b16 %v2015, %v2015
          %v3302 = vpack.c.b16 %v3041, %v3041
          %v3303 = vpack.c.b16 %v2017, %v2017
          %v3304 = vpack.c.b16 %v3043, %v3043
          %v3305 = vrot.slane %v3301, 6
          %v3306 = vrot.slane %v3305, 4
          %v3307 = vrot.slane %v3302, 6
          %v3308 = vsel %vm1234, %v3306, %v3307
          %v3309 = vrot.slane %v3303, 6
          %v3310 = vrot.slane %v3309, 4
          %v3311 = vrot.slane %v3304, 6
          %v3312 = vsel %vm1234, %v3310, %v3311
          %s3313 = scalar_lea.vmem [#allocation10], 2560
          %v3314 = vld [vmem:[%s3313] sm:$0xff]
          %v3315 = vld [vmem:[%s3313 + $0x8] sm:$0xff]
          %v3316 = vld [vmem:[%s3313 + $0x10] sm:$0xff]
          %v3317 = vld [vmem:[%s3313 + $0x18] sm:$0xff]
          %v3318 = vld [vmem:[%s3313 + $0x20] sm:$0xff]
          %v3319 = vld [vmem:[%s3313 + $0x28] sm:$0xff]
          %v3320 = vld [vmem:[%s3313 + $0x30] sm:$0xff]
          %v3321 = vld [vmem:[%s3313 + $0x38] sm:$0xff]
          %v3322 = vld [vmem:[%s3313 + $0x40] sm:$0xff]
          %v3323 = vld [vmem:[%s3313 + $0x48] sm:$0xff]
          %v3324 = vld [vmem:[%s3313 + $0x50] sm:$0xff]
          %v3325 = vld [vmem:[%s3313 + $0x58] sm:$0xff]
          %v3326 = vld [vmem:[%s3313 + $0x60] sm:$0xff]
          %v3327 = vld [vmem:[%s3313 + $0x68] sm:$0xff]
          %v3328 = vld [vmem:[%s3313 + $0x70] sm:$0xff]
          %v3329 = vld [vmem:[%s3313 + $0x78] sm:$0xff]
          %v3330 = vld [vmem:[%s3313 + $0x80] sm:$0xff]
          %v3331 = vld [vmem:[%s3313 + $0x88] sm:$0xff]
          %v3332 = vld [vmem:[%s3313 + $0x90] sm:$0xff]
          %v3333 = vld [vmem:[%s3313 + $0x98] sm:$0xff]
          %v3334 = vld [vmem:[%s3313 + $0xa0] sm:$0xff]
          %v3335 = vld [vmem:[%s3313 + $0xa8] sm:$0xff]
          %v3336 = vld [vmem:[%s3313 + $0xb0] sm:$0xff]
          %v3337 = vld [vmem:[%s3313 + $0xb8] sm:$0xff]
          %v3338 = vld [vmem:[%s3313 + $0xc0] sm:$0xff]
          %v3339 = vld [vmem:[%s3313 + $0xc8] sm:$0xff]
          %v3340 = vld [vmem:[%s3313 + $0xd0] sm:$0xff]
          %v3341 = vld [vmem:[%s3313 + $0xd8] sm:$0xff]
          %v3342 = vld [vmem:[%s3313 + $0xe0] sm:$0xff]
          %v3343 = vld [vmem:[%s3313 + $0xe8] sm:$0xff]
          %v3344 = vld [vmem:[%s3313 + $0xf0] sm:$0xff]
          %v3345 = vld [vmem:[%s3313 + $0xf8] sm:$0xff]
          %v3346 = vunpack.c.l.b16 %v3308
          %v3347 = vunpack.c.h.b16 %v3308
          %v3348 = vunpack.c.l.b16 %v3312
          %v3349 = vunpack.c.h.b16 %v3312
          %v3350 = vpack.c.b16 %v3348, %v3346
          %v3351 = vpack.c.b16 %v3349, %v3347
          %v3386 = vunpack.c.l.b16 %v3314
          %v3387 = vunpack.c.h.b16 %v3314
          %v3388 = vunpack.c.l.b16 %v3315
          %v3389 = vunpack.c.h.b16 %v3315
          %v3390 = vunpack.c.l.b16 %v3316
          %v3391 = vunpack.c.h.b16 %v3316
          %v3392 = vunpack.c.l.b16 %v3317
          %v3393 = vunpack.c.h.b16 %v3317
          %v3394 = vunpack.c.l.b16 %v3318
          %v3395 = vunpack.c.h.b16 %v3318
          %v3396 = vunpack.c.l.b16 %v3319
          %v3397 = vunpack.c.h.b16 %v3319
          %v3398 = vunpack.c.l.b16 %v3320
          %v3399 = vunpack.c.h.b16 %v3320
          %v3400 = vunpack.c.l.b16 %v3321
          %v3401 = vunpack.c.h.b16 %v3321
          %v3402 = vunpack.c.l.b16 %v3322
          %v3403 = vunpack.c.h.b16 %v3322
          %v3404 = vunpack.c.l.b16 %v3323
          %v3405 = vunpack.c.h.b16 %v3323
          %v3406 = vunpack.c.l.b16 %v3324
          %v3407 = vunpack.c.h.b16 %v3324
          %v3408 = vunpack.c.l.b16 %v3325
          %v3409 = vunpack.c.h.b16 %v3325
          %v3410 = vunpack.c.l.b16 %v3326
          %v3411 = vunpack.c.h.b16 %v3326
          %v3412 = vunpack.c.l.b16 %v3327
          %v3413 = vunpack.c.h.b16 %v3327
          %v3414 = vunpack.c.l.b16 %v3328
          %v3415 = vunpack.c.h.b16 %v3328
          %v3416 = vunpack.c.l.b16 %v3329
          %v3417 = vunpack.c.h.b16 %v3329
          %v3418 = vunpack.c.l.b16 %v3330
          %v3419 = vunpack.c.h.b16 %v3330
          %v3420 = vunpack.c.l.b16 %v3331
          %v3421 = vunpack.c.h.b16 %v3331
          %v3422 = vunpack.c.l.b16 %v3332
          %v3423 = vunpack.c.h.b16 %v3332
          %v3424 = vunpack.c.l.b16 %v3333
          %v3425 = vunpack.c.h.b16 %v3333
          %v3426 = vunpack.c.l.b16 %v3334
          %v3427 = vunpack.c.h.b16 %v3334
          %v3428 = vunpack.c.l.b16 %v3335
          %v3429 = vunpack.c.h.b16 %v3335
          %v3430 = vunpack.c.l.b16 %v3336
          %v3431 = vunpack.c.h.b16 %v3336
          %v3432 = vunpack.c.l.b16 %v3337
          %v3433 = vunpack.c.h.b16 %v3337
          %v3434 = vunpack.c.l.b16 %v3338
          %v3435 = vunpack.c.h.b16 %v3338
          %v3436 = vunpack.c.l.b16 %v3339
          %v3437 = vunpack.c.h.b16 %v3339
          %v3438 = vunpack.c.l.b16 %v3340
          %v3439 = vunpack.c.h.b16 %v3340
          %v3440 = vunpack.c.l.b16 %v3341
          %v3441 = vunpack.c.h.b16 %v3341
          %v3442 = vunpack.c.l.b16 %v3342
          %v3443 = vunpack.c.h.b16 %v3342
          %v3444 = vunpack.c.l.b16 %v3343
          %v3445 = vunpack.c.h.b16 %v3343
          %v3446 = vunpack.c.l.b16 %v3344
          %v3447 = vunpack.c.h.b16 %v3344
          %v3448 = vunpack.c.l.b16 %v3345
          %v3449 = vunpack.c.h.b16 %v3345
          %v3450 = vpack.c.b16 %v3388, %v3386
          %v3451 = vpack.c.b16 %v3389, %v3387
          %v3452 = vpack.c.b16 %v3392, %v3390
          %v3453 = vpack.c.b16 %v3393, %v3391
          %v3454 = vpack.c.b16 %v3396, %v3394
          %v3455 = vpack.c.b16 %v3397, %v3395
          %v3456 = vpack.c.b16 %v3400, %v3398
          %v3457 = vpack.c.b16 %v3401, %v3399
          %v3458 = vpack.c.b16 %v3404, %v3402
          %v3459 = vpack.c.b16 %v3405, %v3403
          %v3460 = vpack.c.b16 %v3408, %v3406
          %v3461 = vpack.c.b16 %v3409, %v3407
          %v3462 = vpack.c.b16 %v3412, %v3410
          %v3463 = vpack.c.b16 %v3413, %v3411
          %v3464 = vpack.c.b16 %v3416, %v3414
          %v3465 = vpack.c.b16 %v3417, %v3415
          %v3466 = vpack.c.b16 %v3420, %v3418
          %v3467 = vpack.c.b16 %v3421, %v3419
          %v3468 = vpack.c.b16 %v3424, %v3422
          %v3469 = vpack.c.b16 %v3425, %v3423
          %v3470 = vpack.c.b16 %v3428, %v3426
          %v3471 = vpack.c.b16 %v3429, %v3427
          %v3472 = vpack.c.b16 %v3432, %v3430
          %v3473 = vpack.c.b16 %v3433, %v3431
          %v3474 = vpack.c.b16 %v3436, %v3434
          %v3475 = vpack.c.b16 %v3437, %v3435
          %v3476 = vpack.c.b16 %v3440, %v3438
          %v3477 = vpack.c.b16 %v3441, %v3439
          %v3478 = vpack.c.b16 %v3444, %v3442
          %v3479 = vpack.c.b16 %v3445, %v3443
          %v3480 = vpack.c.b16 %v3448, %v3446
          %v3481 = vpack.c.b16 %v3449, %v3447
          %3514 = vmatprep.subr.bf16.mxu0 %v3465
          %3515 = vmatpush1.bf16.msra.mxu0 %v3464
          %3516 = vmatprep.subr.bf16.mxu0 %v3463
          %3517 = vmatpush1.bf16.msra.mxu0 %v3462
          %3518 = vmatprep.subr.bf16.mxu0 %v3461
          %3519 = vmatpush1.bf16.msra.mxu0 %v3460
          %3520 = vmatprep.subr.bf16.mxu0 %v3459
          %3521 = vmatpush1.bf16.msra.mxu0 %v3458
          %3522 = vmatprep.subr.bf16.mxu0 %v3457
          %3523 = vmatpush1.bf16.msra.mxu0 %v3456
          %3524 = vmatprep.subr.bf16.mxu0 %v3455
          %3525 = vmatpush1.bf16.msra.mxu0 %v3454
          %3526 = vmatprep.subr.bf16.mxu0 %v3453
          %3527 = vmatpush1.bf16.msra.mxu0 %v3452
          %3528 = vmatprep.subr.bf16.mxu0 %v3451
          %3529 = vmatpush1.bf16.msra.mxu0 %v3450
          %3530 = vmatprep.subr.bf16.mxu0 %v3481
          %3531 = vmatpush2.bf16.msra.mxu0 %v3480
          %3532 = vmatprep.subr.bf16.mxu0 %v3479
          %3533 = vmatpush2.bf16.msra.mxu0 %v3478
          %3534 = vmatprep.subr.bf16.mxu0 %v3477
          %3535 = vmatpush2.bf16.msra.mxu0 %v3476
          %3536 = vmatprep.subr.bf16.mxu0 %v3475
          %3537 = vmatpush2.bf16.msra.mxu0 %v3474
          %3538 = vmatprep.subr.bf16.mxu0 %v3473
          %3539 = vmatpush2.bf16.msra.mxu0 %v3472
          %3540 = vmatprep.subr.bf16.mxu0 %v3471
          %3541 = vmatpush2.bf16.msra.mxu0 %v3470
          %3542 = vmatprep.subr.bf16.mxu0 %v3469
          %3543 = vmatpush2.bf16.msra.mxu0 %v3468
          %3544 = vmatprep.subr.bf16.mxu0 %v3467
          %3545 = vmatpush2.bf16.msra.mxu0 %v3466
          %3546 = vmatprep.mubr.bf16.mxu0 %v3351
          %3547 = vmatmul.mubr.bf16.gmra.mxu0 %v3350
          %v3548 = vpop.f32.mrf.mxu0
          %v3549 = vadd.f32 0.0, %v3548
          %v3550 = vpop.f32.mrf.mxu0
          %v3551 = vadd.f32 0.0, %v3550
          %v3552 = vpop.f32.mrf.mxu0
          %v3553 = vadd.f32 0.0, %v3552
          %v3554 = vpop.f32.mrf.mxu0
          %v3555 = vadd.f32 0.0, %v3554
          %3556 = vdwg.mxu0
          %v3557 = vadd.f32 %v3297, %v3549
          %v3558 = vadd.f32 %v3298, %v3551
          %v3559 = vadd.f32 %v3299, %v3553
          %v3560 = vadd.f32 %v3300, %v3555
          %v3561 = vld [vmem:[#allocation12] sm:$0x3]
          %v3563 = vlaneseq
          %v3564 = vshrl.u32 %v3563, 7
          %v3565 = vsub.s32 0, %v3564
          %v3566 = vrot.slane %v3561, %v3565
          %v3567 = vlaneseq
          %v3568 = vshrl.u32 %v3567, 7
          %v3569 = vsub.s32 1, %v3568
          %v3570 = vrot.slane %v3561, %v3569
          %v3573 = vadd.f32 %v3557, %v3566
          %v3574 = vadd.f32 %v3558, %v3570
          %v3575 = vadd.f32 %v3559, %v3566
          %v3576 = vadd.f32 %v3560, %v3570
          %v3577 = vmax.f32 %v3573, 0.0
          %v3578 = vmax.f32 %v3574, 0.0
          %v3579 = vmax.f32 %v3575, 0.0
          %v3580 = vmax.f32 %v3576, 0.0
          %v3581 = vpack.c.bf16 %v3577, %v3577
          %v3582 = vpack.c.bf16 %v3578, %v3578
          %v3583 = vpack.c.bf16 %v3579, %v3579
          %v3584 = vpack.c.bf16 %v3580, %v3580
          %v3589 = vunpack.c.l.b16 %v3581
          %v3590 = vunpack.c.l.b16 %v3582
          %v3591 = vunpack.c.l.b16 %v3583
          %v3592 = vunpack.c.l.b16 %v3584
          %v3593 = vpack.c.b16 %v3590, %v3589
          %v3594 = vpack.c.b16 %v3592, %v3591
          %3597 = vst [vmem:[#allocation2] sm:$0xff] %v3593
          %3598 = vst [vmem:[#allocation2 + $0x8] sm:$0xff] %v3594
          %3599 = vst [vmem:[#allocation3] sm:$0x3] 0.0
        $region96: #{tpu_custom_call.1} parent=55 // pred_fallthru
          _
        %v3600 = vld [vmem:[#allocation2] sm:$0xff]
        %v3601 = vld [vmem:[#allocation2 + $0x8] sm:$0xff]
        %v3602 = vld [vmem:[%s459] sm:$0xff]
        %v3603 = vld [vmem:[%s459 + $0x8] sm:$0xff]
        %v3604 = vld [vmem:[%s459 + $0x10] sm:$0xff]
        %v3605 = vld [vmem:[%s459 + $0x18] sm:$0xff]
        %v3606 = vld [vmem:[%s459 + $0x20] sm:$0xff]
        %v3607 = vld [vmem:[%s459 + $0x28] sm:$0xff]
        %v3608 = vld [vmem:[%s459 + $0x30] sm:$0xff]
        %v3609 = vld [vmem:[%s459 + $0x38] sm:$0xff]
        %v3610 = vld [vmem:[%s459 + $0x40] sm:$0xff]
        %v3611 = vld [vmem:[%s459 + $0x48] sm:$0xff]
        %v3612 = vld [vmem:[%s459 + $0x50] sm:$0xff]
        %v3613 = vld [vmem:[%s459 + $0x58] sm:$0xff]
        %v3614 = vld [vmem:[%s459 + $0x60] sm:$0xff]
        %v3615 = vld [vmem:[%s459 + $0x68] sm:$0xff]
        %v3616 = vld [vmem:[%s459 + $0x70] sm:$0xff]
        %v3617 = vld [vmem:[%s459 + $0x78] sm:$0xff]
        %v3618 = vld [vmem:[%s459 + $0x80] sm:$0xff]
        %v3619 = vld [vmem:[%s459 + $0x88] sm:$0xff]
        %v3620 = vld [vmem:[%s459 + $0x90] sm:$0xff]
        %v3621 = vld [vmem:[%s459 + $0x98] sm:$0xff]
        %v3622 = vld [vmem:[%s459 + $0xa0] sm:$0xff]
        %v3623 = vld [vmem:[%s459 + $0xa8] sm:$0xff]
        %v3624 = vld [vmem:[%s459 + $0xb0] sm:$0xff]
        %v3625 = vld [vmem:[%s459 + $0xb8] sm:$0xff]
        %v3626 = vld [vmem:[%s459 + $0xc0] sm:$0xff]
        %v3627 = vld [vmem:[%s459 + $0xc8] sm:$0xff]
        %v3628 = vld [vmem:[%s459 + $0xd0] sm:$0xff]
        %v3629 = vld [vmem:[%s459 + $0xd8] sm:$0xff]
        %v3630 = vld [vmem:[%s459 + $0xe0] sm:$0xff]
        %v3631 = vld [vmem:[%s459 + $0xe8] sm:$0xff]
        %v3632 = vld [vmem:[%s459 + $0xf0] sm:$0xff]
        %v3633 = vld [vmem:[%s459 + $0xf8] sm:$0xff]
        %s3634 = scalar_lea.vmem %s459, 256 [#allocation13]
        %v3635 = vld [vmem:[%s3634] sm:$0xff]
        %v3636 = vld [vmem:[%s3634 + $0x8] sm:$0xff]
        %v3637 = vld [vmem:[%s3634 + $0x10] sm:$0xff]
        %v3638 = vld [vmem:[%s3634 + $0x18] sm:$0xff]
        %v3639 = vld [vmem:[%s3634 + $0x20] sm:$0xff]
        %v3640 = vld [vmem:[%s3634 + $0x28] sm:$0xff]
        %v3641 = vld [vmem:[%s3634 + $0x30] sm:$0xff]
        %v3642 = vld [vmem:[%s3634 + $0x38] sm:$0xff]
        %v3643 = vld [vmem:[%s3634 + $0x40] sm:$0xff]
        %v3644 = vld [vmem:[%s3634 + $0x48] sm:$0xff]
        %v3645 = vld [vmem:[%s3634 + $0x50] sm:$0xff]
        %v3646 = vld [vmem:[%s3634 + $0x58] sm:$0xff]
        %v3647 = vld [vmem:[%s3634 + $0x60] sm:$0xff]
        %v3648 = vld [vmem:[%s3634 + $0x68] sm:$0xff]
        %v3649 = vld [vmem:[%s3634 + $0x70] sm:$0xff]
        %v3650 = vld [vmem:[%s3634 + $0x78] sm:$0xff]
        %v3651 = vld [vmem:[%s3634 + $0x80] sm:$0xff]
        %v3652 = vld [vmem:[%s3634 + $0x88] sm:$0xff]
        %v3653 = vld [vmem:[%s3634 + $0x90] sm:$0xff]
        %v3654 = vld [vmem:[%s3634 + $0x98] sm:$0xff]
        %v3655 = vld [vmem:[%s3634 + $0xa0] sm:$0xff]
        %v3656 = vld [vmem:[%s3634 + $0xa8] sm:$0xff]
        %v3657 = vld [vmem:[%s3634 + $0xb0] sm:$0xff]
        %v3658 = vld [vmem:[%s3634 + $0xb8] sm:$0xff]
        %v3659 = vld [vmem:[%s3634 + $0xc0] sm:$0xff]
        %v3660 = vld [vmem:[%s3634 + $0xc8] sm:$0xff]
        %v3661 = vld [vmem:[%s3634 + $0xd0] sm:$0xff]
        %v3662 = vld [vmem:[%s3634 + $0xd8] sm:$0xff]
        %v3663 = vld [vmem:[%s3634 + $0xe0] sm:$0xff]
        %v3664 = vld [vmem:[%s3634 + $0xe8] sm:$0xff]
        %v3665 = vld [vmem:[%s3634 + $0xf0] sm:$0xff]
        %v3666 = vld [vmem:[%s3634 + $0xf8] sm:$0xff]
        %v3669 = vunpack.c.l.b16 %v3600
        %v3670 = vunpack.c.h.b16 %v3600
        %v3671 = vunpack.c.l.b16 %v3601
        %v3672 = vunpack.c.h.b16 %v3601
        %v3673 = vpack.c.b16 %v3669, %v3669
        %v3674 = vpack.c.b16 %v3670, %v3670
        %v3675 = vpack.c.b16 %v3671, %v3671
        %v3676 = vpack.c.b16 %v3672, %v3672
        %v3677 = vunpack.c.l.b16 %v3673
        %v3678 = vunpack.c.l.b16 %v3674
        %v3679 = vunpack.c.l.b16 %v3675
        %v3680 = vunpack.c.l.b16 %v3676
        %v3681 = vrot.slane %v3677, 1
        %vm3682 = vcmask 1041409
        %v3683 = vsel %vm3682, %v3679, %v3681
        %v3684 = vrot.slane %v3678, 1
        %v3685 = vsel %vm3682, %v3680, %v3684
        %v3686 = vpack.c.b16 %v3683, %v3683
        %v3687 = vpack.c.b16 %v3685, %v3685
        %v3722 = vunpack.c.l.b16 %v3635
        %v3723 = vunpack.c.h.b16 %v3635
        %v3724 = vunpack.c.l.b16 %v3636
        %v3725 = vunpack.c.h.b16 %v3636
        %v3726 = vunpack.c.l.b16 %v3637
        %v3727 = vunpack.c.h.b16 %v3637
        %v3728 = vunpack.c.l.b16 %v3638
        %v3729 = vunpack.c.h.b16 %v3638
        %v3730 = vunpack.c.l.b16 %v3639
        %v3731 = vunpack.c.h.b16 %v3639
        %v3732 = vunpack.c.l.b16 %v3640
        %v3733 = vunpack.c.h.b16 %v3640
        %v3734 = vunpack.c.l.b16 %v3641
        %v3735 = vunpack.c.h.b16 %v3641
        %v3736 = vunpack.c.l.b16 %v3642
        %v3737 = vunpack.c.h.b16 %v3642
        %v3738 = vunpack.c.l.b16 %v3643
        %v3739 = vunpack.c.h.b16 %v3643
        %v3740 = vunpack.c.l.b16 %v3644
        %v3741 = vunpack.c.h.b16 %v3644
        %v3742 = vunpack.c.l.b16 %v3645
        %v3743 = vunpack.c.h.b16 %v3645
        %v3744 = vunpack.c.l.b16 %v3646
        %v3745 = vunpack.c.h.b16 %v3646
        %v3746 = vunpack.c.l.b16 %v3647
        %v3747 = vunpack.c.h.b16 %v3647
        %v3748 = vunpack.c.l.b16 %v3648
        %v3749 = vunpack.c.h.b16 %v3648
        %v3750 = vunpack.c.l.b16 %v3649
        %v3751 = vunpack.c.h.b16 %v3649
        %v3752 = vunpack.c.l.b16 %v3650
        %v3753 = vunpack.c.h.b16 %v3650
        %v3754 = vunpack.c.l.b16 %v3651
        %v3755 = vunpack.c.h.b16 %v3651
        %v3756 = vunpack.c.l.b16 %v3652
        %v3757 = vunpack.c.h.b16 %v3652
        %v3758 = vunpack.c.l.b16 %v3653
        %v3759 = vunpack.c.h.b16 %v3653
        %v3760 = vunpack.c.l.b16 %v3654
        %v3761 = vunpack.c.h.b16 %v3654
        %v3762 = vunpack.c.l.b16 %v3655
        %v3763 = vunpack.c.h.b16 %v3655
        %v3764 = vunpack.c.l.b16 %v3656
        %v3765 = vunpack.c.h.b16 %v3656
        %v3766 = vunpack.c.l.b16 %v3657
        %v3767 = vunpack.c.h.b16 %v3657
        %v3768 = vunpack.c.l.b16 %v3658
        %v3769 = vunpack.c.h.b16 %v3658
        %v3770 = vunpack.c.l.b16 %v3659
        %v3771 = vunpack.c.h.b16 %v3659
        %v3772 = vunpack.c.l.b16 %v3660
        %v3773 = vunpack.c.h.b16 %v3660
        %v3774 = vunpack.c.l.b16 %v3661
        %v3775 = vunpack.c.h.b16 %v3661
        %v3776 = vunpack.c.l.b16 %v3662
        %v3777 = vunpack.c.h.b16 %v3662
        %v3778 = vunpack.c.l.b16 %v3663
        %v3779 = vunpack.c.h.b16 %v3663
        %v3780 = vunpack.c.l.b16 %v3664
        %v3781 = vunpack.c.h.b16 %v3664
        %v3782 = vunpack.c.l.b16 %v3665
        %v3783 = vunpack.c.h.b16 %v3665
        %v3784 = vunpack.c.l.b16 %v3666
        %v3785 = vunpack.c.h.b16 %v3666
        %v3786 = vpack.c.b16 %v3724, %v3722
        %v3787 = vpack.c.b16 %v3725, %v3723
        %v3788 = vpack.c.b16 %v3728, %v3726
        %v3789 = vpack.c.b16 %v3729, %v3727
        %v3790 = vpack.c.b16 %v3732, %v3730
        %v3791 = vpack.c.b16 %v3733, %v3731
        %v3792 = vpack.c.b16 %v3736, %v3734
        %v3793 = vpack.c.b16 %v3737, %v3735
        %v3794 = vpack.c.b16 %v3740, %v3738
        %v3795 = vpack.c.b16 %v3741, %v3739
        %v3796 = vpack.c.b16 %v3744, %v3742
        %v3797 = vpack.c.b16 %v3745, %v3743
        %v3798 = vpack.c.b16 %v3748, %v3746
        %v3799 = vpack.c.b16 %v3749, %v3747
        %v3800 = vpack.c.b16 %v3752, %v3750
        %v3801 = vpack.c.b16 %v3753, %v3751
        %v3802 = vpack.c.b16 %v3756, %v3754
        %v3803 = vpack.c.b16 %v3757, %v3755
        %v3804 = vpack.c.b16 %v3760, %v3758
        %v3805 = vpack.c.b16 %v3761, %v3759
        %v3806 = vpack.c.b16 %v3764, %v3762
        %v3807 = vpack.c.b16 %v3765, %v3763
        %v3808 = vpack.c.b16 %v3768, %v3766
        %v3809 = vpack.c.b16 %v3769, %v3767
        %v3810 = vpack.c.b16 %v3772, %v3770
        %v3811 = vpack.c.b16 %v3773, %v3771
        %v3812 = vpack.c.b16 %v3776, %v3774
        %v3813 = vpack.c.b16 %v3777, %v3775
        %v3814 = vpack.c.b16 %v3780, %v3778
        %v3815 = vpack.c.b16 %v3781, %v3779
        %v3816 = vpack.c.b16 %v3784, %v3782
        %v3817 = vpack.c.b16 %v3785, %v3783
        %3850 = vmatprep.subr.bf16.mxu0 %v3801
        %3851 = vmatpush1.bf16.msra.mxu0 %v3800
        %3852 = vmatprep.subr.bf16.mxu0 %v3799
        %3853 = vmatpush1.bf16.msra.mxu0 %v3798
        %3854 = vmatprep.subr.bf16.mxu0 %v3797
        %3855 = vmatpush1.bf16.msra.mxu0 %v3796
        %3856 = vmatprep.subr.bf16.mxu0 %v3795
        %3857 = vmatpush1.bf16.msra.mxu0 %v3794
        %3858 = vmatprep.subr.bf16.mxu0 %v3793
        %3859 = vmatpush1.bf16.msra.mxu0 %v3792
        %3860 = vmatprep.subr.bf16.mxu0 %v3791
        %3861 = vmatpush1.bf16.msra.mxu0 %v3790
        %3862 = vmatprep.subr.bf16.mxu0 %v3789
        %3863 = vmatpush1.bf16.msra.mxu0 %v3788
        %3864 = vmatprep.subr.bf16.mxu0 %v3787
        %3865 = vmatpush1.bf16.msra.mxu0 %v3786
        %3866 = vmatprep.subr.bf16.mxu0 %v3817
        %3867 = vmatpush2.bf16.msra.mxu0 %v3816
        %3868 = vmatprep.subr.bf16.mxu0 %v3815
        %3869 = vmatpush2.bf16.msra.mxu0 %v3814
        %3870 = vmatprep.subr.bf16.mxu0 %v3813
        %3871 = vmatpush2.bf16.msra.mxu0 %v3812
        %3872 = vmatprep.subr.bf16.mxu0 %v3811
        %3873 = vmatpush2.bf16.msra.mxu0 %v3810
        %3874 = vmatprep.subr.bf16.mxu0 %v3809
        %3875 = vmatpush2.bf16.msra.mxu0 %v3808
        %3876 = vmatprep.subr.bf16.mxu0 %v3807
        %3877 = vmatpush2.bf16.msra.mxu0 %v3806
        %3878 = vmatprep.subr.bf16.mxu0 %v3805
        %3879 = vmatpush2.bf16.msra.mxu0 %v3804
        %3880 = vmatprep.subr.bf16.mxu0 %v3803
        %3881 = vmatpush2.bf16.msra.mxu0 %v3802
        %3882 = vmatprep.mubr.bf16.mxu0 %v3687
        %3883 = vmatmul.mubr.bf16.gmra.mxu0 %v3686
        %v3884 = vpop.f32.mrf.mxu0
        %v3885 = vadd.f32 0.0, %v3884
        %v3886 = vpop.f32.mrf.mxu0
        %v3887 = vadd.f32 0.0, %v3886
        %v3888 = vpop.f32.mrf.mxu0
        %v3889 = vpop.f32.mrf.mxu0
        %3890 = vdwg.mxu0
        %v3891 = vrot.slane %v3679, 7
        %v3892 = vsel %vm3682, %v3891, %v3677
        %v3893 = vrot.slane %v3680, 7
        %v3894 = vsel %vm3682, %v3893, %v3678
        %v3895 = vpack.c.b16 %v3892, %v3892
        %v3896 = vpack.c.b16 %v3894, %v3894
        %v3931 = vunpack.c.l.b16 %v3602
        %v3932 = vunpack.c.h.b16 %v3602
        %v3933 = vunpack.c.l.b16 %v3603
        %v3934 = vunpack.c.h.b16 %v3603
        %v3935 = vunpack.c.l.b16 %v3604
        %v3936 = vunpack.c.h.b16 %v3604
        %v3937 = vunpack.c.l.b16 %v3605
        %v3938 = vunpack.c.h.b16 %v3605
        %v3939 = vunpack.c.l.b16 %v3606
        %v3940 = vunpack.c.h.b16 %v3606
        %v3941 = vunpack.c.l.b16 %v3607
        %v3942 = vunpack.c.h.b16 %v3607
        %v3943 = vunpack.c.l.b16 %v3608
        %v3944 = vunpack.c.h.b16 %v3608
        %v3945 = vunpack.c.l.b16 %v3609
        %v3946 = vunpack.c.h.b16 %v3609
        %v3947 = vunpack.c.l.b16 %v3610
        %v3948 = vunpack.c.h.b16 %v3610
        %v3949 = vunpack.c.l.b16 %v3611
        %v3950 = vunpack.c.h.b16 %v3611
        %v3951 = vunpack.c.l.b16 %v3612
        %v3952 = vunpack.c.h.b16 %v3612
        %v3953 = vunpack.c.l.b16 %v3613
        %v3954 = vunpack.c.h.b16 %v3613
        %v3955 = vunpack.c.l.b16 %v3614
        %v3956 = vunpack.c.h.b16 %v3614
        %v3957 = vunpack.c.l.b16 %v3615
        %v3958 = vunpack.c.h.b16 %v3615
        %v3959 = vunpack.c.l.b16 %v3616
        %v3960 = vunpack.c.h.b16 %v3616
        %v3961 = vunpack.c.l.b16 %v3617
        %v3962 = vunpack.c.h.b16 %v3617
        %v3963 = vunpack.c.l.b16 %v3618
        %v3964 = vunpack.c.h.b16 %v3618
        %v3965 = vunpack.c.l.b16 %v3619
        %v3966 = vunpack.c.h.b16 %v3619
        %v3967 = vunpack.c.l.b16 %v3620
        %v3968 = vunpack.c.h.b16 %v3620
        %v3969 = vunpack.c.l.b16 %v3621
        %v3970 = vunpack.c.h.b16 %v3621
        %v3971 = vunpack.c.l.b16 %v3622
        %v3972 = vunpack.c.h.b16 %v3622
        %v3973 = vunpack.c.l.b16 %v3623
        %v3974 = vunpack.c.h.b16 %v3623
        %v3975 = vunpack.c.l.b16 %v3624
        %v3976 = vunpack.c.h.b16 %v3624
        %v3977 = vunpack.c.l.b16 %v3625
        %v3978 = vunpack.c.h.b16 %v3625
        %v3979 = vunpack.c.l.b16 %v3626
        %v3980 = vunpack.c.h.b16 %v3626
        %v3981 = vunpack.c.l.b16 %v3627
        %v3982 = vunpack.c.h.b16 %v3627
        %v3983 = vunpack.c.l.b16 %v3628
        %v3984 = vunpack.c.h.b16 %v3628
        %v3985 = vunpack.c.l.b16 %v3629
        %v3986 = vunpack.c.h.b16 %v3629
        %v3987 = vunpack.c.l.b16 %v3630
        %v3988 = vunpack.c.h.b16 %v3630
        %v3989 = vunpack.c.l.b16 %v3631
        %v3990 = vunpack.c.h.b16 %v3631
        %v3991 = vunpack.c.l.b16 %v3632
        %v3992 = vunpack.c.h.b16 %v3632
        %v3993 = vunpack.c.l.b16 %v3633
        %v3994 = vunpack.c.h.b16 %v3633
        %v3995 = vpack.c.b16 %v3933, %v3931
        %v3996 = vpack.c.b16 %v3934, %v3932
        %v3997 = vpack.c.b16 %v3937, %v3935
        %v3998 = vpack.c.b16 %v3938, %v3936
        %v3999 = vpack.c.b16 %v3941, %v3939
        %v4000 = vpack.c.b16 %v3942, %v3940
        %v4001 = vpack.c.b16 %v3945, %v3943
        %v4002 = vpack.c.b16 %v3946, %v3944
        %v4003 = vpack.c.b16 %v3949, %v3947
        %v4004 = vpack.c.b16 %v3950, %v3948
        %v4005 = vpack.c.b16 %v3953, %v3951
        %v4006 = vpack.c.b16 %v3954, %v3952
        %v4007 = vpack.c.b16 %v3957, %v3955
        %v4008 = vpack.c.b16 %v3958, %v3956
        %v4009 = vpack.c.b16 %v3961, %v3959
        %v4010 = vpack.c.b16 %v3962, %v3960
        %v4011 = vpack.c.b16 %v3965, %v3963
        %v4012 = vpack.c.b16 %v3966, %v3964
        %v4013 = vpack.c.b16 %v3969, %v3967
        %v4014 = vpack.c.b16 %v3970, %v3968
        %v4015 = vpack.c.b16 %v3973, %v3971
        %v4016 = vpack.c.b16 %v3974, %v3972
        %v4017 = vpack.c.b16 %v3977, %v3975
        %v4018 = vpack.c.b16 %v3978, %v3976
        %v4019 = vpack.c.b16 %v3981, %v3979
        %v4020 = vpack.c.b16 %v3982, %v3980
        %v4021 = vpack.c.b16 %v3985, %v3983
        %v4022 = vpack.c.b16 %v3986, %v3984
        %v4023 = vpack.c.b16 %v3989, %v3987
        %v4024 = vpack.c.b16 %v3990, %v3988
        %v4025 = vpack.c.b16 %v3993, %v3991
        %v4026 = vpack.c.b16 %v3994, %v3992
        %4059 = vmatprep.subr.bf16.mxu0 %v4010
        %4060 = vmatpush1.bf16.msra.mxu0 %v4009
        %4061 = vmatprep.subr.bf16.mxu0 %v4008
        %4062 = vmatpush1.bf16.msra.mxu0 %v4007
        %4063 = vmatprep.subr.bf16.mxu0 %v4006
        %4064 = vmatpush1.bf16.msra.mxu0 %v4005
        %4065 = vmatprep.subr.bf16.mxu0 %v4004
        %4066 = vmatpush1.bf16.msra.mxu0 %v4003
        %4067 = vmatprep.subr.bf16.mxu0 %v4002
        %4068 = vmatpush1.bf16.msra.mxu0 %v4001
        %4069 = vmatprep.subr.bf16.mxu0 %v4000
        %4070 = vmatpush1.bf16.msra.mxu0 %v3999
        %4071 = vmatprep.subr.bf16.mxu0 %v3998
        %4072 = vmatpush1.bf16.msra.mxu0 %v3997
        %4073 = vmatprep.subr.bf16.mxu0 %v3996
        %4074 = vmatpush1.bf16.msra.mxu0 %v3995
        %4075 = vmatprep.subr.bf16.mxu0 %v4026
        %4076 = vmatpush2.bf16.msra.mxu0 %v4025
        %4077 = vmatprep.subr.bf16.mxu0 %v4024
        %4078 = vmatpush2.bf16.msra.mxu0 %v4023
        %4079 = vmatprep.subr.bf16.mxu0 %v4022
        %4080 = vmatpush2.bf16.msra.mxu0 %v4021
        %4081 = vmatprep.subr.bf16.mxu0 %v4020
        %4082 = vmatpush2.bf16.msra.mxu0 %v4019
        %4083 = vmatprep.subr.bf16.mxu0 %v4018
        %4084 = vmatpush2.bf16.msra.mxu0 %v4017
        %4085 = vmatprep.subr.bf16.mxu0 %v4016
        %4086 = vmatpush2.bf16.msra.mxu0 %v4015
        %4087 = vmatprep.subr.bf16.mxu0 %v4014
        %4088 = vmatpush2.bf16.msra.mxu0 %v4013
        %4089 = vmatprep.subr.bf16.mxu0 %v4012
        %4090 = vmatpush2.bf16.msra.mxu0 %v4011
        %4091 = vmatprep.mubr.bf16.mxu0 %v3896
        %4092 = vmatmul.mubr.bf16.gmra.mxu0 %v3895
        %v4093 = vpop.f32.mrf.mxu0
        %v4094 = vadd.f32 %v3885, %v4093
        %v4095 = vpop.f32.mrf.mxu0
        %v4096 = vadd.f32 %v3887, %v4095
        %v4097 = vpop.f32.mrf.mxu0
        %v4098 = vpop.f32.mrf.mxu0
        %4099 = vdwg.mxu0
        %s4100 = scalar_lea.vmem %s459, 512 [#allocation13]
        %v4101 = vld [vmem:[%s4100] sm:$0xff]
        %v4102 = vld [vmem:[%s4100 + $0x8] sm:$0xff]
        %v4103 = vld [vmem:[%s4100 + $0x10] sm:$0xff]
        %v4104 = vld [vmem:[%s4100 + $0x18] sm:$0xff]
        %v4105 = vld [vmem:[%s4100 + $0x20] sm:$0xff]
        %v4106 = vld [vmem:[%s4100 + $0x28] sm:$0xff]
        %v4107 = vld [vmem:[%s4100 + $0x30] sm:$0xff]
        %v4108 = vld [vmem:[%s4100 + $0x38] sm:$0xff]
        %v4109 = vld [vmem:[%s4100 + $0x40] sm:$0xff]
        %v4110 = vld [vmem:[%s4100 + $0x48] sm:$0xff]
        %v4111 = vld [vmem:[%s4100 + $0x50] sm:$0xff]
        %v4112 = vld [vmem:[%s4100 + $0x58] sm:$0xff]
        %v4113 = vld [vmem:[%s4100 + $0x60] sm:$0xff]
        %v4114 = vld [vmem:[%s4100 + $0x68] sm:$0xff]
        %v4115 = vld [vmem:[%s4100 + $0x70] sm:$0xff]
        %v4116 = vld [vmem:[%s4100 + $0x78] sm:$0xff]
        %v4117 = vld [vmem:[%s4100 + $0x80] sm:$0xff]
        %v4118 = vld [vmem:[%s4100 + $0x88] sm:$0xff]
        %v4119 = vld [vmem:[%s4100 + $0x90] sm:$0xff]
        %v4120 = vld [vmem:[%s4100 + $0x98] sm:$0xff]
        %v4121 = vld [vmem:[%s4100 + $0xa0] sm:$0xff]
        %v4122 = vld [vmem:[%s4100 + $0xa8] sm:$0xff]
        %v4123 = vld [vmem:[%s4100 + $0xb0] sm:$0xff]
        %v4124 = vld [vmem:[%s4100 + $0xb8] sm:$0xff]
        %v4125 = vld [vmem:[%s4100 + $0xc0] sm:$0xff]
        %v4126 = vld [vmem:[%s4100 + $0xc8] sm:$0xff]
        %v4127 = vld [vmem:[%s4100 + $0xd0] sm:$0xff]
        %v4128 = vld [vmem:[%s4100 + $0xd8] sm:$0xff]
        %v4129 = vld [vmem:[%s4100 + $0xe0] sm:$0xff]
        %v4130 = vld [vmem:[%s4100 + $0xe8] sm:$0xff]
        %v4131 = vld [vmem:[%s4100 + $0xf0] sm:$0xff]
        %v4132 = vld [vmem:[%s4100 + $0xf8] sm:$0xff]
        %v4133 = vrot.slane %v3677, 2
        %v4134 = vrot.slane %v3679, 1
        %v4135 = vsel %vm3682, %v4134, %v4133
        %v4136 = vrot.slane %v3678, 2
        %v4137 = vrot.slane %v3680, 1
        %v4138 = vsel %vm3682, %v4137, %v4136
        %v4139 = vpack.c.b16 %v4135, %v4135
        %v4140 = vpack.c.b16 %v4138, %v4138
        %v4175 = vunpack.c.l.b16 %v4101
        %v4176 = vunpack.c.h.b16 %v4101
        %v4177 = vunpack.c.l.b16 %v4102
        %v4178 = vunpack.c.h.b16 %v4102
        %v4179 = vunpack.c.l.b16 %v4103
        %v4180 = vunpack.c.h.b16 %v4103
        %v4181 = vunpack.c.l.b16 %v4104
        %v4182 = vunpack.c.h.b16 %v4104
        %v4183 = vunpack.c.l.b16 %v4105
        %v4184 = vunpack.c.h.b16 %v4105
        %v4185 = vunpack.c.l.b16 %v4106
        %v4186 = vunpack.c.h.b16 %v4106
        %v4187 = vunpack.c.l.b16 %v4107
        %v4188 = vunpack.c.h.b16 %v4107
        %v4189 = vunpack.c.l.b16 %v4108
        %v4190 = vunpack.c.h.b16 %v4108
        %v4191 = vunpack.c.l.b16 %v4109
        %v4192 = vunpack.c.h.b16 %v4109
        %v4193 = vunpack.c.l.b16 %v4110
        %v4194 = vunpack.c.h.b16 %v4110
        %v4195 = vunpack.c.l.b16 %v4111
        %v4196 = vunpack.c.h.b16 %v4111
        %v4197 = vunpack.c.l.b16 %v4112
        %v4198 = vunpack.c.h.b16 %v4112
        %v4199 = vunpack.c.l.b16 %v4113
        %v4200 = vunpack.c.h.b16 %v4113
        %v4201 = vunpack.c.l.b16 %v4114
        %v4202 = vunpack.c.h.b16 %v4114
        %v4203 = vunpack.c.l.b16 %v4115
        %v4204 = vunpack.c.h.b16 %v4115
        %v4205 = vunpack.c.l.b16 %v4116
        %v4206 = vunpack.c.h.b16 %v4116
        %v4207 = vunpack.c.l.b16 %v4117
        %v4208 = vunpack.c.h.b16 %v4117
        %v4209 = vunpack.c.l.b16 %v4118
        %v4210 = vunpack.c.h.b16 %v4118
        %v4211 = vunpack.c.l.b16 %v4119
        %v4212 = vunpack.c.h.b16 %v4119
        %v4213 = vunpack.c.l.b16 %v4120
        %v4214 = vunpack.c.h.b16 %v4120
        %v4215 = vunpack.c.l.b16 %v4121
        %v4216 = vunpack.c.h.b16 %v4121
        %v4217 = vunpack.c.l.b16 %v4122
        %v4218 = vunpack.c.h.b16 %v4122
        %v4219 = vunpack.c.l.b16 %v4123
        %v4220 = vunpack.c.h.b16 %v4123
        %v4221 = vunpack.c.l.b16 %v4124
        %v4222 = vunpack.c.h.b16 %v4124
        %v4223 = vunpack.c.l.b16 %v4125
        %v4224 = vunpack.c.h.b16 %v4125
        %v4225 = vunpack.c.l.b16 %v4126
        %v4226 = vunpack.c.h.b16 %v4126
        %v4227 = vunpack.c.l.b16 %v4127
        %v4228 = vunpack.c.h.b16 %v4127
        %v4229 = vunpack.c.l.b16 %v4128
        %v4230 = vunpack.c.h.b16 %v4128
        %v4231 = vunpack.c.l.b16 %v4129
        %v4232 = vunpack.c.h.b16 %v4129
        %v4233 = vunpack.c.l.b16 %v4130
        %v4234 = vunpack.c.h.b16 %v4130
        %v4235 = vunpack.c.l.b16 %v4131
        %v4236 = vunpack.c.h.b16 %v4131
        %v4237 = vunpack.c.l.b16 %v4132
        %v4238 = vunpack.c.h.b16 %v4132
        %v4239 = vpack.c.b16 %v4177, %v4175
        %v4240 = vpack.c.b16 %v4178, %v4176
        %v4241 = vpack.c.b16 %v4181, %v4179
        %v4242 = vpack.c.b16 %v4182, %v4180
        %v4243 = vpack.c.b16 %v4185, %v4183
        %v4244 = vpack.c.b16 %v4186, %v4184
        %v4245 = vpack.c.b16 %v4189, %v4187
        %v4246 = vpack.c.b16 %v4190, %v4188
        %v4247 = vpack.c.b16 %v4193, %v4191
        %v4248 = vpack.c.b16 %v4194, %v4192
        %v4249 = vpack.c.b16 %v4197, %v4195
        %v4250 = vpack.c.b16 %v4198, %v4196
        %v4251 = vpack.c.b16 %v4201, %v4199
        %v4252 = vpack.c.b16 %v4202, %v4200
        %v4253 = vpack.c.b16 %v4205, %v4203
        %v4254 = vpack.c.b16 %v4206, %v4204
        %v4255 = vpack.c.b16 %v4209, %v4207
        %v4256 = vpack.c.b16 %v4210, %v4208
        %v4257 = vpack.c.b16 %v4213, %v4211
        %v4258 = vpack.c.b16 %v4214, %v4212
        %v4259 = vpack.c.b16 %v4217, %v4215
        %v4260 = vpack.c.b16 %v4218, %v4216
        %v4261 = vpack.c.b16 %v4221, %v4219
        %v4262 = vpack.c.b16 %v4222, %v4220
        %v4263 = vpack.c.b16 %v4225, %v4223
        %v4264 = vpack.c.b16 %v4226, %v4224
        %v4265 = vpack.c.b16 %v4229, %v4227
        %v4266 = vpack.c.b16 %v4230, %v4228
        %v4267 = vpack.c.b16 %v4233, %v4231
        %v4268 = vpack.c.b16 %v4234, %v4232
        %v4269 = vpack.c.b16 %v4237, %v4235
        %v4270 = vpack.c.b16 %v4238, %v4236
        %4303 = vmatprep.subr.bf16.mxu0 %v4254
        %4304 = vmatpush1.bf16.msra.mxu0 %v4253
        %4305 = vmatprep.subr.bf16.mxu0 %v4252
        %4306 = vmatpush1.bf16.msra.mxu0 %v4251
        %4307 = vmatprep.subr.bf16.mxu0 %v4250
        %4308 = vmatpush1.bf16.msra.mxu0 %v4249
        %4309 = vmatprep.subr.bf16.mxu0 %v4248
        %4310 = vmatpush1.bf16.msra.mxu0 %v4247
        %4311 = vmatprep.subr.bf16.mxu0 %v4246
        %4312 = vmatpush1.bf16.msra.mxu0 %v4245
        %4313 = vmatprep.subr.bf16.mxu0 %v4244
        %4314 = vmatpush1.bf16.msra.mxu0 %v4243
        %4315 = vmatprep.subr.bf16.mxu0 %v4242
        %4316 = vmatpush1.bf16.msra.mxu0 %v4241
        %4317 = vmatprep.subr.bf16.mxu0 %v4240
        %4318 = vmatpush1.bf16.msra.mxu0 %v4239
        %4319 = vmatprep.subr.bf16.mxu0 %v4270
        %4320 = vmatpush2.bf16.msra.mxu0 %v4269
        %4321 = vmatprep.subr.bf16.mxu0 %v4268
        %4322 = vmatpush2.bf16.msra.mxu0 %v4267
        %4323 = vmatprep.subr.bf16.mxu0 %v4266
        %4324 = vmatpush2.bf16.msra.mxu0 %v4265
        %4325 = vmatprep.subr.bf16.mxu0 %v4264
        %4326 = vmatpush2.bf16.msra.mxu0 %v4263
        %4327 = vmatprep.subr.bf16.mxu0 %v4262
        %4328 = vmatpush2.bf16.msra.mxu0 %v4261
        %4329 = vmatprep.subr.bf16.mxu0 %v4260
        %4330 = vmatpush2.bf16.msra.mxu0 %v4259
        %4331 = vmatprep.subr.bf16.mxu0 %v4258
        %4332 = vmatpush2.bf16.msra.mxu0 %v4257
        %4333 = vmatprep.subr.bf16.mxu0 %v4256
        %4334 = vmatpush2.bf16.msra.mxu0 %v4255
        %4335 = vmatprep.mubr.bf16.mxu0 %v4140
        %4336 = vmatmul.mubr.bf16.gmra.mxu0 %v4139
        %v4337 = vpop.f32.mrf.mxu0
        %v4338 = vadd.f32 0.0, %v4337
        %v4339 = vpop.f32.mrf.mxu0
        %v4340 = vadd.f32 0.0, %v4339
        %v4341 = vpop.f32.mrf.mxu0
        %v4342 = vpop.f32.mrf.mxu0
        %4343 = vdwg.mxu0
        %v4344 = vadd.f32 %v4094, %v4338
        %v4345 = vadd.f32 %v4096, %v4340
        %s4346 = scalar_lea.vmem %s459, 768 [#allocation13]
        %v4347 = vld [vmem:[%s4346] sm:$0xff]
        %v4348 = vld [vmem:[%s4346 + $0x8] sm:$0xff]
        %v4349 = vld [vmem:[%s4346 + $0x10] sm:$0xff]
        %v4350 = vld [vmem:[%s4346 + $0x18] sm:$0xff]
        %v4351 = vld [vmem:[%s4346 + $0x20] sm:$0xff]
        %v4352 = vld [vmem:[%s4346 + $0x28] sm:$0xff]
        %v4353 = vld [vmem:[%s4346 + $0x30] sm:$0xff]
        %v4354 = vld [vmem:[%s4346 + $0x38] sm:$0xff]
        %v4355 = vld [vmem:[%s4346 + $0x40] sm:$0xff]
        %v4356 = vld [vmem:[%s4346 + $0x48] sm:$0xff]
        %v4357 = vld [vmem:[%s4346 + $0x50] sm:$0xff]
        %v4358 = vld [vmem:[%s4346 + $0x58] sm:$0xff]
        %v4359 = vld [vmem:[%s4346 + $0x60] sm:$0xff]
        %v4360 = vld [vmem:[%s4346 + $0x68] sm:$0xff]
        %v4361 = vld [vmem:[%s4346 + $0x70] sm:$0xff]
        %v4362 = vld [vmem:[%s4346 + $0x78] sm:$0xff]
        %v4363 = vld [vmem:[%s4346 + $0x80] sm:$0xff]
        %v4364 = vld [vmem:[%s4346 + $0x88] sm:$0xff]
        %v4365 = vld [vmem:[%s4346 + $0x90] sm:$0xff]
        %v4366 = vld [vmem:[%s4346 + $0x98] sm:$0xff]
        %v4367 = vld [vmem:[%s4346 + $0xa0] sm:$0xff]
        %v4368 = vld [vmem:[%s4346 + $0xa8] sm:$0xff]
        %v4369 = vld [vmem:[%s4346 + $0xb0] sm:$0xff]
        %v4370 = vld [vmem:[%s4346 + $0xb8] sm:$0xff]
        %v4371 = vld [vmem:[%s4346 + $0xc0] sm:$0xff]
        %v4372 = vld [vmem:[%s4346 + $0xc8] sm:$0xff]
        %v4373 = vld [vmem:[%s4346 + $0xd0] sm:$0xff]
        %v4374 = vld [vmem:[%s4346 + $0xd8] sm:$0xff]
        %v4375 = vld [vmem:[%s4346 + $0xe0] sm:$0xff]
        %v4376 = vld [vmem:[%s4346 + $0xe8] sm:$0xff]
        %v4377 = vld [vmem:[%s4346 + $0xf0] sm:$0xff]
        %v4378 = vld [vmem:[%s4346 + $0xf8] sm:$0xff]
        %v4379 = vrot.slane %v3677, 3
        %v4380 = vrot.slane %v3679, 2
        %v4381 = vsel %vm3682, %v4380, %v4379
        %v4382 = vrot.slane %v3678, 3
        %v4383 = vrot.slane %v3680, 2
        %v4384 = vsel %vm3682, %v4383, %v4382
        %v4385 = vpack.c.b16 %v4381, %v4381
        %v4386 = vpack.c.b16 %v4384, %v4384
        %v4421 = vunpack.c.l.b16 %v4347
        %v4422 = vunpack.c.h.b16 %v4347
        %v4423 = vunpack.c.l.b16 %v4348
        %v4424 = vunpack.c.h.b16 %v4348
        %v4425 = vunpack.c.l.b16 %v4349
        %v4426 = vunpack.c.h.b16 %v4349
        %v4427 = vunpack.c.l.b16 %v4350
        %v4428 = vunpack.c.h.b16 %v4350
        %v4429 = vunpack.c.l.b16 %v4351
        %v4430 = vunpack.c.h.b16 %v4351
        %v4431 = vunpack.c.l.b16 %v4352
        %v4432 = vunpack.c.h.b16 %v4352
        %v4433 = vunpack.c.l.b16 %v4353
        %v4434 = vunpack.c.h.b16 %v4353
        %v4435 = vunpack.c.l.b16 %v4354
        %v4436 = vunpack.c.h.b16 %v4354
        %v4437 = vunpack.c.l.b16 %v4355
        %v4438 = vunpack.c.h.b16 %v4355
        %v4439 = vunpack.c.l.b16 %v4356
        %v4440 = vunpack.c.h.b16 %v4356
        %v4441 = vunpack.c.l.b16 %v4357
        %v4442 = vunpack.c.h.b16 %v4357
        %v4443 = vunpack.c.l.b16 %v4358
        %v4444 = vunpack.c.h.b16 %v4358
        %v4445 = vunpack.c.l.b16 %v4359
        %v4446 = vunpack.c.h.b16 %v4359
        %v4447 = vunpack.c.l.b16 %v4360
        %v4448 = vunpack.c.h.b16 %v4360
        %v4449 = vunpack.c.l.b16 %v4361
        %v4450 = vunpack.c.h.b16 %v4361
        %v4451 = vunpack.c.l.b16 %v4362
        %v4452 = vunpack.c.h.b16 %v4362
        %v4453 = vunpack.c.l.b16 %v4363
        %v4454 = vunpack.c.h.b16 %v4363
        %v4455 = vunpack.c.l.b16 %v4364
        %v4456 = vunpack.c.h.b16 %v4364
        %v4457 = vunpack.c.l.b16 %v4365
        %v4458 = vunpack.c.h.b16 %v4365
        %v4459 = vunpack.c.l.b16 %v4366
        %v4460 = vunpack.c.h.b16 %v4366
        %v4461 = vunpack.c.l.b16 %v4367
        %v4462 = vunpack.c.h.b16 %v4367
        %v4463 = vunpack.c.l.b16 %v4368
        %v4464 = vunpack.c.h.b16 %v4368
        %v4465 = vunpack.c.l.b16 %v4369
        %v4466 = vunpack.c.h.b16 %v4369
        %v4467 = vunpack.c.l.b16 %v4370
        %v4468 = vunpack.c.h.b16 %v4370
        %v4469 = vunpack.c.l.b16 %v4371
        %v4470 = vunpack.c.h.b16 %v4371
        %v4471 = vunpack.c.l.b16 %v4372
        %v4472 = vunpack.c.h.b16 %v4372
        %v4473 = vunpack.c.l.b16 %v4373
        %v4474 = vunpack.c.h.b16 %v4373
        %v4475 = vunpack.c.l.b16 %v4374
        %v4476 = vunpack.c.h.b16 %v4374
        %v4477 = vunpack.c.l.b16 %v4375
        %v4478 = vunpack.c.h.b16 %v4375
        %v4479 = vunpack.c.l.b16 %v4376
        %v4480 = vunpack.c.h.b16 %v4376
        %v4481 = vunpack.c.l.b16 %v4377
        %v4482 = vunpack.c.h.b16 %v4377
        %v4483 = vunpack.c.l.b16 %v4378
        %v4484 = vunpack.c.h.b16 %v4378
        %v4485 = vpack.c.b16 %v4423, %v4421
        %v4486 = vpack.c.b16 %v4424, %v4422
        %v4487 = vpack.c.b16 %v4427, %v4425
        %v4488 = vpack.c.b16 %v4428, %v4426
        %v4489 = vpack.c.b16 %v4431, %v4429
        %v4490 = vpack.c.b16 %v4432, %v4430
        %v4491 = vpack.c.b16 %v4435, %v4433
        %v4492 = vpack.c.b16 %v4436, %v4434
        %v4493 = vpack.c.b16 %v4439, %v4437
        %v4494 = vpack.c.b16 %v4440, %v4438
        %v4495 = vpack.c.b16 %v4443, %v4441
        %v4496 = vpack.c.b16 %v4444, %v4442
        %v4497 = vpack.c.b16 %v4447, %v4445
        %v4498 = vpack.c.b16 %v4448, %v4446
        %v4499 = vpack.c.b16 %v4451, %v4449
        %v4500 = vpack.c.b16 %v4452, %v4450
        %v4501 = vpack.c.b16 %v4455, %v4453
        %v4502 = vpack.c.b16 %v4456, %v4454
        %v4503 = vpack.c.b16 %v4459, %v4457
        %v4504 = vpack.c.b16 %v4460, %v4458
        %v4505 = vpack.c.b16 %v4463, %v4461
        %v4506 = vpack.c.b16 %v4464, %v4462
        %v4507 = vpack.c.b16 %v4467, %v4465
        %v4508 = vpack.c.b16 %v4468, %v4466
        %v4509 = vpack.c.b16 %v4471, %v4469
        %v4510 = vpack.c.b16 %v4472, %v4470
        %v4511 = vpack.c.b16 %v4475, %v4473
        %v4512 = vpack.c.b16 %v4476, %v4474
        %v4513 = vpack.c.b16 %v4479, %v4477
        %v4514 = vpack.c.b16 %v4480, %v4478
        %v4515 = vpack.c.b16 %v4483, %v4481
        %v4516 = vpack.c.b16 %v4484, %v4482
        %4549 = vmatprep.subr.bf16.mxu0 %v4500
        %4550 = vmatpush1.bf16.msra.mxu0 %v4499
        %4551 = vmatprep.subr.bf16.mxu0 %v4498
        %4552 = vmatpush1.bf16.msra.mxu0 %v4497
        %4553 = vmatprep.subr.bf16.mxu0 %v4496
        %4554 = vmatpush1.bf16.msra.mxu0 %v4495
        %4555 = vmatprep.subr.bf16.mxu0 %v4494
        %4556 = vmatpush1.bf16.msra.mxu0 %v4493
        %4557 = vmatprep.subr.bf16.mxu0 %v4492
        %4558 = vmatpush1.bf16.msra.mxu0 %v4491
        %4559 = vmatprep.subr.bf16.mxu0 %v4490
        %4560 = vmatpush1.bf16.msra.mxu0 %v4489
        %4561 = vmatprep.subr.bf16.mxu0 %v4488
        %4562 = vmatpush1.bf16.msra.mxu0 %v4487
        %4563 = vmatprep.subr.bf16.mxu0 %v4486
        %4564 = vmatpush1.bf16.msra.mxu0 %v4485
        %4565 = vmatprep.subr.bf16.mxu0 %v4516
        %4566 = vmatpush2.bf16.msra.mxu0 %v4515
        %4567 = vmatprep.subr.bf16.mxu0 %v4514
        %4568 = vmatpush2.bf16.msra.mxu0 %v4513
        %4569 = vmatprep.subr.bf16.mxu0 %v4512
        %4570 = vmatpush2.bf16.msra.mxu0 %v4511
        %4571 = vmatprep.subr.bf16.mxu0 %v4510
        %4572 = vmatpush2.bf16.msra.mxu0 %v4509
        %4573 = vmatprep.subr.bf16.mxu0 %v4508
        %4574 = vmatpush2.bf16.msra.mxu0 %v4507
        %4575 = vmatprep.subr.bf16.mxu0 %v4506
        %4576 = vmatpush2.bf16.msra.mxu0 %v4505
        %4577 = vmatprep.subr.bf16.mxu0 %v4504
        %4578 = vmatpush2.bf16.msra.mxu0 %v4503
        %4579 = vmatprep.subr.bf16.mxu0 %v4502
        %4580 = vmatpush2.bf16.msra.mxu0 %v4501
        %4581 = vmatprep.mubr.bf16.mxu0 %v4386
        %4582 = vmatmul.mubr.bf16.gmra.mxu0 %v4385
        %v4583 = vpop.f32.mrf.mxu0
        %v4584 = vadd.f32 0.0, %v4583
        %v4585 = vpop.f32.mrf.mxu0
        %v4586 = vadd.f32 0.0, %v4585
        %v4587 = vpop.f32.mrf.mxu0
        %v4588 = vpop.f32.mrf.mxu0
        %4589 = vdwg.mxu0
        %v4590 = vadd.f32 %v4344, %v4584
        %v4591 = vadd.f32 %v4345, %v4586
        %s4592 = scalar_lea.vmem %s459, 1024 [#allocation13]
        %v4593 = vld [vmem:[%s4592] sm:$0xff]
        %v4594 = vld [vmem:[%s4592 + $0x8] sm:$0xff]
        %v4595 = vld [vmem:[%s4592 + $0x10] sm:$0xff]
        %v4596 = vld [vmem:[%s4592 + $0x18] sm:$0xff]
        %v4597 = vld [vmem:[%s4592 + $0x20] sm:$0xff]
        %v4598 = vld [vmem:[%s4592 + $0x28] sm:$0xff]
        %v4599 = vld [vmem:[%s4592 + $0x30] sm:$0xff]
        %v4600 = vld [vmem:[%s4592 + $0x38] sm:$0xff]
        %v4601 = vld [vmem:[%s4592 + $0x40] sm:$0xff]
        %v4602 = vld [vmem:[%s4592 + $0x48] sm:$0xff]
        %v4603 = vld [vmem:[%s4592 + $0x50] sm:$0xff]
        %v4604 = vld [vmem:[%s4592 + $0x58] sm:$0xff]
        %v4605 = vld [vmem:[%s4592 + $0x60] sm:$0xff]
        %v4606 = vld [vmem:[%s4592 + $0x68] sm:$0xff]
        %v4607 = vld [vmem:[%s4592 + $0x70] sm:$0xff]
        %v4608 = vld [vmem:[%s4592 + $0x78] sm:$0xff]
        %v4609 = vld [vmem:[%s4592 + $0x80] sm:$0xff]
        %v4610 = vld [vmem:[%s4592 + $0x88] sm:$0xff]
        %v4611 = vld [vmem:[%s4592 + $0x90] sm:$0xff]
        %v4612 = vld [vmem:[%s4592 + $0x98] sm:$0xff]
        %v4613 = vld [vmem:[%s4592 + $0xa0] sm:$0xff]
        %v4614 = vld [vmem:[%s4592 + $0xa8] sm:$0xff]
        %v4615 = vld [vmem:[%s4592 + $0xb0] sm:$0xff]
        %v4616 = vld [vmem:[%s4592 + $0xb8] sm:$0xff]
        %v4617 = vld [vmem:[%s4592 + $0xc0] sm:$0xff]
        %v4618 = vld [vmem:[%s4592 + $0xc8] sm:$0xff]
        %v4619 = vld [vmem:[%s4592 + $0xd0] sm:$0xff]
        %v4620 = vld [vmem:[%s4592 + $0xd8] sm:$0xff]
        %v4621 = vld [vmem:[%s4592 + $0xe0] sm:$0xff]
        %v4622 = vld [vmem:[%s4592 + $0xe8] sm:$0xff]
        %v4623 = vld [vmem:[%s4592 + $0xf0] sm:$0xff]
        %v4624 = vld [vmem:[%s4592 + $0xf8] sm:$0xff]
        %v4625 = vrot.slane %v3677, 4
        %v4626 = vrot.slane %v3679, 3
        %v4627 = vsel %vm3682, %v4626, %v4625
        %v4628 = vrot.slane %v3678, 4
        %v4629 = vrot.slane %v3680, 3
        %v4630 = vsel %vm3682, %v4629, %v4628
        %v4631 = vpack.c.b16 %v4627, %v4627
        %v4632 = vpack.c.b16 %v4630, %v4630
        %v4667 = vunpack.c.l.b16 %v4593
        %v4668 = vunpack.c.h.b16 %v4593
        %v4669 = vunpack.c.l.b16 %v4594
        %v4670 = vunpack.c.h.b16 %v4594
        %v4671 = vunpack.c.l.b16 %v4595
        %v4672 = vunpack.c.h.b16 %v4595
        %v4673 = vunpack.c.l.b16 %v4596
        %v4674 = vunpack.c.h.b16 %v4596
        %v4675 = vunpack.c.l.b16 %v4597
        %v4676 = vunpack.c.h.b16 %v4597
        %v4677 = vunpack.c.l.b16 %v4598
        %v4678 = vunpack.c.h.b16 %v4598
        %v4679 = vunpack.c.l.b16 %v4599
        %v4680 = vunpack.c.h.b16 %v4599
        %v4681 = vunpack.c.l.b16 %v4600
        %v4682 = vunpack.c.h.b16 %v4600
        %v4683 = vunpack.c.l.b16 %v4601
        %v4684 = vunpack.c.h.b16 %v4601
        %v4685 = vunpack.c.l.b16 %v4602
        %v4686 = vunpack.c.h.b16 %v4602
        %v4687 = vunpack.c.l.b16 %v4603
        %v4688 = vunpack.c.h.b16 %v4603
        %v4689 = vunpack.c.l.b16 %v4604
        %v4690 = vunpack.c.h.b16 %v4604
        %v4691 = vunpack.c.l.b16 %v4605
        %v4692 = vunpack.c.h.b16 %v4605
        %v4693 = vunpack.c.l.b16 %v4606
        %v4694 = vunpack.c.h.b16 %v4606
        %v4695 = vunpack.c.l.b16 %v4607
        %v4696 = vunpack.c.h.b16 %v4607
        %v4697 = vunpack.c.l.b16 %v4608
        %v4698 = vunpack.c.h.b16 %v4608
        %v4699 = vunpack.c.l.b16 %v4609
        %v4700 = vunpack.c.h.b16 %v4609
        %v4701 = vunpack.c.l.b16 %v4610
        %v4702 = vunpack.c.h.b16 %v4610
        %v4703 = vunpack.c.l.b16 %v4611
        %v4704 = vunpack.c.h.b16 %v4611
        %v4705 = vunpack.c.l.b16 %v4612
        %v4706 = vunpack.c.h.b16 %v4612
        %v4707 = vunpack.c.l.b16 %v4613
        %v4708 = vunpack.c.h.b16 %v4613
        %v4709 = vunpack.c.l.b16 %v4614
        %v4710 = vunpack.c.h.b16 %v4614
        %v4711 = vunpack.c.l.b16 %v4615
        %v4712 = vunpack.c.h.b16 %v4615
        %v4713 = vunpack.c.l.b16 %v4616
        %v4714 = vunpack.c.h.b16 %v4616
        %v4715 = vunpack.c.l.b16 %v4617
        %v4716 = vunpack.c.h.b16 %v4617
        %v4717 = vunpack.c.l.b16 %v4618
        %v4718 = vunpack.c.h.b16 %v4618
        %v4719 = vunpack.c.l.b16 %v4619
        %v4720 = vunpack.c.h.b16 %v4619
        %v4721 = vunpack.c.l.b16 %v4620
        %v4722 = vunpack.c.h.b16 %v4620
        %v4723 = vunpack.c.l.b16 %v4621
        %v4724 = vunpack.c.h.b16 %v4621
        %v4725 = vunpack.c.l.b16 %v4622
        %v4726 = vunpack.c.h.b16 %v4622
        %v4727 = vunpack.c.l.b16 %v4623
        %v4728 = vunpack.c.h.b16 %v4623
        %v4729 = vunpack.c.l.b16 %v4624
        %v4730 = vunpack.c.h.b16 %v4624
        %v4731 = vpack.c.b16 %v4669, %v4667
        %v4732 = vpack.c.b16 %v4670, %v4668
        %v4733 = vpack.c.b16 %v4673, %v4671
        %v4734 = vpack.c.b16 %v4674, %v4672
        %v4735 = vpack.c.b16 %v4677, %v4675
        %v4736 = vpack.c.b16 %v4678, %v4676
        %v4737 = vpack.c.b16 %v4681, %v4679
        %v4738 = vpack.c.b16 %v4682, %v4680
        %v4739 = vpack.c.b16 %v4685, %v4683
        %v4740 = vpack.c.b16 %v4686, %v4684
        %v4741 = vpack.c.b16 %v4689, %v4687
        %v4742 = vpack.c.b16 %v4690, %v4688
        %v4743 = vpack.c.b16 %v4693, %v4691
        %v4744 = vpack.c.b16 %v4694, %v4692
        %v4745 = vpack.c.b16 %v4697, %v4695
        %v4746 = vpack.c.b16 %v4698, %v4696
        %v4747 = vpack.c.b16 %v4701, %v4699
        %v4748 = vpack.c.b16 %v4702, %v4700
        %v4749 = vpack.c.b16 %v4705, %v4703
        %v4750 = vpack.c.b16 %v4706, %v4704
        %v4751 = vpack.c.b16 %v4709, %v4707
        %v4752 = vpack.c.b16 %v4710, %v4708
        %v4753 = vpack.c.b16 %v4713, %v4711
        %v4754 = vpack.c.b16 %v4714, %v4712
        %v4755 = vpack.c.b16 %v4717, %v4715
        %v4756 = vpack.c.b16 %v4718, %v4716
        %v4757 = vpack.c.b16 %v4721, %v4719
        %v4758 = vpack.c.b16 %v4722, %v4720
        %v4759 = vpack.c.b16 %v4725, %v4723
        %v4760 = vpack.c.b16 %v4726, %v4724
        %v4761 = vpack.c.b16 %v4729, %v4727
        %v4762 = vpack.c.b16 %v4730, %v4728
        %4795 = vmatprep.subr.bf16.mxu0 %v4746
        %4796 = vmatpush1.bf16.msra.mxu0 %v4745
        %4797 = vmatprep.subr.bf16.mxu0 %v4744
        %4798 = vmatpush1.bf16.msra.mxu0 %v4743
        %4799 = vmatprep.subr.bf16.mxu0 %v4742
        %4800 = vmatpush1.bf16.msra.mxu0 %v4741
        %4801 = vmatprep.subr.bf16.mxu0 %v4740
        %4802 = vmatpush1.bf16.msra.mxu0 %v4739
        %4803 = vmatprep.subr.bf16.mxu0 %v4738
        %4804 = vmatpush1.bf16.msra.mxu0 %v4737
        %4805 = vmatprep.subr.bf16.mxu0 %v4736
        %4806 = vmatpush1.bf16.msra.mxu0 %v4735
        %4807 = vmatprep.subr.bf16.mxu0 %v4734
        %4808 = vmatpush1.bf16.msra.mxu0 %v4733
        %4809 = vmatprep.subr.bf16.mxu0 %v4732
        %4810 = vmatpush1.bf16.msra.mxu0 %v4731
        %4811 = vmatprep.subr.bf16.mxu0 %v4762
        %4812 = vmatpush2.bf16.msra.mxu0 %v4761
        %4813 = vmatprep.subr.bf16.mxu0 %v4760
        %4814 = vmatpush2.bf16.msra.mxu0 %v4759
        %4815 = vmatprep.subr.bf16.mxu0 %v4758
        %4816 = vmatpush2.bf16.msra.mxu0 %v4757
        %4817 = vmatprep.subr.bf16.mxu0 %v4756
        %4818 = vmatpush2.bf16.msra.mxu0 %v4755
        %4819 = vmatprep.subr.bf16.mxu0 %v4754
        %4820 = vmatpush2.bf16.msra.mxu0 %v4753
        %4821 = vmatprep.subr.bf16.mxu0 %v4752
        %4822 = vmatpush2.bf16.msra.mxu0 %v4751
        %4823 = vmatprep.subr.bf16.mxu0 %v4750
        %4824 = vmatpush2.bf16.msra.mxu0 %v4749
        %4825 = vmatprep.subr.bf16.mxu0 %v4748
        %4826 = vmatpush2.bf16.msra.mxu0 %v4747
        %4827 = vmatprep.mubr.bf16.mxu0 %v4632
        %4828 = vmatmul.mubr.bf16.gmra.mxu0 %v4631
        %v4829 = vpop.f32.mrf.mxu0
        %v4830 = vadd.f32 0.0, %v4829
        %v4831 = vpop.f32.mrf.mxu0
        %v4832 = vadd.f32 0.0, %v4831
        %v4833 = vpop.f32.mrf.mxu0
        %v4834 = vpop.f32.mrf.mxu0
        %4835 = vdwg.mxu0
        %v4836 = vadd.f32 %v4590, %v4830
        %v4837 = vadd.f32 %v4591, %v4832
        %s4838 = scalar_lea.vmem %s459, 1280 [#allocation13]
        %v4839 = vld [vmem:[%s4838] sm:$0xff]
        %v4840 = vld [vmem:[%s4838 + $0x8] sm:$0xff]
        %v4841 = vld [vmem:[%s4838 + $0x10] sm:$0xff]
        %v4842 = vld [vmem:[%s4838 + $0x18] sm:$0xff]
        %v4843 = vld [vmem:[%s4838 + $0x20] sm:$0xff]
        %v4844 = vld [vmem:[%s4838 + $0x28] sm:$0xff]
        %v4845 = vld [vmem:[%s4838 + $0x30] sm:$0xff]
        %v4846 = vld [vmem:[%s4838 + $0x38] sm:$0xff]
        %v4847 = vld [vmem:[%s4838 + $0x40] sm:$0xff]
        %v4848 = vld [vmem:[%s4838 + $0x48] sm:$0xff]
        %v4849 = vld [vmem:[%s4838 + $0x50] sm:$0xff]
        %v4850 = vld [vmem:[%s4838 + $0x58] sm:$0xff]
        %v4851 = vld [vmem:[%s4838 + $0x60] sm:$0xff]
        %v4852 = vld [vmem:[%s4838 + $0x68] sm:$0xff]
        %v4853 = vld [vmem:[%s4838 + $0x70] sm:$0xff]
        %v4854 = vld [vmem:[%s4838 + $0x78] sm:$0xff]
        %v4855 = vld [vmem:[%s4838 + $0x80] sm:$0xff]
        %v4856 = vld [vmem:[%s4838 + $0x88] sm:$0xff]
        %v4857 = vld [vmem:[%s4838 + $0x90] sm:$0xff]
        %v4858 = vld [vmem:[%s4838 + $0x98] sm:$0xff]
        %v4859 = vld [vmem:[%s4838 + $0xa0] sm:$0xff]
        %v4860 = vld [vmem:[%s4838 + $0xa8] sm:$0xff]
        %v4861 = vld [vmem:[%s4838 + $0xb0] sm:$0xff]
        %v4862 = vld [vmem:[%s4838 + $0xb8] sm:$0xff]
        %v4863 = vld [vmem:[%s4838 + $0xc0] sm:$0xff]
        %v4864 = vld [vmem:[%s4838 + $0xc8] sm:$0xff]
        %v4865 = vld [vmem:[%s4838 + $0xd0] sm:$0xff]
        %v4866 = vld [vmem:[%s4838 + $0xd8] sm:$0xff]
        %v4867 = vld [vmem:[%s4838 + $0xe0] sm:$0xff]
        %v4868 = vld [vmem:[%s4838 + $0xe8] sm:$0xff]
        %v4869 = vld [vmem:[%s4838 + $0xf0] sm:$0xff]
        %v4870 = vld [vmem:[%s4838 + $0xf8] sm:$0xff]
        %v4871 = vrot.slane %v3677, 5
        %v4872 = vrot.slane %v3679, 4
        %v4873 = vsel %vm3682, %v4872, %v4871
        %v4874 = vrot.slane %v3678, 5
        %v4875 = vrot.slane %v3680, 4
        %v4876 = vsel %vm3682, %v4875, %v4874
        %v4877 = vpack.c.b16 %v4873, %v4873
        %v4878 = vpack.c.b16 %v4876, %v4876
        %v4913 = vunpack.c.l.b16 %v4839
        %v4914 = vunpack.c.h.b16 %v4839
        %v4915 = vunpack.c.l.b16 %v4840
        %v4916 = vunpack.c.h.b16 %v4840
        %v4917 = vunpack.c.l.b16 %v4841
        %v4918 = vunpack.c.h.b16 %v4841
        %v4919 = vunpack.c.l.b16 %v4842
        %v4920 = vunpack.c.h.b16 %v4842
        %v4921 = vunpack.c.l.b16 %v4843
        %v4922 = vunpack.c.h.b16 %v4843
        %v4923 = vunpack.c.l.b16 %v4844
        %v4924 = vunpack.c.h.b16 %v4844
        %v4925 = vunpack.c.l.b16 %v4845
        %v4926 = vunpack.c.h.b16 %v4845
        %v4927 = vunpack.c.l.b16 %v4846
        %v4928 = vunpack.c.h.b16 %v4846
        %v4929 = vunpack.c.l.b16 %v4847
        %v4930 = vunpack.c.h.b16 %v4847
        %v4931 = vunpack.c.l.b16 %v4848
        %v4932 = vunpack.c.h.b16 %v4848
        %v4933 = vunpack.c.l.b16 %v4849
        %v4934 = vunpack.c.h.b16 %v4849
        %v4935 = vunpack.c.l.b16 %v4850
        %v4936 = vunpack.c.h.b16 %v4850
        %v4937 = vunpack.c.l.b16 %v4851
        %v4938 = vunpack.c.h.b16 %v4851
        %v4939 = vunpack.c.l.b16 %v4852
        %v4940 = vunpack.c.h.b16 %v4852
        %v4941 = vunpack.c.l.b16 %v4853
        %v4942 = vunpack.c.h.b16 %v4853
        %v4943 = vunpack.c.l.b16 %v4854
        %v4944 = vunpack.c.h.b16 %v4854
        %v4945 = vunpack.c.l.b16 %v4855
        %v4946 = vunpack.c.h.b16 %v4855
        %v4947 = vunpack.c.l.b16 %v4856
        %v4948 = vunpack.c.h.b16 %v4856
        %v4949 = vunpack.c.l.b16 %v4857
        %v4950 = vunpack.c.h.b16 %v4857
        %v4951 = vunpack.c.l.b16 %v4858
        %v4952 = vunpack.c.h.b16 %v4858
        %v4953 = vunpack.c.l.b16 %v4859
        %v4954 = vunpack.c.h.b16 %v4859
        %v4955 = vunpack.c.l.b16 %v4860
        %v4956 = vunpack.c.h.b16 %v4860
        %v4957 = vunpack.c.l.b16 %v4861
        %v4958 = vunpack.c.h.b16 %v4861
        %v4959 = vunpack.c.l.b16 %v4862
        %v4960 = vunpack.c.h.b16 %v4862
        %v4961 = vunpack.c.l.b16 %v4863
        %v4962 = vunpack.c.h.b16 %v4863
        %v4963 = vunpack.c.l.b16 %v4864
        %v4964 = vunpack.c.h.b16 %v4864
        %v4965 = vunpack.c.l.b16 %v4865
        %v4966 = vunpack.c.h.b16 %v4865
        %v4967 = vunpack.c.l.b16 %v4866
        %v4968 = vunpack.c.h.b16 %v4866
        %v4969 = vunpack.c.l.b16 %v4867
        %v4970 = vunpack.c.h.b16 %v4867
        %v4971 = vunpack.c.l.b16 %v4868
        %v4972 = vunpack.c.h.b16 %v4868
        %v4973 = vunpack.c.l.b16 %v4869
        %v4974 = vunpack.c.h.b16 %v4869
        %v4975 = vunpack.c.l.b16 %v4870
        %v4976 = vunpack.c.h.b16 %v4870
        %v4977 = vpack.c.b16 %v4915, %v4913
        %v4978 = vpack.c.b16 %v4916, %v4914
        %v4979 = vpack.c.b16 %v4919, %v4917
        %v4980 = vpack.c.b16 %v4920, %v4918
        %v4981 = vpack.c.b16 %v4923, %v4921
        %v4982 = vpack.c.b16 %v4924, %v4922
        %v4983 = vpack.c.b16 %v4927, %v4925
        %v4984 = vpack.c.b16 %v4928, %v4926
        %v4985 = vpack.c.b16 %v4931, %v4929
        %v4986 = vpack.c.b16 %v4932, %v4930
        %v4987 = vpack.c.b16 %v4935, %v4933
        %v4988 = vpack.c.b16 %v4936, %v4934
        %v4989 = vpack.c.b16 %v4939, %v4937
        %v4990 = vpack.c.b16 %v4940, %v4938
        %v4991 = vpack.c.b16 %v4943, %v4941
        %v4992 = vpack.c.b16 %v4944, %v4942
        %v4993 = vpack.c.b16 %v4947, %v4945
        %v4994 = vpack.c.b16 %v4948, %v4946
        %v4995 = vpack.c.b16 %v4951, %v4949
        %v4996 = vpack.c.b16 %v4952, %v4950
        %v4997 = vpack.c.b16 %v4955, %v4953
        %v4998 = vpack.c.b16 %v4956, %v4954
        %v4999 = vpack.c.b16 %v4959, %v4957
        %v5000 = vpack.c.b16 %v4960, %v4958
        %v5001 = vpack.c.b16 %v4963, %v4961
        %v5002 = vpack.c.b16 %v4964, %v4962
        %v5003 = vpack.c.b16 %v4967, %v4965
        %v5004 = vpack.c.b16 %v4968, %v4966
        %v5005 = vpack.c.b16 %v4971, %v4969
        %v5006 = vpack.c.b16 %v4972, %v4970
        %v5007 = vpack.c.b16 %v4975, %v4973
        %v5008 = vpack.c.b16 %v4976, %v4974
        %5041 = vmatprep.subr.bf16.mxu0 %v4992
        %5042 = vmatpush1.bf16.msra.mxu0 %v4991
        %5043 = vmatprep.subr.bf16.mxu0 %v4990
        %5044 = vmatpush1.bf16.msra.mxu0 %v4989
        %5045 = vmatprep.subr.bf16.mxu0 %v4988
        %5046 = vmatpush1.bf16.msra.mxu0 %v4987
        %5047 = vmatprep.subr.bf16.mxu0 %v4986
        %5048 = vmatpush1.bf16.msra.mxu0 %v4985
        %5049 = vmatprep.subr.bf16.mxu0 %v4984
        %5050 = vmatpush1.bf16.msra.mxu0 %v4983
        %5051 = vmatprep.subr.bf16.mxu0 %v4982
        %5052 = vmatpush1.bf16.msra.mxu0 %v4981
        %5053 = vmatprep.subr.bf16.mxu0 %v4980
        %5054 = vmatpush1.bf16.msra.mxu0 %v4979
        %5055 = vmatprep.subr.bf16.mxu0 %v4978
        %5056 = vmatpush1.bf16.msra.mxu0 %v4977
        %5057 = vmatprep.subr.bf16.mxu0 %v5008
        %5058 = vmatpush2.bf16.msra.mxu0 %v5007
        %5059 = vmatprep.subr.bf16.mxu0 %v5006
        %5060 = vmatpush2.bf16.msra.mxu0 %v5005
        %5061 = vmatprep.subr.bf16.mxu0 %v5004
        %5062 = vmatpush2.bf16.msra.mxu0 %v5003
        %5063 = vmatprep.subr.bf16.mxu0 %v5002
        %5064 = vmatpush2.bf16.msra.mxu0 %v5001
        %5065 = vmatprep.subr.bf16.mxu0 %v5000
        %5066 = vmatpush2.bf16.msra.mxu0 %v4999
        %5067 = vmatprep.subr.bf16.mxu0 %v4998
        %5068 = vmatpush2.bf16.msra.mxu0 %v4997
        %5069 = vmatprep.subr.bf16.mxu0 %v4996
        %5070 = vmatpush2.bf16.msra.mxu0 %v4995
        %5071 = vmatprep.subr.bf16.mxu0 %v4994
        %5072 = vmatpush2.bf16.msra.mxu0 %v4993
        %5073 = vmatprep.mubr.bf16.mxu0 %v4878
        %5074 = vmatmul.mubr.bf16.gmra.mxu0 %v4877
        %v5075 = vpop.f32.mrf.mxu0
        %v5076 = vadd.f32 0.0, %v5075
        %v5077 = vpop.f32.mrf.mxu0
        %v5078 = vadd.f32 0.0, %v5077
        %v5079 = vpop.f32.mrf.mxu0
        %v5080 = vpop.f32.mrf.mxu0
        %5081 = vdwg.mxu0
        %v5082 = vadd.f32 %v4836, %v5076
        %v5083 = vadd.f32 %v4837, %v5078
        %s5084 = scalar_lea.vmem %s459, 1536 [#allocation13]
        %v5085 = vld [vmem:[%s5084] sm:$0xff]
        %v5086 = vld [vmem:[%s5084 + $0x8] sm:$0xff]
        %v5087 = vld [vmem:[%s5084 + $0x10] sm:$0xff]
        %v5088 = vld [vmem:[%s5084 + $0x18] sm:$0xff]
        %v5089 = vld [vmem:[%s5084 + $0x20] sm:$0xff]
        %v5090 = vld [vmem:[%s5084 + $0x28] sm:$0xff]
        %v5091 = vld [vmem:[%s5084 + $0x30] sm:$0xff]
        %v5092 = vld [vmem:[%s5084 + $0x38] sm:$0xff]
        %v5093 = vld [vmem:[%s5084 + $0x40] sm:$0xff]
        %v5094 = vld [vmem:[%s5084 + $0x48] sm:$0xff]
        %v5095 = vld [vmem:[%s5084 + $0x50] sm:$0xff]
        %v5096 = vld [vmem:[%s5084 + $0x58] sm:$0xff]
        %v5097 = vld [vmem:[%s5084 + $0x60] sm:$0xff]
        %v5098 = vld [vmem:[%s5084 + $0x68] sm:$0xff]
        %v5099 = vld [vmem:[%s5084 + $0x70] sm:$0xff]
        %v5100 = vld [vmem:[%s5084 + $0x78] sm:$0xff]
        %v5101 = vld [vmem:[%s5084 + $0x80] sm:$0xff]
        %v5102 = vld [vmem:[%s5084 + $0x88] sm:$0xff]
        %v5103 = vld [vmem:[%s5084 + $0x90] sm:$0xff]
        %v5104 = vld [vmem:[%s5084 + $0x98] sm:$0xff]
        %v5105 = vld [vmem:[%s5084 + $0xa0] sm:$0xff]
        %v5106 = vld [vmem:[%s5084 + $0xa8] sm:$0xff]
        %v5107 = vld [vmem:[%s5084 + $0xb0] sm:$0xff]
        %v5108 = vld [vmem:[%s5084 + $0xb8] sm:$0xff]
        %v5109 = vld [vmem:[%s5084 + $0xc0] sm:$0xff]
        %v5110 = vld [vmem:[%s5084 + $0xc8] sm:$0xff]
        %v5111 = vld [vmem:[%s5084 + $0xd0] sm:$0xff]
        %v5112 = vld [vmem:[%s5084 + $0xd8] sm:$0xff]
        %v5113 = vld [vmem:[%s5084 + $0xe0] sm:$0xff]
        %v5114 = vld [vmem:[%s5084 + $0xe8] sm:$0xff]
        %v5115 = vld [vmem:[%s5084 + $0xf0] sm:$0xff]
        %v5116 = vld [vmem:[%s5084 + $0xf8] sm:$0xff]
        %v5117 = vrot.slane %v3677, 6
        %v5118 = vrot.slane %v3679, 5
        %v5119 = vsel %vm3682, %v5118, %v5117
        %v5120 = vrot.slane %v3678, 6
        %v5121 = vrot.slane %v3680, 5
        %v5122 = vsel %vm3682, %v5121, %v5120
        %v5123 = vpack.c.b16 %v5119, %v5119
        %v5124 = vpack.c.b16 %v5122, %v5122
        %v5159 = vunpack.c.l.b16 %v5085
        %v5160 = vunpack.c.h.b16 %v5085
        %v5161 = vunpack.c.l.b16 %v5086
        %v5162 = vunpack.c.h.b16 %v5086
        %v5163 = vunpack.c.l.b16 %v5087
        %v5164 = vunpack.c.h.b16 %v5087
        %v5165 = vunpack.c.l.b16 %v5088
        %v5166 = vunpack.c.h.b16 %v5088
        %v5167 = vunpack.c.l.b16 %v5089
        %v5168 = vunpack.c.h.b16 %v5089
        %v5169 = vunpack.c.l.b16 %v5090
        %v5170 = vunpack.c.h.b16 %v5090
        %v5171 = vunpack.c.l.b16 %v5091
        %v5172 = vunpack.c.h.b16 %v5091
        %v5173 = vunpack.c.l.b16 %v5092
        %v5174 = vunpack.c.h.b16 %v5092
        %v5175 = vunpack.c.l.b16 %v5093
        %v5176 = vunpack.c.h.b16 %v5093
        %v5177 = vunpack.c.l.b16 %v5094
        %v5178 = vunpack.c.h.b16 %v5094
        %v5179 = vunpack.c.l.b16 %v5095
        %v5180 = vunpack.c.h.b16 %v5095
        %v5181 = vunpack.c.l.b16 %v5096
        %v5182 = vunpack.c.h.b16 %v5096
        %v5183 = vunpack.c.l.b16 %v5097
        %v5184 = vunpack.c.h.b16 %v5097
        %v5185 = vunpack.c.l.b16 %v5098
        %v5186 = vunpack.c.h.b16 %v5098
        %v5187 = vunpack.c.l.b16 %v5099
        %v5188 = vunpack.c.h.b16 %v5099
        %v5189 = vunpack.c.l.b16 %v5100
        %v5190 = vunpack.c.h.b16 %v5100
        %v5191 = vunpack.c.l.b16 %v5101
        %v5192 = vunpack.c.h.b16 %v5101
        %v5193 = vunpack.c.l.b16 %v5102
        %v5194 = vunpack.c.h.b16 %v5102
        %v5195 = vunpack.c.l.b16 %v5103
        %v5196 = vunpack.c.h.b16 %v5103
        %v5197 = vunpack.c.l.b16 %v5104
        %v5198 = vunpack.c.h.b16 %v5104
        %v5199 = vunpack.c.l.b16 %v5105
        %v5200 = vunpack.c.h.b16 %v5105
        %v5201 = vunpack.c.l.b16 %v5106
        %v5202 = vunpack.c.h.b16 %v5106
        %v5203 = vunpack.c.l.b16 %v5107
        %v5204 = vunpack.c.h.b16 %v5107
        %v5205 = vunpack.c.l.b16 %v5108
        %v5206 = vunpack.c.h.b16 %v5108
        %v5207 = vunpack.c.l.b16 %v5109
        %v5208 = vunpack.c.h.b16 %v5109
        %v5209 = vunpack.c.l.b16 %v5110
        %v5210 = vunpack.c.h.b16 %v5110
        %v5211 = vunpack.c.l.b16 %v5111
        %v5212 = vunpack.c.h.b16 %v5111
        %v5213 = vunpack.c.l.b16 %v5112
        %v5214 = vunpack.c.h.b16 %v5112
        %v5215 = vunpack.c.l.b16 %v5113
        %v5216 = vunpack.c.h.b16 %v5113
        %v5217 = vunpack.c.l.b16 %v5114
        %v5218 = vunpack.c.h.b16 %v5114
        %v5219 = vunpack.c.l.b16 %v5115
        %v5220 = vunpack.c.h.b16 %v5115
        %v5221 = vunpack.c.l.b16 %v5116
        %v5222 = vunpack.c.h.b16 %v5116
        %v5223 = vpack.c.b16 %v5161, %v5159
        %v5224 = vpack.c.b16 %v5162, %v5160
        %v5225 = vpack.c.b16 %v5165, %v5163
        %v5226 = vpack.c.b16 %v5166, %v5164
        %v5227 = vpack.c.b16 %v5169, %v5167
        %v5228 = vpack.c.b16 %v5170, %v5168
        %v5229 = vpack.c.b16 %v5173, %v5171
        %v5230 = vpack.c.b16 %v5174, %v5172
        %v5231 = vpack.c.b16 %v5177, %v5175
        %v5232 = vpack.c.b16 %v5178, %v5176
        %v5233 = vpack.c.b16 %v5181, %v5179
        %v5234 = vpack.c.b16 %v5182, %v5180
        %v5235 = vpack.c.b16 %v5185, %v5183
        %v5236 = vpack.c.b16 %v5186, %v5184
        %v5237 = vpack.c.b16 %v5189, %v5187
        %v5238 = vpack.c.b16 %v5190, %v5188
        %v5239 = vpack.c.b16 %v5193, %v5191
        %v5240 = vpack.c.b16 %v5194, %v5192
        %v5241 = vpack.c.b16 %v5197, %v5195
        %v5242 = vpack.c.b16 %v5198, %v5196
        %v5243 = vpack.c.b16 %v5201, %v5199
        %v5244 = vpack.c.b16 %v5202, %v5200
        %v5245 = vpack.c.b16 %v5205, %v5203
        %v5246 = vpack.c.b16 %v5206, %v5204
        %v5247 = vpack.c.b16 %v5209, %v5207
        %v5248 = vpack.c.b16 %v5210, %v5208
        %v5249 = vpack.c.b16 %v5213, %v5211
        %v5250 = vpack.c.b16 %v5214, %v5212
        %v5251 = vpack.c.b16 %v5217, %v5215
        %v5252 = vpack.c.b16 %v5218, %v5216
        %v5253 = vpack.c.b16 %v5221, %v5219
        %v5254 = vpack.c.b16 %v5222, %v5220
        %5287 = vmatprep.subr.bf16.mxu0 %v5238
        %5288 = vmatpush1.bf16.msra.mxu0 %v5237
        %5289 = vmatprep.subr.bf16.mxu0 %v5236
        %5290 = vmatpush1.bf16.msra.mxu0 %v5235
        %5291 = vmatprep.subr.bf16.mxu0 %v5234
        %5292 = vmatpush1.bf16.msra.mxu0 %v5233
        %5293 = vmatprep.subr.bf16.mxu0 %v5232
        %5294 = vmatpush1.bf16.msra.mxu0 %v5231
        %5295 = vmatprep.subr.bf16.mxu0 %v5230
        %5296 = vmatpush1.bf16.msra.mxu0 %v5229
        %5297 = vmatprep.subr.bf16.mxu0 %v5228
        %5298 = vmatpush1.bf16.msra.mxu0 %v5227
        %5299 = vmatprep.subr.bf16.mxu0 %v5226
        %5300 = vmatpush1.bf16.msra.mxu0 %v5225
        %5301 = vmatprep.subr.bf16.mxu0 %v5224
        %5302 = vmatpush1.bf16.msra.mxu0 %v5223
        %5303 = vmatprep.subr.bf16.mxu0 %v5254
        %5304 = vmatpush2.bf16.msra.mxu0 %v5253
        %5305 = vmatprep.subr.bf16.mxu0 %v5252
        %5306 = vmatpush2.bf16.msra.mxu0 %v5251
        %5307 = vmatprep.subr.bf16.mxu0 %v5250
        %5308 = vmatpush2.bf16.msra.mxu0 %v5249
        %5309 = vmatprep.subr.bf16.mxu0 %v5248
        %5310 = vmatpush2.bf16.msra.mxu0 %v5247
        %5311 = vmatprep.subr.bf16.mxu0 %v5246
        %5312 = vmatpush2.bf16.msra.mxu0 %v5245
        %5313 = vmatprep.subr.bf16.mxu0 %v5244
        %5314 = vmatpush2.bf16.msra.mxu0 %v5243
        %5315 = vmatprep.subr.bf16.mxu0 %v5242
        %5316 = vmatpush2.bf16.msra.mxu0 %v5241
        %5317 = vmatprep.subr.bf16.mxu0 %v5240
        %5318 = vmatpush2.bf16.msra.mxu0 %v5239
        %5319 = vmatprep.mubr.bf16.mxu0 %v5124
        %5320 = vmatmul.mubr.bf16.gmra.mxu0 %v5123
        %v5321 = vpop.f32.mrf.mxu0
        %v5322 = vadd.f32 0.0, %v5321
        %v5323 = vpop.f32.mrf.mxu0
        %v5324 = vadd.f32 0.0, %v5323
        %v5325 = vpop.f32.mrf.mxu0
        %v5326 = vpop.f32.mrf.mxu0
        %5327 = vdwg.mxu0
        %v5328 = vadd.f32 %v5082, %v5322
        %v5329 = vadd.f32 %v5083, %v5324
        %s5330 = scalar_lea.vmem %s459, 1792 [#allocation13]
        %v5331 = vld [vmem:[%s5330] sm:$0xff]
        %v5332 = vld [vmem:[%s5330 + $0x8] sm:$0xff]
        %v5333 = vld [vmem:[%s5330 + $0x10] sm:$0xff]
        %v5334 = vld [vmem:[%s5330 + $0x18] sm:$0xff]
        %v5335 = vld [vmem:[%s5330 + $0x20] sm:$0xff]
        %v5336 = vld [vmem:[%s5330 + $0x28] sm:$0xff]
        %v5337 = vld [vmem:[%s5330 + $0x30] sm:$0xff]
        %v5338 = vld [vmem:[%s5330 + $0x38] sm:$0xff]
        %v5339 = vld [vmem:[%s5330 + $0x40] sm:$0xff]
        %v5340 = vld [vmem:[%s5330 + $0x48] sm:$0xff]
        %v5341 = vld [vmem:[%s5330 + $0x50] sm:$0xff]
        %v5342 = vld [vmem:[%s5330 + $0x58] sm:$0xff]
        %v5343 = vld [vmem:[%s5330 + $0x60] sm:$0xff]
        %v5344 = vld [vmem:[%s5330 + $0x68] sm:$0xff]
        %v5345 = vld [vmem:[%s5330 + $0x70] sm:$0xff]
        %v5346 = vld [vmem:[%s5330 + $0x78] sm:$0xff]
        %v5347 = vld [vmem:[%s5330 + $0x80] sm:$0xff]
        %v5348 = vld [vmem:[%s5330 + $0x88] sm:$0xff]
        %v5349 = vld [vmem:[%s5330 + $0x90] sm:$0xff]
        %v5350 = vld [vmem:[%s5330 + $0x98] sm:$0xff]
        %v5351 = vld [vmem:[%s5330 + $0xa0] sm:$0xff]
        %v5352 = vld [vmem:[%s5330 + $0xa8] sm:$0xff]
        %v5353 = vld [vmem:[%s5330 + $0xb0] sm:$0xff]
        %v5354 = vld [vmem:[%s5330 + $0xb8] sm:$0xff]
        %v5355 = vld [vmem:[%s5330 + $0xc0] sm:$0xff]
        %v5356 = vld [vmem:[%s5330 + $0xc8] sm:$0xff]
        %v5357 = vld [vmem:[%s5330 + $0xd0] sm:$0xff]
        %v5358 = vld [vmem:[%s5330 + $0xd8] sm:$0xff]
        %v5359 = vld [vmem:[%s5330 + $0xe0] sm:$0xff]
        %v5360 = vld [vmem:[%s5330 + $0xe8] sm:$0xff]
        %v5361 = vld [vmem:[%s5330 + $0xf0] sm:$0xff]
        %v5362 = vld [vmem:[%s5330 + $0xf8] sm:$0xff]
        %v5363 = vrot.slane %v3677, 7
        %v5364 = vrot.slane %v3679, 6
        %v5365 = vsel %vm3682, %v5364, %v5363
        %v5366 = vrot.slane %v3678, 7
        %v5367 = vrot.slane %v3680, 6
        %v5368 = vsel %vm3682, %v5367, %v5366
        %v5369 = vpack.c.b16 %v5365, %v5365
        %v5370 = vpack.c.b16 %v5368, %v5368
        %v5405 = vunpack.c.l.b16 %v5331
        %v5406 = vunpack.c.h.b16 %v5331
        %v5407 = vunpack.c.l.b16 %v5332
        %v5408 = vunpack.c.h.b16 %v5332
        %v5409 = vunpack.c.l.b16 %v5333
        %v5410 = vunpack.c.h.b16 %v5333
        %v5411 = vunpack.c.l.b16 %v5334
        %v5412 = vunpack.c.h.b16 %v5334
        %v5413 = vunpack.c.l.b16 %v5335
        %v5414 = vunpack.c.h.b16 %v5335
        %v5415 = vunpack.c.l.b16 %v5336
        %v5416 = vunpack.c.h.b16 %v5336
        %v5417 = vunpack.c.l.b16 %v5337
        %v5418 = vunpack.c.h.b16 %v5337
        %v5419 = vunpack.c.l.b16 %v5338
        %v5420 = vunpack.c.h.b16 %v5338
        %v5421 = vunpack.c.l.b16 %v5339
        %v5422 = vunpack.c.h.b16 %v5339
        %v5423 = vunpack.c.l.b16 %v5340
        %v5424 = vunpack.c.h.b16 %v5340
        %v5425 = vunpack.c.l.b16 %v5341
        %v5426 = vunpack.c.h.b16 %v5341
        %v5427 = vunpack.c.l.b16 %v5342
        %v5428 = vunpack.c.h.b16 %v5342
        %v5429 = vunpack.c.l.b16 %v5343
        %v5430 = vunpack.c.h.b16 %v5343
        %v5431 = vunpack.c.l.b16 %v5344
        %v5432 = vunpack.c.h.b16 %v5344
        %v5433 = vunpack.c.l.b16 %v5345
        %v5434 = vunpack.c.h.b16 %v5345
        %v5435 = vunpack.c.l.b16 %v5346
        %v5436 = vunpack.c.h.b16 %v5346
        %v5437 = vunpack.c.l.b16 %v5347
        %v5438 = vunpack.c.h.b16 %v5347
        %v5439 = vunpack.c.l.b16 %v5348
        %v5440 = vunpack.c.h.b16 %v5348
        %v5441 = vunpack.c.l.b16 %v5349
        %v5442 = vunpack.c.h.b16 %v5349
        %v5443 = vunpack.c.l.b16 %v5350
        %v5444 = vunpack.c.h.b16 %v5350
        %v5445 = vunpack.c.l.b16 %v5351
        %v5446 = vunpack.c.h.b16 %v5351
        %v5447 = vunpack.c.l.b16 %v5352
        %v5448 = vunpack.c.h.b16 %v5352
        %v5449 = vunpack.c.l.b16 %v5353
        %v5450 = vunpack.c.h.b16 %v5353
        %v5451 = vunpack.c.l.b16 %v5354
        %v5452 = vunpack.c.h.b16 %v5354
        %v5453 = vunpack.c.l.b16 %v5355
        %v5454 = vunpack.c.h.b16 %v5355
        %v5455 = vunpack.c.l.b16 %v5356
        %v5456 = vunpack.c.h.b16 %v5356
        %v5457 = vunpack.c.l.b16 %v5357
        %v5458 = vunpack.c.h.b16 %v5357
        %v5459 = vunpack.c.l.b16 %v5358
        %v5460 = vunpack.c.h.b16 %v5358
        %v5461 = vunpack.c.l.b16 %v5359
        %v5462 = vunpack.c.h.b16 %v5359
        %v5463 = vunpack.c.l.b16 %v5360
        %v5464 = vunpack.c.h.b16 %v5360
        %v5465 = vunpack.c.l.b16 %v5361
        %v5466 = vunpack.c.h.b16 %v5361
        %v5467 = vunpack.c.l.b16 %v5362
        %v5468 = vunpack.c.h.b16 %v5362
        %v5469 = vpack.c.b16 %v5407, %v5405
        %v5470 = vpack.c.b16 %v5408, %v5406
        %v5471 = vpack.c.b16 %v5411, %v5409
        %v5472 = vpack.c.b16 %v5412, %v5410
        %v5473 = vpack.c.b16 %v5415, %v5413
        %v5474 = vpack.c.b16 %v5416, %v5414
        %v5475 = vpack.c.b16 %v5419, %v5417
        %v5476 = vpack.c.b16 %v5420, %v5418
        %v5477 = vpack.c.b16 %v5423, %v5421
        %v5478 = vpack.c.b16 %v5424, %v5422
        %v5479 = vpack.c.b16 %v5427, %v5425
        %v5480 = vpack.c.b16 %v5428, %v5426
        %v5481 = vpack.c.b16 %v5431, %v5429
        %v5482 = vpack.c.b16 %v5432, %v5430
        %v5483 = vpack.c.b16 %v5435, %v5433
        %v5484 = vpack.c.b16 %v5436, %v5434
        %v5485 = vpack.c.b16 %v5439, %v5437
        %v5486 = vpack.c.b16 %v5440, %v5438
        %v5487 = vpack.c.b16 %v5443, %v5441
        %v5488 = vpack.c.b16 %v5444, %v5442
        %v5489 = vpack.c.b16 %v5447, %v5445
        %v5490 = vpack.c.b16 %v5448, %v5446
        %v5491 = vpack.c.b16 %v5451, %v5449
        %v5492 = vpack.c.b16 %v5452, %v5450
        %v5493 = vpack.c.b16 %v5455, %v5453
        %v5494 = vpack.c.b16 %v5456, %v5454
        %v5495 = vpack.c.b16 %v5459, %v5457
        %v5496 = vpack.c.b16 %v5460, %v5458
        %v5497 = vpack.c.b16 %v5463, %v5461
        %v5498 = vpack.c.b16 %v5464, %v5462
        %v5499 = vpack.c.b16 %v5467, %v5465
        %v5500 = vpack.c.b16 %v5468, %v5466
        %5533 = vmatprep.subr.bf16.mxu0 %v5484
        %5534 = vmatpush1.bf16.msra.mxu0 %v5483
        %5535 = vmatprep.subr.bf16.mxu0 %v5482
        %5536 = vmatpush1.bf16.msra.mxu0 %v5481
        %5537 = vmatprep.subr.bf16.mxu0 %v5480
        %5538 = vmatpush1.bf16.msra.mxu0 %v5479
        %5539 = vmatprep.subr.bf16.mxu0 %v5478
        %5540 = vmatpush1.bf16.msra.mxu0 %v5477
        %5541 = vmatprep.subr.bf16.mxu0 %v5476
        %5542 = vmatpush1.bf16.msra.mxu0 %v5475
        %5543 = vmatprep.subr.bf16.mxu0 %v5474
        %5544 = vmatpush1.bf16.msra.mxu0 %v5473
        %5545 = vmatprep.subr.bf16.mxu0 %v5472
        %5546 = vmatpush1.bf16.msra.mxu0 %v5471
        %5547 = vmatprep.subr.bf16.mxu0 %v5470
        %5548 = vmatpush1.bf16.msra.mxu0 %v5469
        %5549 = vmatprep.subr.bf16.mxu0 %v5500
        %5550 = vmatpush2.bf16.msra.mxu0 %v5499
        %5551 = vmatprep.subr.bf16.mxu0 %v5498
        %5552 = vmatpush2.bf16.msra.mxu0 %v5497
        %5553 = vmatprep.subr.bf16.mxu0 %v5496
        %5554 = vmatpush2.bf16.msra.mxu0 %v5495
        %5555 = vmatprep.subr.bf16.mxu0 %v5494
        %5556 = vmatpush2.bf16.msra.mxu0 %v5493
        %5557 = vmatprep.subr.bf16.mxu0 %v5492
        %5558 = vmatpush2.bf16.msra.mxu0 %v5491
        %5559 = vmatprep.subr.bf16.mxu0 %v5490
        %5560 = vmatpush2.bf16.msra.mxu0 %v5489
        %5561 = vmatprep.subr.bf16.mxu0 %v5488
        %5562 = vmatpush2.bf16.msra.mxu0 %v5487
        %5563 = vmatprep.subr.bf16.mxu0 %v5486
        %5564 = vmatpush2.bf16.msra.mxu0 %v5485
        %5565 = vmatprep.mubr.bf16.mxu0 %v5370
        %5566 = vmatmul.mubr.bf16.gmra.mxu0 %v5369
        %v5567 = vpop.f32.mrf.mxu0
        %v5568 = vadd.f32 0.0, %v5567
        %v5569 = vpop.f32.mrf.mxu0
        %v5570 = vadd.f32 0.0, %v5569
        %v5571 = vpop.f32.mrf.mxu0
        %v5572 = vpop.f32.mrf.mxu0
        %5573 = vdwg.mxu0
        %v5574 = vadd.f32 %v5328, %v5568
        %v5575 = vadd.f32 %v5329, %v5570
        %v5576 = vld [vmem:[%s468] sm:$0x3]
        %v5578 = vlaneseq
        %v5579 = vshrl.u32 %v5578, 7
        %v5580 = vsub.s32 0, %v5579
        %v5581 = vrot.slane %v5576, %v5580
        %v5582 = vlaneseq
        %v5583 = vshrl.u32 %v5582, 7
        %v5584 = vsub.s32 1, %v5583
        %v5585 = vrot.slane %v5576, %v5584
        %v5588 = vadd.f32 %v5574, %v5581
        %v5589 = vadd.f32 %v5575, %v5585
        %v5590 = vmax.f32 %v5588, 0.0
        %v5591 = vmax.f32 %v5589, 0.0
        %v5592 = vpack.c.bf16 %v5590, %v5590
        %v5593 = vpack.c.bf16 %v5591, %v5591
        %v5594 = vld [vmem:[#allocation3] sm:$0x3]
        %v5595 = vld [vmem:[%s477] sm:$0xf]
        %v5596 = vld [vmem:[%s477 + $0x4] sm:$0xf]
        %v5597 = vld [vmem:[%s477 + $0x8] sm:$0xf]
        %v5598 = vld [vmem:[%s477 + $0xc] sm:$0xf]
        %v5599 = vld [vmem:[%s477 + $0x10] sm:$0xf]
        %v5600 = vld [vmem:[%s477 + $0x14] sm:$0xf]
        %v5601 = vld [vmem:[%s477 + $0x18] sm:$0xf]
        %v5602 = vld [vmem:[%s477 + $0x1c] sm:$0xf]
        %v5603 = vld [vmem:[%s477 + $0x20] sm:$0xf]
        %v5604 = vld [vmem:[%s477 + $0x24] sm:$0xf]
        %v5605 = vld [vmem:[%s477 + $0x28] sm:$0xf]
        %v5606 = vld [vmem:[%s477 + $0x2c] sm:$0xf]
        %v5607 = vld [vmem:[%s477 + $0x30] sm:$0xf]
        %v5608 = vld [vmem:[%s477 + $0x34] sm:$0xf]
        %v5609 = vld [vmem:[%s477 + $0x38] sm:$0xf]
        %v5610 = vld [vmem:[%s477 + $0x3c] sm:$0xf]
        %v5611 = vld [vmem:[%s477 + $0x40] sm:$0xf]
        %v5612 = vld [vmem:[%s477 + $0x44] sm:$0xf]
        %v5613 = vld [vmem:[%s477 + $0x48] sm:$0xf]
        %v5614 = vld [vmem:[%s477 + $0x4c] sm:$0xf]
        %v5615 = vld [vmem:[%s477 + $0x50] sm:$0xf]
        %v5616 = vld [vmem:[%s477 + $0x54] sm:$0xf]
        %v5617 = vld [vmem:[%s477 + $0x58] sm:$0xf]
        %v5618 = vld [vmem:[%s477 + $0x5c] sm:$0xf]
        %v5619 = vld [vmem:[%s477 + $0x60] sm:$0xf]
        %v5620 = vld [vmem:[%s477 + $0x64] sm:$0xf]
        %v5621 = vld [vmem:[%s477 + $0x68] sm:$0xf]
        %v5622 = vld [vmem:[%s477 + $0x6c] sm:$0xf]
        %v5623 = vld [vmem:[%s477 + $0x70] sm:$0xf]
        %v5624 = vld [vmem:[%s477 + $0x74] sm:$0xf]
        %v5625 = vld [vmem:[%s477 + $0x78] sm:$0xf]
        %v5626 = vld [vmem:[%s477 + $0x7c] sm:$0xf]
        %v5659 = vunpack.c.l.b16 %v5595
        %v5660 = vunpack.c.l.b16 %v5596
        %v5661 = vunpack.c.l.b16 %v5597
        %v5662 = vunpack.c.l.b16 %v5598
        %v5663 = vunpack.c.l.b16 %v5599
        %v5664 = vunpack.c.l.b16 %v5600
        %v5665 = vunpack.c.l.b16 %v5601
        %v5666 = vunpack.c.l.b16 %v5602
        %v5667 = vunpack.c.l.b16 %v5603
        %v5668 = vunpack.c.l.b16 %v5604
        %v5669 = vunpack.c.l.b16 %v5605
        %v5670 = vunpack.c.l.b16 %v5606
        %v5671 = vunpack.c.l.b16 %v5607
        %v5672 = vunpack.c.l.b16 %v5608
        %v5673 = vunpack.c.l.b16 %v5609
        %v5674 = vunpack.c.l.b16 %v5610
        %v5675 = vunpack.c.l.b16 %v5611
        %v5676 = vunpack.c.l.b16 %v5612
        %v5677 = vunpack.c.l.b16 %v5613
        %v5678 = vunpack.c.l.b16 %v5614
        %v5679 = vunpack.c.l.b16 %v5615
        %v5680 = vunpack.c.l.b16 %v5616
        %v5681 = vunpack.c.l.b16 %v5617
        %v5682 = vunpack.c.l.b16 %v5618
        %v5683 = vunpack.c.l.b16 %v5619
        %v5684 = vunpack.c.l.b16 %v5620
        %v5685 = vunpack.c.l.b16 %v5621
        %v5686 = vunpack.c.l.b16 %v5622
        %v5687 = vunpack.c.l.b16 %v5623
        %v5688 = vunpack.c.l.b16 %v5624
        %v5689 = vunpack.c.l.b16 %v5625
        %v5690 = vunpack.c.l.b16 %v5626
        %v5691 = vpack.c.b16 %v5660, %v5659
        %v5692 = vpack.c.b16 %v5662, %v5661
        %v5693 = vpack.c.b16 %v5664, %v5663
        %v5694 = vpack.c.b16 %v5666, %v5665
        %v5695 = vpack.c.b16 %v5668, %v5667
        %v5696 = vpack.c.b16 %v5670, %v5669
        %v5697 = vpack.c.b16 %v5672, %v5671
        %v5698 = vpack.c.b16 %v5674, %v5673
        %v5699 = vpack.c.b16 %v5676, %v5675
        %v5700 = vpack.c.b16 %v5678, %v5677
        %v5701 = vpack.c.b16 %v5680, %v5679
        %v5702 = vpack.c.b16 %v5682, %v5681
        %v5703 = vpack.c.b16 %v5684, %v5683
        %v5704 = vpack.c.b16 %v5686, %v5685
        %v5705 = vpack.c.b16 %v5688, %v5687
        %v5706 = vpack.c.b16 %v5690, %v5689
        %5723 = vmatprep.subr.bf16.mxu0 0
        %5724 = vmatpush1.bf16.msra.mxu0 %v5698
        %5725 = vmatprep.subr.bf16.mxu0 0
        %5726 = vmatpush1.bf16.msra.mxu0 %v5697
        %5727 = vmatprep.subr.bf16.mxu0 0
        %5728 = vmatpush1.bf16.msra.mxu0 %v5696
        %5729 = vmatprep.subr.bf16.mxu0 0
        %5730 = vmatpush1.bf16.msra.mxu0 %v5695
        %5731 = vmatprep.subr.bf16.mxu0 0
        %5732 = vmatpush1.bf16.msra.mxu0 %v5694
        %5733 = vmatprep.subr.bf16.mxu0 0
        %5734 = vmatpush1.bf16.msra.mxu0 %v5693
        %5735 = vmatprep.subr.bf16.mxu0 0
        %5736 = vmatpush1.bf16.msra.mxu0 %v5692
        %5737 = vmatprep.subr.bf16.mxu0 0
        %5738 = vmatpush1.bf16.msra.mxu0 %v5691
        %5739 = vmatprep.subr.bf16.mxu0 0
        %5740 = vmatpush2.bf16.msra.mxu0 %v5706
        %5741 = vmatprep.subr.bf16.mxu0 0
        %5742 = vmatpush2.bf16.msra.mxu0 %v5705
        %5743 = vmatprep.subr.bf16.mxu0 0
        %5744 = vmatpush2.bf16.msra.mxu0 %v5704
        %5745 = vmatprep.subr.bf16.mxu0 0
        %5746 = vmatpush2.bf16.msra.mxu0 %v5703
        %5747 = vmatprep.subr.bf16.mxu0 0
        %5748 = vmatpush2.bf16.msra.mxu0 %v5702
        %5749 = vmatprep.subr.bf16.mxu0 0
        %5750 = vmatpush2.bf16.msra.mxu0 %v5701
        %5751 = vmatprep.subr.bf16.mxu0 0
        %5752 = vmatpush2.bf16.msra.mxu0 %v5700
        %5753 = vmatprep.subr.bf16.mxu0 0
        %5754 = vmatpush2.bf16.msra.mxu0 %v5699
        %5755 = vmatprep.mubr.bf16.mxu0 %v5593
        %5756 = vmatmul.mubr.bf16.gmra.mxu0 %v5592
        %v5757 = vpop.f32.mrf.mxu0
        %v5758 = vadd.f32 0.0, %v5757
        %v5759 = vpop.f32.mrf.mxu0
        %v5760 = vpop.f32.mrf.mxu0
        %v5761 = vpop.f32.mrf.mxu0
        %5762 = vdwg.mxu0
        %v5763 = vadd.f32 %v5594, %v5758
        %5764 = vst [vmem:[#allocation3] sm:$0x3] %v5763
        %p5765 = scmp.eq.s32.totalorder %s35, 3
        // Predicated region
        $region97: #{tpu_custom_call.1} parent=55 // pred_check
          %p5766 = pneg %p5765
        $region98: #{tpu_custom_call.1} parent=55 // pred_check_branch
          %5768 = sbr.rel (%p5766) target = $region100
        $region99: #{tpu_custom_call.1} parent=55 // pred_region
          %v5769 = vld [vmem:[#allocation3] sm:$0x3]
          %v5770 = vld [vmem:[#allocation18] sm:$0x1]
          %v5772 = vlaneseq
          %v5773 = vshrl.u32 %v5772, 7
          %v5774 = vsub.s32 0, %v5773
          %v5775 = vrot.slane %v5770, %v5774
          %v5777 = vadd.f32 %v5769, %v5775
          %v5778 = vlaneseq
          %v5779 = vand.u32 %v5778, 127
          %vm5780 = vcmp.eq.s32.totalorder %v5779, 0
          %v5781 = vsel %vm5780, 1, 0
          %vm5782 = vcmp.eq.s32.totalorder %v5781, 1
          %v5783 = vsel %vm5782, %v5777, 0.0
          %vm5784 = vcmask 1041408
          %v5785 = vsel %vm5784, %v5783, 0.0
          %5786 = vadd.xlane.f32.xlu0 %v5785
          %v5787 = vpop.xlane.xlu0 %5786
          %vm5788 = vcmp.ge.s32.totalorder %v5779, 1
          %vm5789 = vcmp.lt.s32.totalorder %v5779, 9
          %vm5790 = vmand %vm5788, %vm5789
          %v5791 = vsel %vm5790, 1, 0
          %vm5792 = vcmp.eq.s32.totalorder %v5791, 1
          %v5793 = vsel %vm5792, %v5777, 0.0
          %v5794 = vsel %vm5784, %v5793, 0.0
          %5795 = vadd.xlane.f32.xlu0 %v5794
          %v5796 = vpop.xlane.xlu0 %5795
          %v5797 = vadd.f32 %v5777, %v5787
          %v5798 = vmul.f32 %v5796, 0.125
          %v5799 = vsub.f32 %v5797, %v5798
          %5800 = vst [vmem:[#allocation19] sm:$0x3] %v5799
        $region100: #{tpu_custom_call.1} parent=55 // pred_fallthru
          _
        // Predicated region
        $region101: #{tpu_custom_call.1} parent=55 // pred_check
          %p5801 = pneg %p269
        $region102: #{tpu_custom_call.1} parent=55 // pred_check_branch
          %5803 = sbr.rel (%p5801) target = $region104
        $region103: #{tpu_custom_call.1} parent=55 // pred_region
          %s5805 = ssub.s32 32, 32
          %5806 = vsyncadd [#allocation6], %s5805
          %s5807 = smul.addr %s34, 32
          %s5808 = scalar_lea.hbm %s9, %s5807
          %s5810 = sshll.u32 [#allocation19], 4
          %s5811 = int_to_ptr.vmem [resolvable:$true] %s5810
          %5813 = dma.vmem_to_hbm [thread:$0]  %s5811, 32, %s5808, [#allocation6]
        $region104: #{tpu_custom_call.1} parent=55 // pred_fallthru
          _
        // Predicated region
        $region105: #{tpu_custom_call.1} parent=55 // pred_check
          %p5814 = pneg %p269
        $region106: #{tpu_custom_call.1} parent=55 // pred_check_branch
          %5816 = sbr.rel (%p5814) target = $region108
        $region107: #{tpu_custom_call.1} parent=55 // pred_region
          %5817 = dma.done [#allocation6], 32
        $region108: #{tpu_custom_call.1} parent=55 // pred_fallthru
          _
      $region56: #{tpu_custom_call.1} parent=5 // pred_fallthru
        _
      %p5818 = scmp.le.s32.totalorder 2, %s25
      // Predicated region
      $region109: #{tpu_custom_call.1} parent=5 // pred_check
        %p5819 = pneg %p5818
      $region110: #{tpu_custom_call.1} parent=5 // pred_check_branch
        %5821 = sbr.rel (%p5819) target = $region112
      $region111: #{tpu_custom_call.1} parent=5 // pred_region
        %s5822 = ssub.s32 %s25, 2
      $region112: #{tpu_custom_call.1} parent=5 // pred_fallthru
        _
    $region6: #{tpu_custom_call.1} parent=1 // loop_footer
      %s29 = sadd.s32 1, %s25
    $region7: #{tpu_custom_call.1} parent=1 // loop_footer_branch
      %24 = sbr.rel target = $region3
    $region8: #{tpu_custom_call.1} parent=1 // loop_exit
      _
    %5823 = vsyncpa [#allocation5], 1
    %s5824 = scalar_lea.sflag [#allocation5], 1
    %5825 = vsyncpa %s5824, 1
    %5826 = vsyncpa [#allocation8], 1
    %5827 = vsyncpa [#allocation11], 1
    %5828 = vsyncpa [#allocation14], 1
    %s5829 = scalar_lea.sflag [#allocation14], 1
    %5830 = vsyncpa %s5829, 1
    %5831 = vsyncpa [#allocation17], 1
    %s5832 = scalar_lea.sflag [#allocation17], 1
    %5833 = vsyncpa %s5832, 1
    %5834 = vsyncpa [#allocation6], 1
    %s5835 = scalar_lea.sflag [#allocation6], 1
    %5836 = vsyncpa %s5835, 1

</llo_original>
